<compile_context>
chip_gen: v5e
topology: v5e:2x2
jax: 0.10.0
libtpu: 0.0.40
codegen_flags: <defaults>
</compile_context>

<pallas_src>
import jax
import jax.numpy as jnp
from jax.experimental import pallas as pl
from jax.experimental.pallas import tpu as pltpu

HIDDEN = 256  # nn.LSTM(hidden_size=256)


def lstm_fc_softmax_kernel(x_ref, wih_ref, whh_ref, b_ref, fcw_ref, fcb_ref,
                           out_ref, gx_ref):
    """Single invocation (no grid); whole sequence + weights resident in VMEM.

    x_ref:   [T*Bp, D]   time-major input, batch padded to a sublane multiple (f32)
    wih_ref: [D, 4H]     W_ih^T (f32; one-shot projection, off the serial path)
    whh_ref: [H, 4H]     W_hh^T (bf16; streamed every step of the serial chain)
    b_ref:   [1, 4H]     b_ih + b_hh (f32)
    fcw_ref: [H, 3]      fc weight^T (f32)
    fcb_ref: [1, 3]      fc bias (f32)
    out_ref: [Bp, 3]     softmax probabilities (padded rows dropped by wrapper)
    gx_ref:  [T*Bp, 4H]  VMEM scratch: hoisted input projection (f32)
    """
    H = whh_ref.shape[0]
    Bp = out_ref.shape[0]
    T = x_ref.shape[0] // Bp

    # (1) Hoisted input projection: one big matmul for all timesteps at once (f32).
    gx_ref[...] = (jnp.dot(x_ref[...], wih_ref[...],
                           preferred_element_type=jnp.float32)
                   + b_ref[...])                                   # [T*Bp, 4H]

    # (2) Serial recurrence.  W_hh is bf16 -> half the per-step vld stream + MXU passes.
    w_hh = whh_ref[...]                                            # [H, 4H] bf16

    def sigmoid_t(x):
        # logistic(x) == 0.5 * (1 + tanh(x / 2)): single EUP transcendental per gate
        # (vs exp + reciprocal/divide), all math in f32.
        return 0.5 * (1.0 + jnp.tanh(0.5 * x))

    def step(t, carry):
        h, c = carry
        row = pl.multiple_of(t * Bp, 8)                            # sublane-aligned slice
        rec = jnp.dot(h.astype(jnp.bfloat16), w_hh,
                      preferred_element_type=jnp.float32)          # [Bp, 4H], f32 accum
        gates = gx_ref[pl.ds(row, Bp), :] + rec
        i = sigmoid_t(gates[:, 0 * H:1 * H])
        f = sigmoid_t(gates[:, 1 * H:2 * H])
        g = jnp.tanh(gates[:, 2 * H:3 * H])
        o = sigmoid_t(gates[:, 3 * H:4 * H])
        c_new = f * c + i * g
        h_new = o * jnp.tanh(c_new)
        return h_new, c_new

    h0 = jnp.zeros((Bp, H), jnp.float32)
    c0 = jnp.zeros((Bp, H), jnp.float32)
    h_last, _ = jax.lax.fori_loop(0, T, step, (h0, c0), unroll=min(T, 8))

    # fc(out[:, -1, :]) followed by softmax(dim=1)  (kept f32; off the critical path)
    logits = (jnp.dot(h_last, fcw_ref[...], preferred_element_type=jnp.float32)
              + fcb_ref[...])                                      # [Bp, 3]
    m = jnp.max(logits, axis=1, keepdims=True)
    e = jnp.exp(logits - m)
    out_ref[...] = (e / jnp.sum(e, axis=1, keepdims=True)).astype(out_ref.dtype)


def lstm_fc_softmax(x_flat, Bp, w_ih, w_hh_bf16, b, fc_w, fc_b):
    TB, D = x_flat.shape
    H = HIDDEN
    vmem = pltpu.MemorySpace.VMEM

    # Explicit VMEM budget: the all-resident design grows linearly with T
    # (gx scratch is 16 KiB * T f32 at Bp=8).  Cap below v7x's 64 MiB physical VMEM.
    need_bytes = (TB * 4 * H * 4          # gx scratch (f32)
                  + TB * D * 4            # x_flat (f32)
                  + D * 4 * H * 4         # W_ih (f32)
                  + H * 4 * H * 2         # W_hh (bf16)
                  + (4 * H + H * 3 + 3 + Bp * 3) * 4)   # biases / fc / out
    vmem_limit = int(min(max(2 * need_bytes, 16 << 20), 48 << 20))

    return pl.pallas_call(
        lstm_fc_softmax_kernel,
        out_shape=jax.ShapeDtypeStruct((Bp, 3), jnp.float32),
        in_specs=[pl.BlockSpec(memory_space=vmem)] * 6,   # full arrays, copied once
        out_specs=pl.BlockSpec(memory_space=vmem),
        scratch_shapes=[pltpu.VMEM((TB, 4 * H), jnp.float32)],  # hoisted input projection
        compiler_params=pltpu.CompilerParams(vmem_limit_bytes=vmem_limit),
    )(x_flat, w_ih, w_hh_bf16, b, fc_w, fc_b)


def init_params(key, test_d, time_d):
    H = HIDDEN
    D = test_d + time_d
    ks = jax.random.split(key, 10)
    p = {}
    # Time2Vec SineActivation(1, time_d): sin(tau @ w + b) (time_d-1) ++ (tau @ w0 + b0) (1)
    p["t2v_w"] = jax.random.normal(ks[0], (1, time_d - 1), jnp.float32)
    p["t2v_b"] = jax.random.normal(ks[1], (time_d - 1,), jnp.float32)
    p["t2v_w0"] = jax.random.normal(ks[2], (1, 1), jnp.float32)
    p["t2v_b0"] = jax.random.normal(ks[3], (1,), jnp.float32)
    # LSTM(input_size=D, hidden_size=256), PyTorch-style uniform init, gate order (i,f,g,o)
    s = 1.0 / jnp.sqrt(jnp.float32(H))
    p["w_ih"] = jax.random.uniform(ks[4], (D, 4 * H), jnp.float32, -s, s)
    p["w_hh"] = jax.random.uniform(ks[5], (H, 4 * H), jnp.float32, -s, s)
    b_ih = jax.random.uniform(ks[6], (4 * H,), jnp.float32, -s, s)
    b_hh = jax.random.uniform(ks[7], (4 * H,), jnp.float32, -s, s)
    p["b"] = (b_ih + b_hh).reshape(1, 4 * H)
    # Linear(256, 3)
    p["fc_w"] = jax.random.uniform(ks[8], (H, 3), jnp.float32, -s, s)
    p["fc_b"] = jax.random.uniform(ks[9], (1, 3), jnp.float32, -s, s)
    return p


def _time2vec_cat(params, x_time, x_txt):
    v1 = jnp.sin(jnp.matmul(x_time, params["t2v_w"]) + params["t2v_b"])   # [B, T, time_d-1]
    v2 = jnp.matmul(x_time, params["t2v_w0"]) + params["t2v_b0"]          # [B, T, 1]
    x_ti = jnp.concatenate([v1, v2], axis=-1)                             # [B, T, time_d]
    return jnp.concatenate([x_ti, x_txt], axis=2)                         # [B, T, D]


@jax.jit
def w2v_t2v_lstm_forward(params, x_time, x_txt):
    """x_time: [B, T, 1], x_txt: [B, T, test_d] -> [B, 3] probabilities."""
    x = _time2vec_cat(params, x_time, x_txt)                              # [B, T, D]
    B, T, D = x.shape
    Bp = max(8, ((B + 7) // 8) * 8)                                       # pad batch to sublanes
    x_tm = jnp.transpose(x, (1, 0, 2))                                    # time-major [T, B, D]
    if Bp != B:
        x_tm = jnp.pad(x_tm, ((0, 0), (0, Bp - B), (0, 0)))               # zero-padded rows
    x_flat = x_tm.reshape(T * Bp, D)
    w_hh_bf16 = params["w_hh"].astype(jnp.bfloat16)                       # bf16 recurrence weights
    out = lstm_fc_softmax(x_flat, Bp, params["w_ih"], w_hh_bf16, params["b"],
                          params["fc_w"], params["fc_b"])
    return out[:B]


def _reference_forward(params, x_time, x_txt):
    """Pure-JAX f32 reference (matches PyTorch semantics) for a correctness check."""
    H = HIDDEN
    hi = jax.lax.Precision.HIGHEST
    x = _time2vec_cat(params, x_time, x_txt)                              # [B, T, D]
    B, T, _ = x.shape
    h = jnp.zeros((B, H), jnp.float32)
    c = jnp.zeros((B, H), jnp.float32)
    for t in range(T):
        gates = (jnp.dot(x[:, t, :], params["w_ih"], precision=hi)
                 + jnp.dot(h, params["w_hh"], precision=hi) + params["b"])
        i = jax.nn.sigmoid(gates[:, 0 * H:1 * H])
        f = jax.nn.sigmoid(gates[:, 1 * H:2 * H])
        g = jnp.tanh(gates[:, 2 * H:3 * H])
        o = jax.nn.sigmoid(gates[:, 3 * H:4 * H])
        c = f * c + i * g
        h = o * jnp.tanh(c)
    logits = jnp.dot(h, params["fc_w"], precision=hi) + params["fc_b"]
    return jax.nn.softmax(logits, axis=1)


if __name__ == "__main__":
    B, T, test_d, time_d = 2, 8, 16, 8
    key = jax.random.PRNGKey(0)
    kp, kt, kx = jax.random.split(key, 3)
    params = init_params(kp, test_d, time_d)
    x_time = jax.random.normal(kt, (B, T, 1), jnp.float32)
    x_txt = jax.random.normal(kx, (B, T, test_d), jnp.float32)

    out = w2v_t2v_lstm_forward(params, x_time, x_txt)
    out = jax.block_until_ready(out)
    assert out.shape == (B, 3)
    assert bool(jnp.all(jnp.isfinite(out)))

    # Tolerance loosened vs the pure-f32 version: the recurrence now uses bf16 matmul
    # operands (f32 accumulation); expected deviation is O(1e-3) on softmax outputs.
    ref = jax.block_until_ready(_reference_forward(params, x_time, x_txt))
    assert bool(jnp.allclose(out, ref, atol=1e-2, rtol=1e-2)), (out, ref)

    print("KERNEL_OK")
</pallas_src>

<mosaic_0001>
module attributes {stable_mosaic.version = 11 : i64} {
  func.func @lstm_fc_softmax_kernel(%arg0: memref<64x24xf32, #tpu.memory_space<vmem>>, %arg1: memref<24x1024xf32, #tpu.memory_space<vmem>>, %arg2: memref<256x1024xbf16, #tpu.memory_space<vmem>>, %arg3: memref<1x1024xf32, #tpu.memory_space<vmem>>, %arg4: memref<256x3xf32, #tpu.memory_space<vmem>>, %arg5: memref<1x3xf32, #tpu.memory_space<vmem>>, %arg6: memref<8x3xf32, #tpu.memory_space<vmem>>, %arg7: memref<64x1024xf32, #tpu.memory_space<vmem>>) attributes {dimension_semantics = [], scalar_prefetch = 0 : i64, scratch_operands = 1 : i64, tpu.core_type = #tpu.core_type<tc>} {
    %c0 = arith.constant 0 : index
    %c0_0 = arith.constant 0 : index
    %0 = vector.load %arg0[%c0, %c0_0] : memref<64x24xf32, #tpu.memory_space<vmem>>, vector<64x24xf32>
    %c0_1 = arith.constant 0 : index
    %c0_2 = arith.constant 0 : index
    %1 = vector.load %arg1[%c0_1, %c0_2] : memref<24x1024xf32, #tpu.memory_space<vmem>>, vector<24x1024xf32>
    %cst = arith.constant dense<0.000000e+00> : vector<64x1024xf32>
    %2 = tpu.matmul %0, %1, %cst {dimension_numbers = #tpu.dot_dimension_numbers<[1], [0], [0], [1], [0, 0, 1, 1], [], []>} : vector<64x24xf32>, vector<24x1024xf32>, vector<64x1024xf32> -> vector<64x1024xf32>
    %c0_3 = arith.constant 0 : index
    %c0_4 = arith.constant 0 : index
    %3 = vector.load %arg3[%c0_3, %c0_4] : memref<1x1024xf32, #tpu.memory_space<vmem>>, vector<1x1024xf32>
    %4 = vector.broadcast %3 : vector<1x1024xf32> to vector<64x1024xf32>
    %5 = arith.addf %2, %4 : vector<64x1024xf32>
    %c0_5 = arith.constant 0 : index
    %c0_6 = arith.constant 0 : index
    %6 = vector.load %arg7[%c0_5, %c0_6] : memref<64x1024xf32, #tpu.memory_space<vmem>>, vector<64x1024xf32>
    tpu.vector_store %arg7[%c0_5, %c0_6], %5 {strides = array<i32>} : memref<64x1024xf32, #tpu.memory_space<vmem>>, vector<64x1024xf32>,
    %c0_7 = arith.constant 0 : index
    %c0_8 = arith.constant 0 : index
    %7 = vector.load %arg2[%c0_7, %c0_8] : memref<256x1024xbf16, #tpu.memory_space<vmem>>, vector<256x1024xbf16>
    %cst_9 = arith.constant 0.000000e+00 : f32
    %8 = vector.broadcast %cst_9 : f32 to vector<8x256xf32>
    %cst_10 = arith.constant 0.000000e+00 : f32
    %9 = vector.broadcast %cst_10 : f32 to vector<8x256xf32>
    %c0_i32 = arith.constant 0 : i32
    %c8_i32 = arith.constant 8 : i32
    %10 = arith.muli %c0_i32, %c8_i32 : i32
    %11 = tpu.assume_multiple %10, 8 : i32
    %12 = arith.truncf %8 : vector<8x256xf32> to vector<8x256xbf16>
    %cst_11 = arith.constant dense<0.000000e+00> : vector<8x1024xf32>
    %13 = tpu.matmul %12, %7, %cst_11 {dimension_numbers = #tpu.dot_dimension_numbers<[1], [0], [0], [1], [0, 0, 1, 1], [], []>} : vector<8x256xbf16>, vector<256x1024xbf16>, vector<8x1024xf32> -> vector<8x1024xf32>
    %14 = arith.index_cast %11 : i32 to index
    %c0_12 = arith.constant 0 : index
    %15 = vector.load %arg7[%14, %c0_12] : memref<64x1024xf32, #tpu.memory_space<vmem>>, vector<8x1024xf32>
    %16 = arith.addf %15, %13 : vector<8x1024xf32>
    %17 = vector.extract_strided_slice %16 {offsets = [0, 0], sizes = [8, 256], strides = [1, 1]} : vector<8x1024xf32> to vector<8x256xf32>
    %cst_13 = arith.constant 5.000000e-01 : f32
    %18 = vector.broadcast %cst_13 : f32 to vector<8x256xf32>
    %19 = arith.mulf %18, %17 : vector<8x256xf32>
    %20 = math.tanh %19 : vector<8x256xf32>
    %cst_14 = arith.constant 1.000000e+00 : f32
    %21 = vector.broadcast %cst_14 : f32 to vector<8x256xf32>
    %22 = arith.addf %21, %20 : vector<8x256xf32>
    %cst_15 = arith.constant 5.000000e-01 : f32
    %23 = vector.broadcast %cst_15 : f32 to vector<8x256xf32>
    %24 = arith.mulf %23, %22 : vector<8x256xf32>
    %25 = vector.extract_strided_slice %16 {offsets = [0, 256], sizes = [8, 256], strides = [1, 1]} : vector<8x1024xf32> to vector<8x256xf32>
    %cst_16 = arith.constant 5.000000e-01 : f32
    %26 = vector.broadcast %cst_16 : f32 to vector<8x256xf32>
    %27 = arith.mulf %26, %25 : vector<8x256xf32>
    %28 = math.tanh %27 : vector<8x256xf32>
    %cst_17 = arith.constant 1.000000e+00 : f32
    %29 = vector.broadcast %cst_17 : f32 to vector<8x256xf32>
    %30 = arith.addf %29, %28 : vector<8x256xf32>
    %cst_18 = arith.constant 5.000000e-01 : f32
    %31 = vector.broadcast %cst_18 : f32 to vector<8x256xf32>
    %32 = arith.mulf %31, %30 : vector<8x256xf32>
    %33 = vector.extract_strided_slice %16 {offsets = [0, 512], sizes = [8, 256], strides = [1, 1]} : vector<8x1024xf32> to vector<8x256xf32>
    %34 = math.tanh %33 : vector<8x256xf32>
    %35 = vector.extract_strided_slice %16 {offsets = [0, 768], sizes = [8, 256], strides = [1, 1]} : vector<8x1024xf32> to vector<8x256xf32>
    %cst_19 = arith.constant 5.000000e-01 : f32
    %36 = vector.broadcast %cst_19 : f32 to vector<8x256xf32>
    %37 = arith.mulf %36, %35 : vector<8x256xf32>
    %38 = math.tanh %37 : vector<8x256xf32>
    %cst_20 = arith.constant 1.000000e+00 : f32
    %39 = vector.broadcast %cst_20 : f32 to vector<8x256xf32>
    %40 = arith.addf %39, %38 : vector<8x256xf32>
    %cst_21 = arith.constant 5.000000e-01 : f32
    %41 = vector.broadcast %cst_21 : f32 to vector<8x256xf32>
    %42 = arith.mulf %41, %40 : vector<8x256xf32>
    %43 = arith.mulf %32, %9 : vector<8x256xf32>
    %44 = arith.mulf %24, %34 : vector<8x256xf32>
    %45 = arith.addf %43, %44 : vector<8x256xf32>
    %46 = math.tanh %45 : vector<8x256xf32>
    %47 = arith.mulf %42, %46 : vector<8x256xf32>
    %c1_i32 = arith.constant 1 : i32
    %c8_i32_22 = arith.constant 8 : i32
    %48 = arith.muli %c1_i32, %c8_i32_22 : i32
    %49 = tpu.assume_multiple %48, 8 : i32
    %50 = arith.truncf %47 : vector<8x256xf32> to vector<8x256xbf16>
    %cst_23 = arith.constant dense<0.000000e+00> : vector<8x1024xf32>
    %51 = tpu.matmul %50, %7, %cst_23 {dimension_numbers = #tpu.dot_dimension_numbers<[1], [0], [0], [1], [0, 0, 1, 1], [], []>} : vector<8x256xbf16>, vector<256x1024xbf16>, vector<8x1024xf32> -> vector<8x1024xf32>
    %52 = arith.index_cast %49 : i32 to index
    %c0_24 = arith.constant 0 : index
    %53 = vector.load %arg7[%52, %c0_24] : memref<64x1024xf32, #tpu.memory_space<vmem>>, vector<8x1024xf32>
    %54 = arith.addf %53, %51 : vector<8x1024xf32>
    %55 = vector.extract_strided_slice %54 {offsets = [0, 0], sizes = [8, 256], strides = [1, 1]} : vector<8x1024xf32> to vector<8x256xf32>
    %cst_25 = arith.constant 5.000000e-01 : f32
    %56 = vector.broadcast %cst_25 : f32 to vector<8x256xf32>
    %57 = arith.mulf %56, %55 : vector<8x256xf32>
    %58 = math.tanh %57 : vector<8x256xf32>
    %cst_26 = arith.constant 1.000000e+00 : f32
    %59 = vector.broadcast %cst_26 : f32 to vector<8x256xf32>
    %60 = arith.addf %59, %58 : vector<8x256xf32>
    %cst_27 = arith.constant 5.000000e-01 : f32
    %61 = vector.broadcast %cst_27 : f32 to vector<8x256xf32>
    %62 = arith.mulf %61, %60 : vector<8x256xf32>
    %63 = vector.extract_strided_slice %54 {offsets = [0, 256], sizes = [8, 256], strides = [1, 1]} : vector<8x1024xf32> to vector<8x256xf32>
    %cst_28 = arith.constant 5.000000e-01 : f32
    %64 = vector.broadcast %cst_28 : f32 to vector<8x256xf32>
    %65 = arith.mulf %64, %63 : vector<8x256xf32>
    %66 = math.tanh %65 : vector<8x256xf32>
    %cst_29 = arith.constant 1.000000e+00 : f32
    %67 = vector.broadcast %cst_29 : f32 to vector<8x256xf32>
    %68 = arith.addf %67, %66 : vector<8x256xf32>
    %cst_30 = arith.constant 5.000000e-01 : f32
    %69 = vector.broadcast %cst_30 : f32 to vector<8x256xf32>
    %70 = arith.mulf %69, %68 : vector<8x256xf32>
    %71 = vector.extract_strided_slice %54 {offsets = [0, 512], sizes = [8, 256], strides = [1, 1]} : vector<8x1024xf32> to vector<8x256xf32>
    %72 = math.tanh %71 : vector<8x256xf32>
    %73 = vector.extract_strided_slice %54 {offsets = [0, 768], sizes = [8, 256], strides = [1, 1]} : vector<8x1024xf32> to vector<8x256xf32>
    %cst_31 = arith.constant 5.000000e-01 : f32
    %74 = vector.broadcast %cst_31 : f32 to vector<8x256xf32>
    %75 = arith.mulf %74, %73 : vector<8x256xf32>
    %76 = math.tanh %75 : vector<8x256xf32>
    %cst_32 = arith.constant 1.000000e+00 : f32
    %77 = vector.broadcast %cst_32 : f32 to vector<8x256xf32>
    %78 = arith.addf %77, %76 : vector<8x256xf32>
    %cst_33 = arith.constant 5.000000e-01 : f32
    %79 = vector.broadcast %cst_33 : f32 to vector<8x256xf32>
    %80 = arith.mulf %79, %78 : vector<8x256xf32>
    %81 = arith.mulf %70, %45 : vector<8x256xf32>
    %82 = arith.mulf %62, %72 : vector<8x256xf32>
    %83 = arith.addf %81, %82 : vector<8x256xf32>
    %84 = math.tanh %83 : vector<8x256xf32>
    %85 = arith.mulf %80, %84 : vector<8x256xf32>
    %c2_i32 = arith.constant 2 : i32
    %c8_i32_34 = arith.constant 8 : i32
    %86 = arith.muli %c2_i32, %c8_i32_34 : i32
    %87 = tpu.assume_multiple %86, 8 : i32
    %88 = arith.truncf %85 : vector<8x256xf32> to vector<8x256xbf16>
    %cst_35 = arith.constant dense<0.000000e+00> : vector<8x1024xf32>
    %89 = tpu.matmul %88, %7, %cst_35 {dimension_numbers = #tpu.dot_dimension_numbers<[1], [0], [0], [1], [0, 0, 1, 1], [], []>} : vector<8x256xbf16>, vector<256x1024xbf16>, vector<8x1024xf32> -> vector<8x1024xf32>
    %90 = arith.index_cast %87 : i32 to index
    %c0_36 = arith.constant 0 : index
    %91 = vector.load %arg7[%90, %c0_36] : memref<64x1024xf32, #tpu.memory_space<vmem>>, vector<8x1024xf32>
    %92 = arith.addf %91, %89 : vector<8x1024xf32>
    %93 = vector.extract_strided_slice %92 {offsets = [0, 0], sizes = [8, 256], strides = [1, 1]} : vector<8x1024xf32> to vector<8x256xf32>
    %cst_37 = arith.constant 5.000000e-01 : f32
    %94 = vector.broadcast %cst_37 : f32 to vector<8x256xf32>
    %95 = arith.mulf %94, %93 : vector<8x256xf32>
    %96 = math.tanh %95 : vector<8x256xf32>
    %cst_38 = arith.constant 1.000000e+00 : f32
    %97 = vector.broadcast %cst_38 : f32 to vector<8x256xf32>
    %98 = arith.addf %97, %96 : vector<8x256xf32>
    %cst_39 = arith.constant 5.000000e-01 : f32
    %99 = vector.broadcast %cst_39 : f32 to vector<8x256xf32>
    %100 = arith.mulf %99, %98 : vector<8x256xf32>
    %101 = vector.extract_strided_slice %92 {offsets = [0, 256], sizes = [8, 256], strides = [1, 1]} : vector<8x1024xf32> to vector<8x256xf32>
    %cst_40 = arith.constant 5.000000e-01 : f32
    %102 = vector.broadcast %cst_40 : f32 to vector<8x256xf32>
    %103 = arith.mulf %102, %101 : vector<8x256xf32>
    %104 = math.tanh %103 : vector<8x256xf32>
    %cst_41 = arith.constant 1.000000e+00 : f32
    %105 = vector.broadcast %cst_41 : f32 to vector<8x256xf32>
    %106 = arith.addf %105, %104 : vector<8x256xf32>
    %cst_42 = arith.constant 5.000000e-01 : f32
    %107 = vector.broadcast %cst_42 : f32 to vector<8x256xf32>
    %108 = arith.mulf %107, %106 : vector<8x256xf32>
    %109 = vector.extract_strided_slice %92 {offsets = [0, 512], sizes = [8, 256], strides = [1, 1]} : vector<8x1024xf32> to vector<8x256xf32>
    %110 = math.tanh %109 : vector<8x256xf32>
    %111 = vector.extract_strided_slice %92 {offsets = [0, 768], sizes = [8, 256], strides = [1, 1]} : vector<8x1024xf32> to vector<8x256xf32>
    %cst_43 = arith.constant 5.000000e-01 : f32
    %112 = vector.broadcast %cst_43 : f32 to vector<8x256xf32>
    %113 = arith.mulf %112, %111 : vector<8x256xf32>
    %114 = math.tanh %113 : vector<8x256xf32>
    %cst_44 = arith.constant 1.000000e+00 : f32
    %115 = vector.broadcast %cst_44 : f32 to vector<8x256xf32>
    %116 = arith.addf %115, %114 : vector<8x256xf32>
    %cst_45 = arith.constant 5.000000e-01 : f32
    %117 = vector.broadcast %cst_45 : f32 to vector<8x256xf32>
    %118 = arith.mulf %117, %116 : vector<8x256xf32>
    %119 = arith.mulf %108, %83 : vector<8x256xf32>
    %120 = arith.mulf %100, %110 : vector<8x256xf32>
    %121 = arith.addf %119, %120 : vector<8x256xf32>
    %122 = math.tanh %121 : vector<8x256xf32>
    %123 = arith.mulf %118, %122 : vector<8x256xf32>
    %c3_i32 = arith.constant 3 : i32
    %c8_i32_46 = arith.constant 8 : i32
    %124 = arith.muli %c3_i32, %c8_i32_46 : i32
    %125 = tpu.assume_multiple %124, 8 : i32
    %126 = arith.truncf %123 : vector<8x256xf32> to vector<8x256xbf16>
    %cst_47 = arith.constant dense<0.000000e+00> : vector<8x1024xf32>
    %127 = tpu.matmul %126, %7, %cst_47 {dimension_numbers = #tpu.dot_dimension_numbers<[1], [0], [0], [1], [0, 0, 1, 1], [], []>} : vector<8x256xbf16>, vector<256x1024xbf16>, vector<8x1024xf32> -> vector<8x1024xf32>
    %128 = arith.index_cast %125 : i32 to index
    %c0_48 = arith.constant 0 : index
    %129 = vector.load %arg7[%128, %c0_48] : memref<64x1024xf32, #tpu.memory_space<vmem>>, vector<8x1024xf32>
    %130 = arith.addf %129, %127 : vector<8x1024xf32>
    %131 = vector.extract_strided_slice %130 {offsets = [0, 0], sizes = [8, 256], strides = [1, 1]} : vector<8x1024xf32> to vector<8x256xf32>
    %cst_49 = arith.constant 5.000000e-01 : f32
    %132 = vector.broadcast %cst_49 : f32 to vector<8x256xf32>
    %133 = arith.mulf %132, %131 : vector<8x256xf32>
    %134 = math.tanh %133 : vector<8x256xf32>
    %cst_50 = arith.constant 1.000000e+00 : f32
    %135 = vector.broadcast %cst_50 : f32 to vector<8x256xf32>
    %136 = arith.addf %135, %134 : vector<8x256xf32>
    %cst_51 = arith.constant 5.000000e-01 : f32
    %137 = vector.broadcast %cst_51 : f32 to vector<8x256xf32>
    %138 = arith.mulf %137, %136 : vector<8x256xf32>
    %139 = vector.extract_strided_slice %130 {offsets = [0, 256], sizes = [8, 256], strides = [1, 1]} : vector<8x1024xf32> to vector<8x256xf32>
    %cst_52 = arith.constant 5.000000e-01 : f32
    %140 = vector.broadcast %cst_52 : f32 to vector<8x256xf32>
    %141 = arith.mulf %140, %139 : vector<8x256xf32>
    %142 = math.tanh %141 : vector<8x256xf32>
    %cst_53 = arith.constant 1.000000e+00 : f32
    %143 = vector.broadcast %cst_53 : f32 to vector<8x256xf32>
    %144 = arith.addf %143, %142 : vector<8x256xf32>
    %cst_54 = arith.constant 5.000000e-01 : f32
    %145 = vector.broadcast %cst_54 : f32 to vector<8x256xf32>
    %146 = arith.mulf %145, %144 : vector<8x256xf32>
    %147 = vector.extract_strided_slice %130 {offsets = [0, 512], sizes = [8, 256], strides = [1, 1]} : vector<8x1024xf32> to vector<8x256xf32>
    %148 = math.tanh %147 : vector<8x256xf32>
    %149 = vector.extract_strided_slice %130 {offsets = [0, 768], sizes = [8, 256], strides = [1, 1]} : vector<8x1024xf32> to vector<8x256xf32>
    %cst_55 = arith.constant 5.000000e-01 : f32
    %150 = vector.broadcast %cst_55 : f32 to vector<8x256xf32>
    %151 = arith.mulf %150, %149 : vector<8x256xf32>
    %152 = math.tanh %151 : vector<8x256xf32>
    %cst_56 = arith.constant 1.000000e+00 : f32
    %153 = vector.broadcast %cst_56 : f32 to vector<8x256xf32>
    %154 = arith.addf %153, %152 : vector<8x256xf32>
    %cst_57 = arith.constant 5.000000e-01 : f32
    %155 = vector.broadcast %cst_57 : f32 to vector<8x256xf32>
    %156 = arith.mulf %155, %154 : vector<8x256xf32>
    %157 = arith.mulf %146, %121 : vector<8x256xf32>
    %158 = arith.mulf %138, %148 : vector<8x256xf32>
    %159 = arith.addf %157, %158 : vector<8x256xf32>
    %160 = math.tanh %159 : vector<8x256xf32>
    %161 = arith.mulf %156, %160 : vector<8x256xf32>
    %c4_i32 = arith.constant 4 : i32
    %c8_i32_58 = arith.constant 8 : i32
    %162 = arith.muli %c4_i32, %c8_i32_58 : i32
    %163 = tpu.assume_multiple %162, 8 : i32
    %164 = arith.truncf %161 : vector<8x256xf32> to vector<8x256xbf16>
    %cst_59 = arith.constant dense<0.000000e+00> : vector<8x1024xf32>
    %165 = tpu.matmul %164, %7, %cst_59 {dimension_numbers = #tpu.dot_dimension_numbers<[1], [0], [0], [1], [0, 0, 1, 1], [], []>} : vector<8x256xbf16>, vector<256x1024xbf16>, vector<8x1024xf32> -> vector<8x1024xf32>
    %166 = arith.index_cast %163 : i32 to index
    %c0_60 = arith.constant 0 : index
    %167 = vector.load %arg7[%166, %c0_60] : memref<64x1024xf32, #tpu.memory_space<vmem>>, vector<8x1024xf32>
    %168 = arith.addf %167, %165 : vector<8x1024xf32>
    %169 = vector.extract_strided_slice %168 {offsets = [0, 0], sizes = [8, 256], strides = [1, 1]} : vector<8x1024xf32> to vector<8x256xf32>
    %cst_61 = arith.constant 5.000000e-01 : f32
    %170 = vector.broadcast %cst_61 : f32 to vector<8x256xf32>
    %171 = arith.mulf %170, %169 : vector<8x256xf32>
    %172 = math.tanh %171 : vector<8x256xf32>
    %cst_62 = arith.constant 1.000000e+00 : f32
    %173 = vector.broadcast %cst_62 : f32 to vector<8x256xf32>
    %174 = arith.addf %173, %172 : vector<8x256xf32>
    %cst_63 = arith.constant 5.000000e-01 : f32
    %175 = vector.broadcast %cst_63 : f32 to vector<8x256xf32>
    %176 = arith.mulf %175, %174 : vector<8x256xf32>
    %177 = vector.extract_strided_slice %168 {offsets = [0, 256], sizes = [8, 256], strides = [1, 1]} : vector<8x1024xf32> to vector<8x256xf32>
    %cst_64 = arith.constant 5.000000e-01 : f32
    %178 = vector.broadcast %cst_64 : f32 to vector<8x256xf32>
    %179 = arith.mulf %178, %177 : vector<8x256xf32>
    %180 = math.tanh %179 : vector<8x256xf32>
    %cst_65 = arith.constant 1.000000e+00 : f32
    %181 = vector.broadcast %cst_65 : f32 to vector<8x256xf32>
    %182 = arith.addf %181, %180 : vector<8x256xf32>
    %cst_66 = arith.constant 5.000000e-01 : f32
    %183 = vector.broadcast %cst_66 : f32 to vector<8x256xf32>
    %184 = arith.mulf %183, %182 : vector<8x256xf32>
    %185 = vector.extract_strided_slice %168 {offsets = [0, 512], sizes = [8, 256], strides = [1, 1]} : vector<8x1024xf32> to vector<8x256xf32>
    %186 = math.tanh %185 : vector<8x256xf32>
    %187 = vector.extract_strided_slice %168 {offsets = [0, 768], sizes = [8, 256], strides = [1, 1]} : vector<8x1024xf32> to vector<8x256xf32>
    %cst_67 = arith.constant 5.000000e-01 : f32
    %188 = vector.broadcast %cst_67 : f32 to vector<8x256xf32>
    %189 = arith.mulf %188, %187 : vector<8x256xf32>
    %190 = math.tanh %189 : vector<8x256xf32>
    %cst_68 = arith.constant 1.000000e+00 : f32
    %191 = vector.broadcast %cst_68 : f32 to vector<8x256xf32>
    %192 = arith.addf %191, %190 : vector<8x256xf32>
    %cst_69 = arith.constant 5.000000e-01 : f32
    %193 = vector.broadcast %cst_69 : f32 to vector<8x256xf32>
    %194 = arith.mulf %193, %192 : vector<8x256xf32>
    %195 = arith.mulf %184, %159 : vector<8x256xf32>
    %196 = arith.mulf %176, %186 : vector<8x256xf32>
    %197 = arith.addf %195, %196 : vector<8x256xf32>
    %198 = math.tanh %197 : vector<8x256xf32>
    %199 = arith.mulf %194, %198 : vector<8x256xf32>
    %c5_i32 = arith.constant 5 : i32
    %c8_i32_70 = arith.constant 8 : i32
    %200 = arith.muli %c5_i32, %c8_i32_70 : i32
    %201 = tpu.assume_multiple %200, 8 : i32
    %202 = arith.truncf %199 : vector<8x256xf32> to vector<8x256xbf16>
    %cst_71 = arith.constant dense<0.000000e+00> : vector<8x1024xf32>
    %203 = tpu.matmul %202, %7, %cst_71 {dimension_numbers = #tpu.dot_dimension_numbers<[1], [0], [0], [1], [0, 0, 1, 1], [], []>} : vector<8x256xbf16>, vector<256x1024xbf16>, vector<8x1024xf32> -> vector<8x1024xf32>
    %204 = arith.index_cast %201 : i32 to index
    %c0_72 = arith.constant 0 : index
    %205 = vector.load %arg7[%204, %c0_72] : memref<64x1024xf32, #tpu.memory_space<vmem>>, vector<8x1024xf32>
    %206 = arith.addf %205, %203 : vector<8x1024xf32>
    %207 = vector.extract_strided_slice %206 {offsets = [0, 0], sizes = [8, 256], strides = [1, 1]} : vector<8x1024xf32> to vector<8x256xf32>
    %cst_73 = arith.constant 5.000000e-01 : f32
    %208 = vector.broadcast %cst_73 : f32 to vector<8x256xf32>
    %209 = arith.mulf %208, %207 : vector<8x256xf32>
    %210 = math.tanh %209 : vector<8x256xf32>
    %cst_74 = arith.constant 1.000000e+00 : f32
    %211 = vector.broadcast %cst_74 : f32 to vector<8x256xf32>
    %212 = arith.addf %211, %210 : vector<8x256xf32>
    %cst_75 = arith.constant 5.000000e-01 : f32
    %213 = vector.broadcast %cst_75 : f32 to vector<8x256xf32>
    %214 = arith.mulf %213, %212 : vector<8x256xf32>
    %215 = vector.extract_strided_slice %206 {offsets = [0, 256], sizes = [8, 256], strides = [1, 1]} : vector<8x1024xf32> to vector<8x256xf32>
    %cst_76 = arith.constant 5.000000e-01 : f32
    %216 = vector.broadcast %cst_76 : f32 to vector<8x256xf32>
    %217 = arith.mulf %216, %215 : vector<8x256xf32>
    %218 = math.tanh %217 : vector<8x256xf32>
    %cst_77 = arith.constant 1.000000e+00 : f32
    %219 = vector.broadcast %cst_77 : f32 to vector<8x256xf32>
    %220 = arith.addf %219, %218 : vector<8x256xf32>
    %cst_78 = arith.constant 5.000000e-01 : f32
    %221 = vector.broadcast %cst_78 : f32 to vector<8x256xf32>
    %222 = arith.mulf %221, %220 : vector<8x256xf32>
    %223 = vector.extract_strided_slice %206 {offsets = [0, 512], sizes = [8, 256], strides = [1, 1]} : vector<8x1024xf32> to vector<8x256xf32>
    %224 = math.tanh %223 : vector<8x256xf32>
    %225 = vector.extract_strided_slice %206 {offsets = [0, 768], sizes = [8, 256], strides = [1, 1]} : vector<8x1024xf32> to vector<8x256xf32>
    %cst_79 = arith.constant 5.000000e-01 : f32
    %226 = vector.broadcast %cst_79 : f32 to vector<8x256xf32>
    %227 = arith.mulf %226, %225 : vector<8x256xf32>
    %228 = math.tanh %227 : vector<8x256xf32>
    %cst_80 = arith.constant 1.000000e+00 : f32
    %229 = vector.broadcast %cst_80 : f32 to vector<8x256xf32>
    %230 = arith.addf %229, %228 : vector<8x256xf32>
    %cst_81 = arith.constant 5.000000e-01 : f32
    %231 = vector.broadcast %cst_81 : f32 to vector<8x256xf32>
    %232 = arith.mulf %231, %230 : vector<8x256xf32>
    %233 = arith.mulf %222, %197 : vector<8x256xf32>
    %234 = arith.mulf %214, %224 : vector<8x256xf32>
    %235 = arith.addf %233, %234 : vector<8x256xf32>
    %236 = math.tanh %235 : vector<8x256xf32>
    %237 = arith.mulf %232, %236 : vector<8x256xf32>
    %c6_i32 = arith.constant 6 : i32
    %c8_i32_82 = arith.constant 8 : i32
    %238 = arith.muli %c6_i32, %c8_i32_82 : i32
    %239 = tpu.assume_multiple %238, 8 : i32
    %240 = arith.truncf %237 : vector<8x256xf32> to vector<8x256xbf16>
    %cst_83 = arith.constant dense<0.000000e+00> : vector<8x1024xf32>
    %241 = tpu.matmul %240, %7, %cst_83 {dimension_numbers = #tpu.dot_dimension_numbers<[1], [0], [0], [1], [0, 0, 1, 1], [], []>} : vector<8x256xbf16>, vector<256x1024xbf16>, vector<8x1024xf32> -> vector<8x1024xf32>
    %242 = arith.index_cast %239 : i32 to index
    %c0_84 = arith.constant 0 : index
    %243 = vector.load %arg7[%242, %c0_84] : memref<64x1024xf32, #tpu.memory_space<vmem>>, vector<8x1024xf32>
    %244 = arith.addf %243, %241 : vector<8x1024xf32>
    %245 = vector.extract_strided_slice %244 {offsets = [0, 0], sizes = [8, 256], strides = [1, 1]} : vector<8x1024xf32> to vector<8x256xf32>
    %cst_85 = arith.constant 5.000000e-01 : f32
    %246 = vector.broadcast %cst_85 : f32 to vector<8x256xf32>
    %247 = arith.mulf %246, %245 : vector<8x256xf32>
    %248 = math.tanh %247 : vector<8x256xf32>
    %cst_86 = arith.constant 1.000000e+00 : f32
    %249 = vector.broadcast %cst_86 : f32 to vector<8x256xf32>
    %250 = arith.addf %249, %248 : vector<8x256xf32>
    %cst_87 = arith.constant 5.000000e-01 : f32
    %251 = vector.broadcast %cst_87 : f32 to vector<8x256xf32>
    %252 = arith.mulf %251, %250 : vector<8x256xf32>
    %253 = vector.extract_strided_slice %244 {offsets = [0, 256], sizes = [8, 256], strides = [1, 1]} : vector<8x1024xf32> to vector<8x256xf32>
    %cst_88 = arith.constant 5.000000e-01 : f32
    %254 = vector.broadcast %cst_88 : f32 to vector<8x256xf32>
    %255 = arith.mulf %254, %253 : vector<8x256xf32>
    %256 = math.tanh %255 : vector<8x256xf32>
    %cst_89 = arith.constant 1.000000e+00 : f32
    %257 = vector.broadcast %cst_89 : f32 to vector<8x256xf32>
    %258 = arith.addf %257, %256 : vector<8x256xf32>
    %cst_90 = arith.constant 5.000000e-01 : f32
    %259 = vector.broadcast %cst_90 : f32 to vector<8x256xf32>
    %260 = arith.mulf %259, %258 : vector<8x256xf32>
    %261 = vector.extract_strided_slice %244 {offsets = [0, 512], sizes = [8, 256], strides = [1, 1]} : vector<8x1024xf32> to vector<8x256xf32>
    %262 = math.tanh %261 : vector<8x256xf32>
    %263 = vector.extract_strided_slice %244 {offsets = [0, 768], sizes = [8, 256], strides = [1, 1]} : vector<8x1024xf32> to vector<8x256xf32>
    %cst_91 = arith.constant 5.000000e-01 : f32
    %264 = vector.broadcast %cst_91 : f32 to vector<8x256xf32>
    %265 = arith.mulf %264, %263 : vector<8x256xf32>
    %266 = math.tanh %265 : vector<8x256xf32>
    %cst_92 = arith.constant 1.000000e+00 : f32
    %267 = vector.broadcast %cst_92 : f32 to vector<8x256xf32>
    %268 = arith.addf %267, %266 : vector<8x256xf32>
    %cst_93 = arith.constant 5.000000e-01 : f32
    %269 = vector.broadcast %cst_93 : f32 to vector<8x256xf32>
    %270 = arith.mulf %269, %268 : vector<8x256xf32>
    %271 = arith.mulf %260, %235 : vector<8x256xf32>
    %272 = arith.mulf %252, %262 : vector<8x256xf32>
    %273 = arith.addf %271, %272 : vector<8x256xf32>
    %274 = math.tanh %273 : vector<8x256xf32>
    %275 = arith.mulf %270, %274 : vector<8x256xf32>
    %c7_i32 = arith.constant 7 : i32
    %c8_i32_94 = arith.constant 8 : i32
    %276 = arith.muli %c7_i32, %c8_i32_94 : i32
    %277 = tpu.assume_multiple %276, 8 : i32
    %278 = arith.truncf %275 : vector<8x256xf32> to vector<8x256xbf16>
    %cst_95 = arith.constant dense<0.000000e+00> : vector<8x1024xf32>
    %279 = tpu.matmul %278, %7, %cst_95 {dimension_numbers = #tpu.dot_dimension_numbers<[1], [0], [0], [1], [0, 0, 1, 1], [], []>} : vector<8x256xbf16>, vector<256x1024xbf16>, vector<8x1024xf32> -> vector<8x1024xf32>
    %280 = arith.index_cast %277 : i32 to index
    %c0_96 = arith.constant 0 : index
    %281 = vector.load %arg7[%280, %c0_96] : memref<64x1024xf32, #tpu.memory_space<vmem>>, vector<8x1024xf32>
    %282 = arith.addf %281, %279 : vector<8x1024xf32>
    %283 = vector.extract_strided_slice %282 {offsets = [0, 0], sizes = [8, 256], strides = [1, 1]} : vector<8x1024xf32> to vector<8x256xf32>
    %cst_97 = arith.constant 5.000000e-01 : f32
    %284 = vector.broadcast %cst_97 : f32 to vector<8x256xf32>
    %285 = arith.mulf %284, %283 : vector<8x256xf32>
    %286 = math.tanh %285 : vector<8x256xf32>
    %cst_98 = arith.constant 1.000000e+00 : f32
    %287 = vector.broadcast %cst_98 : f32 to vector<8x256xf32>
    %288 = arith.addf %287, %286 : vector<8x256xf32>
    %cst_99 = arith.constant 5.000000e-01 : f32
    %289 = vector.broadcast %cst_99 : f32 to vector<8x256xf32>
    %290 = arith.mulf %289, %288 : vector<8x256xf32>
    %291 = vector.extract_strided_slice %282 {offsets = [0, 256], sizes = [8, 256], strides = [1, 1]} : vector<8x1024xf32> to vector<8x256xf32>
    %cst_100 = arith.constant 5.000000e-01 : f32
    %292 = vector.broadcast %cst_100 : f32 to vector<8x256xf32>
    %293 = arith.mulf %292, %291 : vector<8x256xf32>
    %294 = math.tanh %293 : vector<8x256xf32>
    %cst_101 = arith.constant 1.000000e+00 : f32
    %295 = vector.broadcast %cst_101 : f32 to vector<8x256xf32>
    %296 = arith.addf %295, %294 : vector<8x256xf32>
    %cst_102 = arith.constant 5.000000e-01 : f32
    %297 = vector.broadcast %cst_102 : f32 to vector<8x256xf32>
    %298 = arith.mulf %297, %296 : vector<8x256xf32>
    %299 = vector.extract_strided_slice %282 {offsets = [0, 512], sizes = [8, 256], strides = [1, 1]} : vector<8x1024xf32> to vector<8x256xf32>
    %300 = math.tanh %299 : vector<8x256xf32>
    %301 = vector.extract_strided_slice %282 {offsets = [0, 768], sizes = [8, 256], strides = [1, 1]} : vector<8x1024xf32> to vector<8x256xf32>
    %cst_103 = arith.constant 5.000000e-01 : f32
    %302 = vector.broadcast %cst_103 : f32 to vector<8x256xf32>
    %303 = arith.mulf %302, %301 : vector<8x256xf32>
    %304 = math.tanh %303 : vector<8x256xf32>
    %cst_104 = arith.constant 1.000000e+00 : f32
    %305 = vector.broadcast %cst_104 : f32 to vector<8x256xf32>
    %306 = arith.addf %305, %304 : vector<8x256xf32>
    %cst_105 = arith.constant 5.000000e-01 : f32
    %307 = vector.broadcast %cst_105 : f32 to vector<8x256xf32>
    %308 = arith.mulf %307, %306 : vector<8x256xf32>
    %309 = arith.mulf %298, %273 : vector<8x256xf32>
    %310 = arith.mulf %290, %300 : vector<8x256xf32>
    %311 = arith.addf %309, %310 : vector<8x256xf32>
    %312 = math.tanh %311 : vector<8x256xf32>
    %313 = arith.mulf %308, %312 : vector<8x256xf32>
    %c8_i32_106 = arith.constant 8 : i32
    %c0_107 = arith.constant 0 : index
    %c0_108 = arith.constant 0 : index
    %314 = vector.load %arg4[%c0_107, %c0_108] : memref<256x3xf32, #tpu.memory_space<vmem>>, vector<256x3xf32>
    %cst_109 = arith.constant dense<0.000000e+00> : vector<8x3xf32>
    %315 = tpu.matmul %313, %314, %cst_109 {dimension_numbers = #tpu.dot_dimension_numbers<[1], [0], [0], [1], [0, 0, 1, 1], [], []>} : vector<8x256xf32>, vector<256x3xf32>, vector<8x3xf32> -> vector<8x3xf32>
    %c0_110 = arith.constant 0 : index
    %c0_111 = arith.constant 0 : index
    %316 = vector.load %arg5[%c0_110, %c0_111] : memref<1x3xf32, #tpu.memory_space<vmem>>, vector<1x3xf32>
    %317 = vector.broadcast %316 : vector<1x3xf32> to vector<8x3xf32>
    %318 = arith.addf %315, %317 : vector<8x3xf32>
    %cst_112 = arith.constant dense<0xFF800000> : vector<8xf32>
    %319 = vector.multi_reduction <maximumf>, %318, %cst_112 [1] : vector<8x3xf32> to vector<8xf32>
    %320 = vector.shape_cast %319 : vector<8xf32> to vector<8x1xf32>
    %321 = vector.broadcast %320 : vector<8x1xf32> to vector<8x3xf32>
    %322 = arith.subf %318, %321 : vector<8x3xf32>
    %323 = math.exp %322 : vector<8x3xf32>
    %cst_113 = arith.constant dense<0.000000e+00> : vector<8xf32>
    %324 = vector.multi_reduction <add>, %323, %cst_113 [1] : vector<8x3xf32> to vector<8xf32>
    %325 = vector.shape_cast %324 : vector<8xf32> to vector<8x1xf32>
    %326 = vector.broadcast %325 : vector<8x1xf32> to vector<8x3xf32>
    %327 = arith.divf %323, %326 : vector<8x3xf32>
    %c0_114 = arith.constant 0 : index
    %c0_115 = arith.constant 0 : index
    %328 = vector.load %arg6[%c0_114, %c0_115] : memref<8x3xf32, #tpu.memory_space<vmem>>, vector<8x3xf32>
    tpu.vector_store %arg6[%c0_114, %c0_115], %327 {strides = array<i32>} : memref<8x3xf32, #tpu.memory_space<vmem>>, vector<8x3xf32>,
    return
  }
}

</mosaic_0001>

<llo_original>
// kernel: w2v_t2v_lstm_forward.1
$region0: #{w2v_t2v_lstm_forward.1}
  #allocation0 [shape = 'u32[]', space=smem, size = 0x4, offset = 0x4, fixed_abs, tag = 'smem constant byte address 0x4 - core index']
  #allocation1 [shape = 'u32[72,128]{1,0:T(1,128)}', space=vmem, size = 0x9000, scoped, tag = 'internal scratch']
  #allocation2 [shape = 'f32[64,1024]{1,0:T(8,128)}', space=vmem, size = 0x40000, scoped, tag = 'scratch operand']
  %s0 = inlined_call_operand.vmem [shape: f32[64,24], index: 0, kind: input, shape index: {}]
  %s1 = inlined_call_operand.vmem [shape: f32[24,1024], index: 1, kind: input, shape index: {}]
  %s2 = inlined_call_operand.vmem [shape: bf16[256,1024], index: 2, kind: input, shape index: {}]
  %s3 = inlined_call_operand.vmem [shape: f32[1,1024], index: 3, kind: input, shape index: {}]
  %s4 = inlined_call_operand.vmem [shape: f32[256,3], index: 4, kind: input, shape index: {}]
  %s5 = inlined_call_operand.vmem [shape: f32[1,3], index: 5, kind: input, shape index: {}]
  %s6 = inlined_call_operand.vmem [shape: f32[8,3], index: 6, kind: output, shape index: {}]
  %s7 = sld [smem:[#allocation0]]
  $region34: #{w2v_t2v_lstm_forward.1} parent=0
    _
  %s9 = ssub.s32 1, %s7
  %s10 = scalar_select 0, %s9, %s7
  // Predicated region
  $region2: #{w2v_t2v_lstm_forward.1} parent=0 // pred_check
    _
  $region3: #{w2v_t2v_lstm_forward.1} parent=0 // pred_check_branch
    %12 = sbr.rel (0) target = $region5
  $region4: #{w2v_t2v_lstm_forward.1} parent=0 // pred_region
    _
  $region5: #{w2v_t2v_lstm_forward.1} parent=0 // pred_fallthru
    _
  // Predicated region
  $region6: #{w2v_t2v_lstm_forward.1} parent=0 // pred_check
    _
  $region7: #{w2v_t2v_lstm_forward.1} parent=0 // pred_check_branch
    %14 = sbr.rel (0) target = $region9
  $region8: #{w2v_t2v_lstm_forward.1} parent=0 // pred_region
    _
  $region9: #{w2v_t2v_lstm_forward.1} parent=0 // pred_fallthru
    _
  // Predicated region
  $region10: #{w2v_t2v_lstm_forward.1} parent=0 // pred_check
    _
  $region11: #{w2v_t2v_lstm_forward.1} parent=0 // pred_check_branch
    %16 = sbr.rel (0) target = $region13
  $region12: #{w2v_t2v_lstm_forward.1} parent=0 // pred_region
    _
  $region13: #{w2v_t2v_lstm_forward.1} parent=0 // pred_fallthru
    _
  // Predicated region
  $region14: #{w2v_t2v_lstm_forward.1} parent=0 // pred_check
    _
  $region15: #{w2v_t2v_lstm_forward.1} parent=0 // pred_check_branch
    %18 = sbr.rel (0) target = $region17
  $region16: #{w2v_t2v_lstm_forward.1} parent=0 // pred_region
    _
  $region17: #{w2v_t2v_lstm_forward.1} parent=0 // pred_fallthru
    _
  // Predicated region
  $region18: #{w2v_t2v_lstm_forward.1} parent=0 // pred_check
    _
  $region19: #{w2v_t2v_lstm_forward.1} parent=0 // pred_check_branch
    %20 = sbr.rel (0) target = $region21
  $region20: #{w2v_t2v_lstm_forward.1} parent=0 // pred_region
    _
  $region21: #{w2v_t2v_lstm_forward.1} parent=0 // pred_fallthru
    _
  // Predicated region
  $region22: #{w2v_t2v_lstm_forward.1} parent=0 // pred_check
    _
  $region23: #{w2v_t2v_lstm_forward.1} parent=0 // pred_check_branch
    %22 = sbr.rel (0) target = $region25
  $region24: #{w2v_t2v_lstm_forward.1} parent=0 // pred_region
    _
  $region25: #{w2v_t2v_lstm_forward.1} parent=0 // pred_fallthru
    _
  %v24 = vld [vmem:[%s0] sm:$0xff]
  %v25 = vld [vmem:[%s0 + $0x8] sm:$0xff]
  %v26 = vld [vmem:[%s0 + $0x10] sm:$0xff]
  %v27 = vld [vmem:[%s0 + $0x18] sm:$0xff]
  %v28 = vld [vmem:[%s0 + $0x20] sm:$0xff]
  %v29 = vld [vmem:[%s0 + $0x28] sm:$0xff]
  %v30 = vld [vmem:[%s0 + $0x30] sm:$0xff]
  %v31 = vld [vmem:[%s0 + $0x38] sm:$0xff]
  %v32 = vld [vmem:[%s1] sm:$0xff]
  %v33 = vld [vmem:[%s1 + $0x8] sm:$0xff]
  %v34 = vld [vmem:[%s1 + $0x10] sm:$0xff]
  %v35 = vld [vmem:[%s1 + $0x18] sm:$0xff]
  %v36 = vld [vmem:[%s1 + $0x20] sm:$0xff]
  %v37 = vld [vmem:[%s1 + $0x28] sm:$0xff]
  %v38 = vld [vmem:[%s1 + $0x30] sm:$0xff]
  %v39 = vld [vmem:[%s1 + $0x38] sm:$0xff]
  %v40 = vld [vmem:[%s1 + $0x40] sm:$0xff]
  %v41 = vld [vmem:[%s1 + $0x48] sm:$0xff]
  %v42 = vld [vmem:[%s1 + $0x50] sm:$0xff]
  %v43 = vld [vmem:[%s1 + $0x58] sm:$0xff]
  %v44 = vld [vmem:[%s1 + $0x60] sm:$0xff]
  %v45 = vld [vmem:[%s1 + $0x68] sm:$0xff]
  %v46 = vld [vmem:[%s1 + $0x70] sm:$0xff]
  %v47 = vld [vmem:[%s1 + $0x78] sm:$0xff]
  %v48 = vld [vmem:[%s1 + $0x80] sm:$0xff]
  %v49 = vld [vmem:[%s1 + $0x88] sm:$0xff]
  %v50 = vld [vmem:[%s1 + $0x90] sm:$0xff]
  %v51 = vld [vmem:[%s1 + $0x98] sm:$0xff]
  %v52 = vld [vmem:[%s1 + $0xa0] sm:$0xff]
  %v53 = vld [vmem:[%s1 + $0xa8] sm:$0xff]
  %v54 = vld [vmem:[%s1 + $0xb0] sm:$0xff]
  %v55 = vld [vmem:[%s1 + $0xb8] sm:$0xff]
  %v56 = vld [vmem:[%s3] sm:$0xff]
  %v58 = vperm.slane %v56, 0
  %v59 = vperm.slane %v56, 1
  %v60 = vperm.slane %v56, 2
  %v61 = vperm.slane %v56, 3
  %v62 = vperm.slane %v56, 4
  %v63 = vperm.slane %v56, 5
  %v64 = vperm.slane %v56, 6
  %v65 = vperm.slane %v56, 7
  %vm74 = vcmask 195584
  %v76 = vsel %vm74, %v24, 0
  %v79 = vsel %vm74, %v25, 0
  %v82 = vsel %vm74, %v26, 0
  %v85 = vsel %vm74, %v27, 0
  %v88 = vsel %vm74, %v28, 0
  %v91 = vsel %vm74, %v29, 0
  %v94 = vsel %vm74, %v30, 0
  %v97 = vsel %vm74, %v31, 0
  %99 = vmatpush.msra.mxu0 0.0
  %100 = vmatpush.msra.mxu0 0.0
  %101 = vmatpush.msra.mxu0 0.0
  %102 = vmatpush.msra.mxu0 0.0
  %103 = vmatpush.msra.mxu0 0.0
  %104 = vmatpush.msra.mxu0 0.0
  %105 = vmatpush.msra.mxu0 0.0
  %106 = vmatpush.msra.mxu0 0.0
  %107 = vmatpush.msra.mxu0 0.0
  %108 = vmatpush.msra.mxu0 0.0
  %109 = vmatpush.msra.mxu0 0.0
  %110 = vmatpush.msra.mxu0 0.0
  %111 = vmatpush.msra.mxu0 0.0
  %112 = vmatpush.msra.mxu0 %v48
  %113 = vmatpush.msra.mxu0 %v40
  %114 = vmatpush.msra.mxu0 %v32
  %115 = vmatmul.f32.gmra.mxu0 %v76
  %v116 = vpop.f32.mrf.mxu0
  %v117 = vadd.f32 %v58, %v116
  %118 = vmatmul.f32.gmra.mxu0 %v79
  %v119 = vpop.f32.mrf.mxu0
  %v120 = vadd.f32 %v58, %v119
  %121 = vmatmul.f32.gmra.mxu0 %v82
  %v122 = vpop.f32.mrf.mxu0
  %v123 = vadd.f32 %v58, %v122
  %124 = vmatmul.f32.gmra.mxu0 %v85
  %v125 = vpop.f32.mrf.mxu0
  %v126 = vadd.f32 %v58, %v125
  %127 = vmatmul.f32.gmra.mxu0 %v88
  %v128 = vpop.f32.mrf.mxu0
  %v129 = vadd.f32 %v58, %v128
  %130 = vmatmul.f32.gmra.mxu0 %v91
  %v131 = vpop.f32.mrf.mxu0
  %v132 = vadd.f32 %v58, %v131
  %133 = vmatmul.f32.gmra.mxu0 %v94
  %v134 = vpop.f32.mrf.mxu0
  %v135 = vadd.f32 %v58, %v134
  %136 = vmatmul.f32.gmra.mxu0 %v97
  %v137 = vpop.f32.mrf.mxu0
  %v138 = vadd.f32 %v58, %v137
  %139 = vdwg.mxu0
  %140 = vmatpush.msra.mxu0 0.0
  %141 = vmatpush.msra.mxu0 0.0
  %142 = vmatpush.msra.mxu0 0.0
  %143 = vmatpush.msra.mxu0 0.0
  %144 = vmatpush.msra.mxu0 0.0
  %145 = vmatpush.msra.mxu0 0.0
  %146 = vmatpush.msra.mxu0 0.0
  %147 = vmatpush.msra.mxu0 0.0
  %148 = vmatpush.msra.mxu0 0.0
  %149 = vmatpush.msra.mxu0 0.0
  %150 = vmatpush.msra.mxu0 0.0
  %151 = vmatpush.msra.mxu0 0.0
  %152 = vmatpush.msra.mxu0 0.0
  %153 = vmatpush.msra.mxu0 %v49
  %154 = vmatpush.msra.mxu0 %v41
  %155 = vmatpush.msra.mxu0 %v33
  %156 = vmatmul.f32.gmra.mxu0 %v76
  %v157 = vpop.f32.mrf.mxu0
  %v158 = vadd.f32 %v59, %v157
  %159 = vmatmul.f32.gmra.mxu0 %v79
  %v160 = vpop.f32.mrf.mxu0
  %v161 = vadd.f32 %v59, %v160
  %162 = vmatmul.f32.gmra.mxu0 %v82
  %v163 = vpop.f32.mrf.mxu0
  %v164 = vadd.f32 %v59, %v163
  %165 = vmatmul.f32.gmra.mxu0 %v85
  %v166 = vpop.f32.mrf.mxu0
  %v167 = vadd.f32 %v59, %v166
  %168 = vmatmul.f32.gmra.mxu0 %v88
  %v169 = vpop.f32.mrf.mxu0
  %v170 = vadd.f32 %v59, %v169
  %171 = vmatmul.f32.gmra.mxu0 %v91
  %v172 = vpop.f32.mrf.mxu0
  %v173 = vadd.f32 %v59, %v172
  %174 = vmatmul.f32.gmra.mxu0 %v94
  %v175 = vpop.f32.mrf.mxu0
  %v176 = vadd.f32 %v59, %v175
  %177 = vmatmul.f32.gmra.mxu0 %v97
  %v178 = vpop.f32.mrf.mxu0
  %v179 = vadd.f32 %v59, %v178
  %180 = vdwg.mxu0
  %181 = vmatpush.msra.mxu0 0.0
  %182 = vmatpush.msra.mxu0 0.0
  %183 = vmatpush.msra.mxu0 0.0
  %184 = vmatpush.msra.mxu0 0.0
  %185 = vmatpush.msra.mxu0 0.0
  %186 = vmatpush.msra.mxu0 0.0
  %187 = vmatpush.msra.mxu0 0.0
  %188 = vmatpush.msra.mxu0 0.0
  %189 = vmatpush.msra.mxu0 0.0
  %190 = vmatpush.msra.mxu0 0.0
  %191 = vmatpush.msra.mxu0 0.0
  %192 = vmatpush.msra.mxu0 0.0
  %193 = vmatpush.msra.mxu0 0.0
  %194 = vmatpush.msra.mxu0 %v50
  %195 = vmatpush.msra.mxu0 %v42
  %196 = vmatpush.msra.mxu0 %v34
  %197 = vmatmul.f32.gmra.mxu0 %v76
  %v198 = vpop.f32.mrf.mxu0
  %v199 = vadd.f32 %v60, %v198
  %200 = vmatmul.f32.gmra.mxu0 %v79
  %v201 = vpop.f32.mrf.mxu0
  %v202 = vadd.f32 %v60, %v201
  %203 = vmatmul.f32.gmra.mxu0 %v82
  %v204 = vpop.f32.mrf.mxu0
  %v205 = vadd.f32 %v60, %v204
  %206 = vmatmul.f32.gmra.mxu0 %v85
  %v207 = vpop.f32.mrf.mxu0
  %v208 = vadd.f32 %v60, %v207
  %209 = vmatmul.f32.gmra.mxu0 %v88
  %v210 = vpop.f32.mrf.mxu0
  %v211 = vadd.f32 %v60, %v210
  %212 = vmatmul.f32.gmra.mxu0 %v91
  %v213 = vpop.f32.mrf.mxu0
  %v214 = vadd.f32 %v60, %v213
  %215 = vmatmul.f32.gmra.mxu0 %v94
  %v216 = vpop.f32.mrf.mxu0
  %v217 = vadd.f32 %v60, %v216
  %218 = vmatmul.f32.gmra.mxu0 %v97
  %v219 = vpop.f32.mrf.mxu0
  %v220 = vadd.f32 %v60, %v219
  %221 = vdwg.mxu0
  %222 = vmatpush.msra.mxu0 0.0
  %223 = vmatpush.msra.mxu0 0.0
  %224 = vmatpush.msra.mxu0 0.0
  %225 = vmatpush.msra.mxu0 0.0
  %226 = vmatpush.msra.mxu0 0.0
  %227 = vmatpush.msra.mxu0 0.0
  %228 = vmatpush.msra.mxu0 0.0
  %229 = vmatpush.msra.mxu0 0.0
  %230 = vmatpush.msra.mxu0 0.0
  %231 = vmatpush.msra.mxu0 0.0
  %232 = vmatpush.msra.mxu0 0.0
  %233 = vmatpush.msra.mxu0 0.0
  %234 = vmatpush.msra.mxu0 0.0
  %235 = vmatpush.msra.mxu0 %v51
  %236 = vmatpush.msra.mxu0 %v43
  %237 = vmatpush.msra.mxu0 %v35
  %238 = vmatmul.f32.gmra.mxu0 %v76
  %v239 = vpop.f32.mrf.mxu0
  %v240 = vadd.f32 %v61, %v239
  %241 = vmatmul.f32.gmra.mxu0 %v79
  %v242 = vpop.f32.mrf.mxu0
  %v243 = vadd.f32 %v61, %v242
  %244 = vmatmul.f32.gmra.mxu0 %v82
  %v245 = vpop.f32.mrf.mxu0
  %v246 = vadd.f32 %v61, %v245
  %247 = vmatmul.f32.gmra.mxu0 %v85
  %v248 = vpop.f32.mrf.mxu0
  %v249 = vadd.f32 %v61, %v248
  %250 = vmatmul.f32.gmra.mxu0 %v88
  %v251 = vpop.f32.mrf.mxu0
  %v252 = vadd.f32 %v61, %v251
  %253 = vmatmul.f32.gmra.mxu0 %v91
  %v254 = vpop.f32.mrf.mxu0
  %v255 = vadd.f32 %v61, %v254
  %256 = vmatmul.f32.gmra.mxu0 %v94
  %v257 = vpop.f32.mrf.mxu0
  %v258 = vadd.f32 %v61, %v257
  %259 = vmatmul.f32.gmra.mxu0 %v97
  %v260 = vpop.f32.mrf.mxu0
  %v261 = vadd.f32 %v61, %v260
  %262 = vdwg.mxu0
  %263 = vmatpush.msra.mxu0 0.0
  %264 = vmatpush.msra.mxu0 0.0
  %265 = vmatpush.msra.mxu0 0.0
  %266 = vmatpush.msra.mxu0 0.0
  %267 = vmatpush.msra.mxu0 0.0
  %268 = vmatpush.msra.mxu0 0.0
  %269 = vmatpush.msra.mxu0 0.0
  %270 = vmatpush.msra.mxu0 0.0
  %271 = vmatpush.msra.mxu0 0.0
  %272 = vmatpush.msra.mxu0 0.0
  %273 = vmatpush.msra.mxu0 0.0
  %274 = vmatpush.msra.mxu0 0.0
  %275 = vmatpush.msra.mxu0 0.0
  %276 = vmatpush.msra.mxu0 %v52
  %277 = vmatpush.msra.mxu0 %v44
  %278 = vmatpush.msra.mxu0 %v36
  %279 = vmatmul.f32.gmra.mxu0 %v76
  %v280 = vpop.f32.mrf.mxu0
  %v281 = vadd.f32 %v62, %v280
  %282 = vmatmul.f32.gmra.mxu0 %v79
  %v283 = vpop.f32.mrf.mxu0
  %v284 = vadd.f32 %v62, %v283
  %285 = vmatmul.f32.gmra.mxu0 %v82
  %v286 = vpop.f32.mrf.mxu0
  %v287 = vadd.f32 %v62, %v286
  %288 = vmatmul.f32.gmra.mxu0 %v85
  %v289 = vpop.f32.mrf.mxu0
  %v290 = vadd.f32 %v62, %v289
  %291 = vmatmul.f32.gmra.mxu0 %v88
  %v292 = vpop.f32.mrf.mxu0
  %v293 = vadd.f32 %v62, %v292
  %294 = vmatmul.f32.gmra.mxu0 %v91
  %v295 = vpop.f32.mrf.mxu0
  %v296 = vadd.f32 %v62, %v295
  %297 = vmatmul.f32.gmra.mxu0 %v94
  %v298 = vpop.f32.mrf.mxu0
  %v299 = vadd.f32 %v62, %v298
  %300 = vmatmul.f32.gmra.mxu0 %v97
  %v301 = vpop.f32.mrf.mxu0
  %v302 = vadd.f32 %v62, %v301
  %303 = vdwg.mxu0
  %304 = vmatpush.msra.mxu0 0.0
  %305 = vmatpush.msra.mxu0 0.0
  %306 = vmatpush.msra.mxu0 0.0
  %307 = vmatpush.msra.mxu0 0.0
  %308 = vmatpush.msra.mxu0 0.0
  %309 = vmatpush.msra.mxu0 0.0
  %310 = vmatpush.msra.mxu0 0.0
  %311 = vmatpush.msra.mxu0 0.0
  %312 = vmatpush.msra.mxu0 0.0
  %313 = vmatpush.msra.mxu0 0.0
  %314 = vmatpush.msra.mxu0 0.0
  %315 = vmatpush.msra.mxu0 0.0
  %316 = vmatpush.msra.mxu0 0.0
  %317 = vmatpush.msra.mxu0 %v53
  %318 = vmatpush.msra.mxu0 %v45
  %319 = vmatpush.msra.mxu0 %v37
  %320 = vmatmul.f32.gmra.mxu0 %v76
  %v321 = vpop.f32.mrf.mxu0
  %v322 = vadd.f32 %v63, %v321
  %323 = vmatmul.f32.gmra.mxu0 %v79
  %v324 = vpop.f32.mrf.mxu0
  %v325 = vadd.f32 %v63, %v324
  %326 = vmatmul.f32.gmra.mxu0 %v82
  %v327 = vpop.f32.mrf.mxu0
  %v328 = vadd.f32 %v63, %v327
  %329 = vmatmul.f32.gmra.mxu0 %v85
  %v330 = vpop.f32.mrf.mxu0
  %v331 = vadd.f32 %v63, %v330
  %332 = vmatmul.f32.gmra.mxu0 %v88
  %v333 = vpop.f32.mrf.mxu0
  %v334 = vadd.f32 %v63, %v333
  %335 = vmatmul.f32.gmra.mxu0 %v91
  %v336 = vpop.f32.mrf.mxu0
  %v337 = vadd.f32 %v63, %v336
  %338 = vmatmul.f32.gmra.mxu0 %v94
  %v339 = vpop.f32.mrf.mxu0
  %v340 = vadd.f32 %v63, %v339
  %341 = vmatmul.f32.gmra.mxu0 %v97
  %v342 = vpop.f32.mrf.mxu0
  %v343 = vadd.f32 %v63, %v342
  %344 = vdwg.mxu0
  %345 = vmatpush.msra.mxu0 0.0
  %346 = vmatpush.msra.mxu0 0.0
  %347 = vmatpush.msra.mxu0 0.0
  %348 = vmatpush.msra.mxu0 0.0
  %349 = vmatpush.msra.mxu0 0.0
  %350 = vmatpush.msra.mxu0 0.0
  %351 = vmatpush.msra.mxu0 0.0
  %352 = vmatpush.msra.mxu0 0.0
  %353 = vmatpush.msra.mxu0 0.0
  %354 = vmatpush.msra.mxu0 0.0
  %355 = vmatpush.msra.mxu0 0.0
  %356 = vmatpush.msra.mxu0 0.0
  %357 = vmatpush.msra.mxu0 0.0
  %358 = vmatpush.msra.mxu0 %v54
  %359 = vmatpush.msra.mxu0 %v46
  %360 = vmatpush.msra.mxu0 %v38
  %361 = vmatmul.f32.gmra.mxu0 %v76
  %v362 = vpop.f32.mrf.mxu0
  %v363 = vadd.f32 %v64, %v362
  %364 = vmatmul.f32.gmra.mxu0 %v79
  %v365 = vpop.f32.mrf.mxu0
  %v366 = vadd.f32 %v64, %v365
  %367 = vmatmul.f32.gmra.mxu0 %v82
  %v368 = vpop.f32.mrf.mxu0
  %v369 = vadd.f32 %v64, %v368
  %370 = vmatmul.f32.gmra.mxu0 %v85
  %v371 = vpop.f32.mrf.mxu0
  %v372 = vadd.f32 %v64, %v371
  %373 = vmatmul.f32.gmra.mxu0 %v88
  %v374 = vpop.f32.mrf.mxu0
  %v375 = vadd.f32 %v64, %v374
  %376 = vmatmul.f32.gmra.mxu0 %v91
  %v377 = vpop.f32.mrf.mxu0
  %v378 = vadd.f32 %v64, %v377
  %379 = vmatmul.f32.gmra.mxu0 %v94
  %v380 = vpop.f32.mrf.mxu0
  %v381 = vadd.f32 %v64, %v380
  %382 = vmatmul.f32.gmra.mxu0 %v97
  %v383 = vpop.f32.mrf.mxu0
  %v384 = vadd.f32 %v64, %v383
  %385 = vdwg.mxu0
  %386 = vmatpush.msra.mxu0 0.0
  %387 = vmatpush.msra.mxu0 0.0
  %388 = vmatpush.msra.mxu0 0.0
  %389 = vmatpush.msra.mxu0 0.0
  %390 = vmatpush.msra.mxu0 0.0
  %391 = vmatpush.msra.mxu0 0.0
  %392 = vmatpush.msra.mxu0 0.0
  %393 = vmatpush.msra.mxu0 0.0
  %394 = vmatpush.msra.mxu0 0.0
  %395 = vmatpush.msra.mxu0 0.0
  %396 = vmatpush.msra.mxu0 0.0
  %397 = vmatpush.msra.mxu0 0.0
  %398 = vmatpush.msra.mxu0 0.0
  %399 = vmatpush.msra.mxu0 %v55
  %400 = vmatpush.msra.mxu0 %v47
  %401 = vmatpush.msra.mxu0 %v39
  %402 = vmatmul.f32.gmra.mxu0 %v76
  %v403 = vpop.f32.mrf.mxu0
  %v404 = vadd.f32 %v65, %v403
  %405 = vmatmul.f32.gmra.mxu0 %v79
  %v406 = vpop.f32.mrf.mxu0
  %v407 = vadd.f32 %v65, %v406
  %408 = vmatmul.f32.gmra.mxu0 %v82
  %v409 = vpop.f32.mrf.mxu0
  %v410 = vadd.f32 %v65, %v409
  %411 = vmatmul.f32.gmra.mxu0 %v85
  %v412 = vpop.f32.mrf.mxu0
  %v413 = vadd.f32 %v65, %v412
  %414 = vmatmul.f32.gmra.mxu0 %v88
  %v415 = vpop.f32.mrf.mxu0
  %v416 = vadd.f32 %v65, %v415
  %417 = vmatmul.f32.gmra.mxu0 %v91
  %v418 = vpop.f32.mrf.mxu0
  %v419 = vadd.f32 %v65, %v418
  %420 = vmatmul.f32.gmra.mxu0 %v94
  %v421 = vpop.f32.mrf.mxu0
  %v422 = vadd.f32 %v65, %v421
  %423 = vmatmul.f32.gmra.mxu0 %v97
  %v424 = vpop.f32.mrf.mxu0
  %v425 = vadd.f32 %v65, %v424
  %426 = vdwg.mxu0
  %427 = vst [vmem:[#allocation2] sm:$0xff] %v117
  %428 = vst [vmem:[#allocation2 + $0x8] sm:$0xff] %v158
  %429 = vst [vmem:[#allocation2 + $0x10] sm:$0xff] %v199
  %430 = vst [vmem:[#allocation2 + $0x18] sm:$0xff] %v240
  %431 = vst [vmem:[#allocation2 + $0x20] sm:$0xff] %v281
  %432 = vst [vmem:[#allocation2 + $0x28] sm:$0xff] %v322
  %433 = vst [vmem:[#allocation2 + $0x30] sm:$0xff] %v363
  %434 = vst [vmem:[#allocation2 + $0x38] sm:$0xff] %v404
  %435 = vst [vmem:[#allocation2 + $0x40] sm:$0xff] %v120
  %436 = vst [vmem:[#allocation2 + $0x48] sm:$0xff] %v161
  %437 = vst [vmem:[#allocation2 + $0x50] sm:$0xff] %v202
  %438 = vst [vmem:[#allocation2 + $0x58] sm:$0xff] %v243
  %439 = vst [vmem:[#allocation2 + $0x60] sm:$0xff] %v284
  %440 = vst [vmem:[#allocation2 + $0x68] sm:$0xff] %v325
  %441 = vst [vmem:[#allocation2 + $0x70] sm:$0xff] %v366
  %442 = vst [vmem:[#allocation2 + $0x78] sm:$0xff] %v407
  %443 = vst [vmem:[#allocation2 + $0x80] sm:$0xff] %v123
  %444 = vst [vmem:[#allocation2 + $0x88] sm:$0xff] %v164
  %445 = vst [vmem:[#allocation2 + $0x90] sm:$0xff] %v205
  %446 = vst [vmem:[#allocation2 + $0x98] sm:$0xff] %v246
  %447 = vst [vmem:[#allocation2 + $0xa0] sm:$0xff] %v287
  %448 = vst [vmem:[#allocation2 + $0xa8] sm:$0xff] %v328
  %449 = vst [vmem:[#allocation2 + $0xb0] sm:$0xff] %v369
  %450 = vst [vmem:[#allocation2 + $0xb8] sm:$0xff] %v410
  %451 = vst [vmem:[#allocation2 + $0xc0] sm:$0xff] %v126
  %452 = vst [vmem:[#allocation2 + $0xc8] sm:$0xff] %v167
  %453 = vst [vmem:[#allocation2 + $0xd0] sm:$0xff] %v208
  %454 = vst [vmem:[#allocation2 + $0xd8] sm:$0xff] %v249
  %455 = vst [vmem:[#allocation2 + $0xe0] sm:$0xff] %v290
  %456 = vst [vmem:[#allocation2 + $0xe8] sm:$0xff] %v331
  %457 = vst [vmem:[#allocation2 + $0xf0] sm:$0xff] %v372
  %458 = vst [vmem:[#allocation2 + $0xf8] sm:$0xff] %v413
  %459 = vst [vmem:[#allocation2 + $0x100] sm:$0xff] %v129
  %460 = vst [vmem:[#allocation2 + $0x108] sm:$0xff] %v170
  %461 = vst [vmem:[#allocation2 + $0x110] sm:$0xff] %v211
  %462 = vst [vmem:[#allocation2 + $0x118] sm:$0xff] %v252
  %463 = vst [vmem:[#allocation2 + $0x120] sm:$0xff] %v293
  %464 = vst [vmem:[#allocation2 + $0x128] sm:$0xff] %v334
  %465 = vst [vmem:[#allocation2 + $0x130] sm:$0xff] %v375
  %466 = vst [vmem:[#allocation2 + $0x138] sm:$0xff] %v416
  %467 = vst [vmem:[#allocation2 + $0x140] sm:$0xff] %v132
  %468 = vst [vmem:[#allocation2 + $0x148] sm:$0xff] %v173
  %469 = vst [vmem:[#allocation2 + $0x150] sm:$0xff] %v214
  %470 = vst [vmem:[#allocation2 + $0x158] sm:$0xff] %v255
  %471 = vst [vmem:[#allocation2 + $0x160] sm:$0xff] %v296
  %472 = vst [vmem:[#allocation2 + $0x168] sm:$0xff] %v337
  %473 = vst [vmem:[#allocation2 + $0x170] sm:$0xff] %v378
  %474 = vst [vmem:[#allocation2 + $0x178] sm:$0xff] %v419
  %475 = vst [vmem:[#allocation2 + $0x180] sm:$0xff] %v135
  %476 = vst [vmem:[#allocation2 + $0x188] sm:$0xff] %v176
  %477 = vst [vmem:[#allocation2 + $0x190] sm:$0xff] %v217
  %478 = vst [vmem:[#allocation2 + $0x198] sm:$0xff] %v258
  %479 = vst [vmem:[#allocation2 + $0x1a0] sm:$0xff] %v299
  %480 = vst [vmem:[#allocation2 + $0x1a8] sm:$0xff] %v340
  %481 = vst [vmem:[#allocation2 + $0x1b0] sm:$0xff] %v381
  %482 = vst [vmem:[#allocation2 + $0x1b8] sm:$0xff] %v422
  %483 = vst [vmem:[#allocation2 + $0x1c0] sm:$0xff] %v138
  %484 = vst [vmem:[#allocation2 + $0x1c8] sm:$0xff] %v179
  %485 = vst [vmem:[#allocation2 + $0x1d0] sm:$0xff] %v220
  %486 = vst [vmem:[#allocation2 + $0x1d8] sm:$0xff] %v261
  %487 = vst [vmem:[#allocation2 + $0x1e0] sm:$0xff] %v302
  %488 = vst [vmem:[#allocation2 + $0x1e8] sm:$0xff] %v343
  %489 = vst [vmem:[#allocation2 + $0x1f0] sm:$0xff] %v384
  %490 = vst [vmem:[#allocation2 + $0x1f8] sm:$0xff] %v425
  %v491 = vld [vmem:[%s2] sm:$0xff]
  %v492 = vld [vmem:[%s2 + $0x8] sm:$0xff]
  %v493 = vld [vmem:[%s2 + $0x10] sm:$0xff]
  %v494 = vld [vmem:[%s2 + $0x18] sm:$0xff]
  %v495 = vld [vmem:[%s2 + $0x20] sm:$0xff]
  %v496 = vld [vmem:[%s2 + $0x28] sm:$0xff]
  %v497 = vld [vmem:[%s2 + $0x30] sm:$0xff]
  %v498 = vld [vmem:[%s2 + $0x38] sm:$0xff]
  %v499 = vld [vmem:[%s2 + $0x40] sm:$0xff]
  %v500 = vld [vmem:[%s2 + $0x48] sm:$0xff]
  %v501 = vld [vmem:[%s2 + $0x50] sm:$0xff]
  %v502 = vld [vmem:[%s2 + $0x58] sm:$0xff]
  %v503 = vld [vmem:[%s2 + $0x60] sm:$0xff]
  %v504 = vld [vmem:[%s2 + $0x68] sm:$0xff]
  %v505 = vld [vmem:[%s2 + $0x70] sm:$0xff]
  %v506 = vld [vmem:[%s2 + $0x78] sm:$0xff]
  %v507 = vld [vmem:[%s2 + $0x80] sm:$0xff]
  %v508 = vld [vmem:[%s2 + $0x88] sm:$0xff]
  %v509 = vld [vmem:[%s2 + $0x90] sm:$0xff]
  %v510 = vld [vmem:[%s2 + $0x98] sm:$0xff]
  %v511 = vld [vmem:[%s2 + $0xa0] sm:$0xff]
  %v512 = vld [vmem:[%s2 + $0xa8] sm:$0xff]
  %v513 = vld [vmem:[%s2 + $0xb0] sm:$0xff]
  %v514 = vld [vmem:[%s2 + $0xb8] sm:$0xff]
  %v515 = vld [vmem:[%s2 + $0xc0] sm:$0xff]
  %v516 = vld [vmem:[%s2 + $0xc8] sm:$0xff]
  %v517 = vld [vmem:[%s2 + $0xd0] sm:$0xff]
  %v518 = vld [vmem:[%s2 + $0xd8] sm:$0xff]
  %v519 = vld [vmem:[%s2 + $0xe0] sm:$0xff]
  %v520 = vld [vmem:[%s2 + $0xe8] sm:$0xff]
  %v521 = vld [vmem:[%s2 + $0xf0] sm:$0xff]
  %v522 = vld [vmem:[%s2 + $0xf8] sm:$0xff]
  %v523 = vld [vmem:[%s2 + $0x100] sm:$0xff]
  %v524 = vld [vmem:[%s2 + $0x108] sm:$0xff]
  %v525 = vld [vmem:[%s2 + $0x110] sm:$0xff]
  %v526 = vld [vmem:[%s2 + $0x118] sm:$0xff]
  %v527 = vld [vmem:[%s2 + $0x120] sm:$0xff]
  %v528 = vld [vmem:[%s2 + $0x128] sm:$0xff]
  %v529 = vld [vmem:[%s2 + $0x130] sm:$0xff]
  %v530 = vld [vmem:[%s2 + $0x138] sm:$0xff]
  %v531 = vld [vmem:[%s2 + $0x140] sm:$0xff]
  %v532 = vld [vmem:[%s2 + $0x148] sm:$0xff]
  %v533 = vld [vmem:[%s2 + $0x150] sm:$0xff]
  %v534 = vld [vmem:[%s2 + $0x158] sm:$0xff]
  %v535 = vld [vmem:[%s2 + $0x160] sm:$0xff]
  %v536 = vld [vmem:[%s2 + $0x168] sm:$0xff]
  %v537 = vld [vmem:[%s2 + $0x170] sm:$0xff]
  %v538 = vld [vmem:[%s2 + $0x178] sm:$0xff]
  %v539 = vld [vmem:[%s2 + $0x180] sm:$0xff]
  %v540 = vld [vmem:[%s2 + $0x188] sm:$0xff]
  %v541 = vld [vmem:[%s2 + $0x190] sm:$0xff]
  %v542 = vld [vmem:[%s2 + $0x198] sm:$0xff]
  %v543 = vld [vmem:[%s2 + $0x1a0] sm:$0xff]
  %v544 = vld [vmem:[%s2 + $0x1a8] sm:$0xff]
  %v545 = vld [vmem:[%s2 + $0x1b0] sm:$0xff]
  %v546 = vld [vmem:[%s2 + $0x1b8] sm:$0xff]
  %v547 = vld [vmem:[%s2 + $0x1c0] sm:$0xff]
  %v548 = vld [vmem:[%s2 + $0x1c8] sm:$0xff]
  %v549 = vld [vmem:[%s2 + $0x1d0] sm:$0xff]
  %v550 = vld [vmem:[%s2 + $0x1d8] sm:$0xff]
  %v551 = vld [vmem:[%s2 + $0x1e0] sm:$0xff]
  %v552 = vld [vmem:[%s2 + $0x1e8] sm:$0xff]
  %v553 = vld [vmem:[%s2 + $0x1f0] sm:$0xff]
  %v554 = vld [vmem:[%s2 + $0x1f8] sm:$0xff]
  %v555 = vld [vmem:[%s2 + $0x200] sm:$0xff]
  %v556 = vld [vmem:[%s2 + $0x208] sm:$0xff]
  %v557 = vld [vmem:[%s2 + $0x210] sm:$0xff]
  %v558 = vld [vmem:[%s2 + $0x218] sm:$0xff]
  %v559 = vld [vmem:[%s2 + $0x220] sm:$0xff]
  %v560 = vld [vmem:[%s2 + $0x228] sm:$0xff]
  %v561 = vld [vmem:[%s2 + $0x230] sm:$0xff]
  %v562 = vld [vmem:[%s2 + $0x238] sm:$0xff]
  %v563 = vld [vmem:[%s2 + $0x240] sm:$0xff]
  %v564 = vld [vmem:[%s2 + $0x248] sm:$0xff]
  %v565 = vld [vmem:[%s2 + $0x250] sm:$0xff]
  %v566 = vld [vmem:[%s2 + $0x258] sm:$0xff]
  %v567 = vld [vmem:[%s2 + $0x260] sm:$0xff]
  %v568 = vld [vmem:[%s2 + $0x268] sm:$0xff]
  %v569 = vld [vmem:[%s2 + $0x270] sm:$0xff]
  %v570 = vld [vmem:[%s2 + $0x278] sm:$0xff]
  %v571 = vld [vmem:[%s2 + $0x280] sm:$0xff]
  %v572 = vld [vmem:[%s2 + $0x288] sm:$0xff]
  %v573 = vld [vmem:[%s2 + $0x290] sm:$0xff]
  %v574 = vld [vmem:[%s2 + $0x298] sm:$0xff]
  %v575 = vld [vmem:[%s2 + $0x2a0] sm:$0xff]
  %v576 = vld [vmem:[%s2 + $0x2a8] sm:$0xff]
  %v577 = vld [vmem:[%s2 + $0x2b0] sm:$0xff]
  %v578 = vld [vmem:[%s2 + $0x2b8] sm:$0xff]
  %v579 = vld [vmem:[%s2 + $0x2c0] sm:$0xff]
  %v580 = vld [vmem:[%s2 + $0x2c8] sm:$0xff]
  %v581 = vld [vmem:[%s2 + $0x2d0] sm:$0xff]
  %v582 = vld [vmem:[%s2 + $0x2d8] sm:$0xff]
  %v583 = vld [vmem:[%s2 + $0x2e0] sm:$0xff]
  %v584 = vld [vmem:[%s2 + $0x2e8] sm:$0xff]
  %v585 = vld [vmem:[%s2 + $0x2f0] sm:$0xff]
  %v586 = vld [vmem:[%s2 + $0x2f8] sm:$0xff]
  %v587 = vld [vmem:[%s2 + $0x300] sm:$0xff]
  %v588 = vld [vmem:[%s2 + $0x308] sm:$0xff]
  %v589 = vld [vmem:[%s2 + $0x310] sm:$0xff]
  %v590 = vld [vmem:[%s2 + $0x318] sm:$0xff]
  %v591 = vld [vmem:[%s2 + $0x320] sm:$0xff]
  %v592 = vld [vmem:[%s2 + $0x328] sm:$0xff]
  %v593 = vld [vmem:[%s2 + $0x330] sm:$0xff]
  %v594 = vld [vmem:[%s2 + $0x338] sm:$0xff]
  %v595 = vld [vmem:[%s2 + $0x340] sm:$0xff]
  %v596 = vld [vmem:[%s2 + $0x348] sm:$0xff]
  %v597 = vld [vmem:[%s2 + $0x350] sm:$0xff]
  %v598 = vld [vmem:[%s2 + $0x358] sm:$0xff]
  %v599 = vld [vmem:[%s2 + $0x360] sm:$0xff]
  %v600 = vld [vmem:[%s2 + $0x368] sm:$0xff]
  %v601 = vld [vmem:[%s2 + $0x370] sm:$0xff]
  %v602 = vld [vmem:[%s2 + $0x378] sm:$0xff]
  %v603 = vld [vmem:[%s2 + $0x380] sm:$0xff]
  %v604 = vld [vmem:[%s2 + $0x388] sm:$0xff]
  %v605 = vld [vmem:[%s2 + $0x390] sm:$0xff]
  %v606 = vld [vmem:[%s2 + $0x398] sm:$0xff]
  %v607 = vld [vmem:[%s2 + $0x3a0] sm:$0xff]
  %v608 = vld [vmem:[%s2 + $0x3a8] sm:$0xff]
  %v609 = vld [vmem:[%s2 + $0x3b0] sm:$0xff]
  %v610 = vld [vmem:[%s2 + $0x3b8] sm:$0xff]
  %v611 = vld [vmem:[%s2 + $0x3c0] sm:$0xff]
  %v612 = vld [vmem:[%s2 + $0x3c8] sm:$0xff]
  %v613 = vld [vmem:[%s2 + $0x3d0] sm:$0xff]
  %v614 = vld [vmem:[%s2 + $0x3d8] sm:$0xff]
  %v615 = vld [vmem:[%s2 + $0x3e0] sm:$0xff]
  %v616 = vld [vmem:[%s2 + $0x3e8] sm:$0xff]
  %v617 = vld [vmem:[%s2 + $0x3f0] sm:$0xff]
  %v618 = vld [vmem:[%s2 + $0x3f8] sm:$0xff]
  %v747 = vunpack.c.l.b16 %v491
  %v748 = vunpack.c.h.b16 %v491
  %v749 = vunpack.c.l.b16 %v492
  %v750 = vunpack.c.h.b16 %v492
  %v751 = vunpack.c.l.b16 %v493
  %v752 = vunpack.c.h.b16 %v493
  %v753 = vunpack.c.l.b16 %v494
  %v754 = vunpack.c.h.b16 %v494
  %v755 = vunpack.c.l.b16 %v495
  %v756 = vunpack.c.h.b16 %v495
  %v757 = vunpack.c.l.b16 %v496
  %v758 = vunpack.c.h.b16 %v496
  %v759 = vunpack.c.l.b16 %v497
  %v760 = vunpack.c.h.b16 %v497
  %v761 = vunpack.c.l.b16 %v498
  %v762 = vunpack.c.h.b16 %v498
  %v763 = vunpack.c.l.b16 %v499
  %v764 = vunpack.c.h.b16 %v499
  %v765 = vunpack.c.l.b16 %v500
  %v766 = vunpack.c.h.b16 %v500
  %v767 = vunpack.c.l.b16 %v501
  %v768 = vunpack.c.h.b16 %v501
  %v769 = vunpack.c.l.b16 %v502
  %v770 = vunpack.c.h.b16 %v502
  %v771 = vunpack.c.l.b16 %v503
  %v772 = vunpack.c.h.b16 %v503
  %v773 = vunpack.c.l.b16 %v504
  %v774 = vunpack.c.h.b16 %v504
  %v775 = vunpack.c.l.b16 %v505
  %v776 = vunpack.c.h.b16 %v505
  %v777 = vunpack.c.l.b16 %v506
  %v778 = vunpack.c.h.b16 %v506
  %v779 = vunpack.c.l.b16 %v507
  %v780 = vunpack.c.h.b16 %v507
  %v781 = vunpack.c.l.b16 %v508
  %v782 = vunpack.c.h.b16 %v508
  %v783 = vunpack.c.l.b16 %v509
  %v784 = vunpack.c.h.b16 %v509
  %v785 = vunpack.c.l.b16 %v510
  %v786 = vunpack.c.h.b16 %v510
  %v787 = vunpack.c.l.b16 %v511
  %v788 = vunpack.c.h.b16 %v511
  %v789 = vunpack.c.l.b16 %v512
  %v790 = vunpack.c.h.b16 %v512
  %v791 = vunpack.c.l.b16 %v513
  %v792 = vunpack.c.h.b16 %v513
  %v793 = vunpack.c.l.b16 %v514
  %v794 = vunpack.c.h.b16 %v514
  %v795 = vunpack.c.l.b16 %v515
  %v796 = vunpack.c.h.b16 %v515
  %v797 = vunpack.c.l.b16 %v516
  %v798 = vunpack.c.h.b16 %v516
  %v799 = vunpack.c.l.b16 %v517
  %v800 = vunpack.c.h.b16 %v517
  %v801 = vunpack.c.l.b16 %v518
  %v802 = vunpack.c.h.b16 %v518
  %v803 = vunpack.c.l.b16 %v519
  %v804 = vunpack.c.h.b16 %v519
  %v805 = vunpack.c.l.b16 %v520
  %v806 = vunpack.c.h.b16 %v520
  %v807 = vunpack.c.l.b16 %v521
  %v808 = vunpack.c.h.b16 %v521
  %v809 = vunpack.c.l.b16 %v522
  %v810 = vunpack.c.h.b16 %v522
  %v811 = vunpack.c.l.b16 %v523
  %v812 = vunpack.c.h.b16 %v523
  %v813 = vunpack.c.l.b16 %v524
  %v814 = vunpack.c.h.b16 %v524
  %v815 = vunpack.c.l.b16 %v525
  %v816 = vunpack.c.h.b16 %v525
  %v817 = vunpack.c.l.b16 %v526
  %v818 = vunpack.c.h.b16 %v526
  %v819 = vunpack.c.l.b16 %v527
  %v820 = vunpack.c.h.b16 %v527
  %v821 = vunpack.c.l.b16 %v528
  %v822 = vunpack.c.h.b16 %v528
  %v823 = vunpack.c.l.b16 %v529
  %v824 = vunpack.c.h.b16 %v529
  %v825 = vunpack.c.l.b16 %v530
  %v826 = vunpack.c.h.b16 %v530
  %v827 = vunpack.c.l.b16 %v531
  %v828 = vunpack.c.h.b16 %v531
  %v829 = vunpack.c.l.b16 %v532
  %v830 = vunpack.c.h.b16 %v532
  %v831 = vunpack.c.l.b16 %v533
  %v832 = vunpack.c.h.b16 %v533
  %v833 = vunpack.c.l.b16 %v534
  %v834 = vunpack.c.h.b16 %v534
  %v835 = vunpack.c.l.b16 %v535
  %v836 = vunpack.c.h.b16 %v535
  %v837 = vunpack.c.l.b16 %v536
  %v838 = vunpack.c.h.b16 %v536
  %v839 = vunpack.c.l.b16 %v537
  %v840 = vunpack.c.h.b16 %v537
  %v841 = vunpack.c.l.b16 %v538
  %v842 = vunpack.c.h.b16 %v538
  %v843 = vunpack.c.l.b16 %v539
  %v844 = vunpack.c.h.b16 %v539
  %v845 = vunpack.c.l.b16 %v540
  %v846 = vunpack.c.h.b16 %v540
  %v847 = vunpack.c.l.b16 %v541
  %v848 = vunpack.c.h.b16 %v541
  %v849 = vunpack.c.l.b16 %v542
  %v850 = vunpack.c.h.b16 %v542
  %v851 = vunpack.c.l.b16 %v543
  %v852 = vunpack.c.h.b16 %v543
  %v853 = vunpack.c.l.b16 %v544
  %v854 = vunpack.c.h.b16 %v544
  %v855 = vunpack.c.l.b16 %v545
  %v856 = vunpack.c.h.b16 %v545
  %v857 = vunpack.c.l.b16 %v546
  %v858 = vunpack.c.h.b16 %v546
  %v859 = vunpack.c.l.b16 %v547
  %v860 = vunpack.c.h.b16 %v547
  %v861 = vunpack.c.l.b16 %v548
  %v862 = vunpack.c.h.b16 %v548
  %v863 = vunpack.c.l.b16 %v549
  %v864 = vunpack.c.h.b16 %v549
  %v865 = vunpack.c.l.b16 %v550
  %v866 = vunpack.c.h.b16 %v550
  %v867 = vunpack.c.l.b16 %v551
  %v868 = vunpack.c.h.b16 %v551
  %v869 = vunpack.c.l.b16 %v552
  %v870 = vunpack.c.h.b16 %v552
  %v871 = vunpack.c.l.b16 %v553
  %v872 = vunpack.c.h.b16 %v553
  %v873 = vunpack.c.l.b16 %v554
  %v874 = vunpack.c.h.b16 %v554
  %v875 = vunpack.c.l.b16 %v555
  %v876 = vunpack.c.h.b16 %v555
  %v877 = vunpack.c.l.b16 %v556
  %v878 = vunpack.c.h.b16 %v556
  %v879 = vunpack.c.l.b16 %v557
  %v880 = vunpack.c.h.b16 %v557
  %v881 = vunpack.c.l.b16 %v558
  %v882 = vunpack.c.h.b16 %v558
  %v883 = vunpack.c.l.b16 %v559
  %v884 = vunpack.c.h.b16 %v559
  %v885 = vunpack.c.l.b16 %v560
  %v886 = vunpack.c.h.b16 %v560
  %v887 = vunpack.c.l.b16 %v561
  %v888 = vunpack.c.h.b16 %v561
  %v889 = vunpack.c.l.b16 %v562
  %v890 = vunpack.c.h.b16 %v562
  %v891 = vunpack.c.l.b16 %v563
  %v892 = vunpack.c.h.b16 %v563
  %v893 = vunpack.c.l.b16 %v564
  %v894 = vunpack.c.h.b16 %v564
  %v895 = vunpack.c.l.b16 %v565
  %v896 = vunpack.c.h.b16 %v565
  %v897 = vunpack.c.l.b16 %v566
  %v898 = vunpack.c.h.b16 %v566
  %v899 = vunpack.c.l.b16 %v567
  %v900 = vunpack.c.h.b16 %v567
  %v901 = vunpack.c.l.b16 %v568
  %v902 = vunpack.c.h.b16 %v568
  %v903 = vunpack.c.l.b16 %v569
  %v904 = vunpack.c.h.b16 %v569
  %v905 = vunpack.c.l.b16 %v570
  %v906 = vunpack.c.h.b16 %v570
  %v907 = vunpack.c.l.b16 %v571
  %v908 = vunpack.c.h.b16 %v571
  %v909 = vunpack.c.l.b16 %v572
  %v910 = vunpack.c.h.b16 %v572
  %v911 = vunpack.c.l.b16 %v573
  %v912 = vunpack.c.h.b16 %v573
  %v913 = vunpack.c.l.b16 %v574
  %v914 = vunpack.c.h.b16 %v574
  %v915 = vunpack.c.l.b16 %v575
  %v916 = vunpack.c.h.b16 %v575
  %v917 = vunpack.c.l.b16 %v576
  %v918 = vunpack.c.h.b16 %v576
  %v919 = vunpack.c.l.b16 %v577
  %v920 = vunpack.c.h.b16 %v577
  %v921 = vunpack.c.l.b16 %v578
  %v922 = vunpack.c.h.b16 %v578
  %v923 = vunpack.c.l.b16 %v579
  %v924 = vunpack.c.h.b16 %v579
  %v925 = vunpack.c.l.b16 %v580
  %v926 = vunpack.c.h.b16 %v580
  %v927 = vunpack.c.l.b16 %v581
  %v928 = vunpack.c.h.b16 %v581
  %v929 = vunpack.c.l.b16 %v582
  %v930 = vunpack.c.h.b16 %v582
  %v931 = vunpack.c.l.b16 %v583
  %v932 = vunpack.c.h.b16 %v583
  %v933 = vunpack.c.l.b16 %v584
  %v934 = vunpack.c.h.b16 %v584
  %v935 = vunpack.c.l.b16 %v585
  %v936 = vunpack.c.h.b16 %v585
  %v937 = vunpack.c.l.b16 %v586
  %v938 = vunpack.c.h.b16 %v586
  %v939 = vunpack.c.l.b16 %v587
  %v940 = vunpack.c.h.b16 %v587
  %v941 = vunpack.c.l.b16 %v588
  %v942 = vunpack.c.h.b16 %v588
  %v943 = vunpack.c.l.b16 %v589
  %v944 = vunpack.c.h.b16 %v589
  %v945 = vunpack.c.l.b16 %v590
  %v946 = vunpack.c.h.b16 %v590
  %v947 = vunpack.c.l.b16 %v591
  %v948 = vunpack.c.h.b16 %v591
  %v949 = vunpack.c.l.b16 %v592
  %v950 = vunpack.c.h.b16 %v592
  %v951 = vunpack.c.l.b16 %v593
  %v952 = vunpack.c.h.b16 %v593
  %v953 = vunpack.c.l.b16 %v594
  %v954 = vunpack.c.h.b16 %v594
  %v955 = vunpack.c.l.b16 %v595
  %v956 = vunpack.c.h.b16 %v595
  %v957 = vunpack.c.l.b16 %v596
  %v958 = vunpack.c.h.b16 %v596
  %v959 = vunpack.c.l.b16 %v597
  %v960 = vunpack.c.h.b16 %v597
  %v961 = vunpack.c.l.b16 %v598
  %v962 = vunpack.c.h.b16 %v598
  %v963 = vunpack.c.l.b16 %v599
  %v964 = vunpack.c.h.b16 %v599
  %v965 = vunpack.c.l.b16 %v600
  %v966 = vunpack.c.h.b16 %v600
  %v967 = vunpack.c.l.b16 %v601
  %v968 = vunpack.c.h.b16 %v601
  %v969 = vunpack.c.l.b16 %v602
  %v970 = vunpack.c.h.b16 %v602
  %v971 = vunpack.c.l.b16 %v603
  %v972 = vunpack.c.h.b16 %v603
  %v973 = vunpack.c.l.b16 %v604
  %v974 = vunpack.c.h.b16 %v604
  %v975 = vunpack.c.l.b16 %v605
  %v976 = vunpack.c.h.b16 %v605
  %v977 = vunpack.c.l.b16 %v606
  %v978 = vunpack.c.h.b16 %v606
  %v979 = vunpack.c.l.b16 %v607
  %v980 = vunpack.c.h.b16 %v607
  %v981 = vunpack.c.l.b16 %v608
  %v982 = vunpack.c.h.b16 %v608
  %v983 = vunpack.c.l.b16 %v609
  %v984 = vunpack.c.h.b16 %v609
  %v985 = vunpack.c.l.b16 %v610
  %v986 = vunpack.c.h.b16 %v610
  %v987 = vunpack.c.l.b16 %v611
  %v988 = vunpack.c.h.b16 %v611
  %v989 = vunpack.c.l.b16 %v612
  %v990 = vunpack.c.h.b16 %v612
  %v991 = vunpack.c.l.b16 %v613
  %v992 = vunpack.c.h.b16 %v613
  %v993 = vunpack.c.l.b16 %v614
  %v994 = vunpack.c.h.b16 %v614
  %v995 = vunpack.c.l.b16 %v615
  %v996 = vunpack.c.h.b16 %v615
  %v997 = vunpack.c.l.b16 %v616
  %v998 = vunpack.c.h.b16 %v616
  %v999 = vunpack.c.l.b16 %v617
  %v1000 = vunpack.c.h.b16 %v617
  %v1001 = vunpack.c.l.b16 %v618
  %v1002 = vunpack.c.h.b16 %v618
  %v1003 = vpack.c.b16 %v755, %v747
  %v1004 = vpack.c.b16 %v756, %v748
  %v1005 = vpack.c.b16 %v757, %v749
  %v1006 = vpack.c.b16 %v758, %v750
  %v1007 = vpack.c.b16 %v759, %v751
  %v1008 = vpack.c.b16 %v760, %v752
  %v1009 = vpack.c.b16 %v761, %v753
  %v1010 = vpack.c.b16 %v762, %v754
  %v1011 = vpack.c.b16 %v771, %v763
  %v1012 = vpack.c.b16 %v772, %v764
  %v1013 = vpack.c.b16 %v773, %v765
  %v1014 = vpack.c.b16 %v774, %v766
  %v1015 = vpack.c.b16 %v775, %v767
  %v1016 = vpack.c.b16 %v776, %v768
  %v1017 = vpack.c.b16 %v777, %v769
  %v1018 = vpack.c.b16 %v778, %v770
  %v1019 = vpack.c.b16 %v787, %v779
  %v1020 = vpack.c.b16 %v788, %v780
  %v1021 = vpack.c.b16 %v789, %v781
  %v1022 = vpack.c.b16 %v790, %v782
  %v1023 = vpack.c.b16 %v791, %v783
  %v1024 = vpack.c.b16 %v792, %v784
  %v1025 = vpack.c.b16 %v793, %v785
  %v1026 = vpack.c.b16 %v794, %v786
  %v1027 = vpack.c.b16 %v803, %v795
  %v1028 = vpack.c.b16 %v804, %v796
  %v1029 = vpack.c.b16 %v805, %v797
  %v1030 = vpack.c.b16 %v806, %v798
  %v1031 = vpack.c.b16 %v807, %v799
  %v1032 = vpack.c.b16 %v808, %v800
  %v1033 = vpack.c.b16 %v809, %v801
  %v1034 = vpack.c.b16 %v810, %v802
  %v1035 = vpack.c.b16 %v819, %v811
  %v1036 = vpack.c.b16 %v820, %v812
  %v1037 = vpack.c.b16 %v821, %v813
  %v1038 = vpack.c.b16 %v822, %v814
  %v1039 = vpack.c.b16 %v823, %v815
  %v1040 = vpack.c.b16 %v824, %v816
  %v1041 = vpack.c.b16 %v825, %v817
  %v1042 = vpack.c.b16 %v826, %v818
  %v1043 = vpack.c.b16 %v835, %v827
  %v1044 = vpack.c.b16 %v836, %v828
  %v1045 = vpack.c.b16 %v837, %v829
  %v1046 = vpack.c.b16 %v838, %v830
  %v1047 = vpack.c.b16 %v839, %v831
  %v1048 = vpack.c.b16 %v840, %v832
  %v1049 = vpack.c.b16 %v841, %v833
  %v1050 = vpack.c.b16 %v842, %v834
  %v1051 = vpack.c.b16 %v851, %v843
  %v1052 = vpack.c.b16 %v852, %v844
  %v1053 = vpack.c.b16 %v853, %v845
  %v1054 = vpack.c.b16 %v854, %v846
  %v1055 = vpack.c.b16 %v855, %v847
  %v1056 = vpack.c.b16 %v856, %v848
  %v1057 = vpack.c.b16 %v857, %v849
  %v1058 = vpack.c.b16 %v858, %v850
  %v1059 = vpack.c.b16 %v867, %v859
  %v1060 = vpack.c.b16 %v868, %v860
  %v1061 = vpack.c.b16 %v869, %v861
  %v1062 = vpack.c.b16 %v870, %v862
  %v1063 = vpack.c.b16 %v871, %v863
  %v1064 = vpack.c.b16 %v872, %v864
  %v1065 = vpack.c.b16 %v873, %v865
  %v1066 = vpack.c.b16 %v874, %v866
  %v1067 = vpack.c.b16 %v883, %v875
  %v1068 = vpack.c.b16 %v884, %v876
  %v1069 = vpack.c.b16 %v885, %v877
  %v1070 = vpack.c.b16 %v886, %v878
  %v1071 = vpack.c.b16 %v887, %v879
  %v1072 = vpack.c.b16 %v888, %v880
  %v1073 = vpack.c.b16 %v889, %v881
  %v1074 = vpack.c.b16 %v890, %v882
  %v1075 = vpack.c.b16 %v899, %v891
  %v1076 = vpack.c.b16 %v900, %v892
  %v1077 = vpack.c.b16 %v901, %v893
  %v1078 = vpack.c.b16 %v902, %v894
  %v1079 = vpack.c.b16 %v903, %v895
  %v1080 = vpack.c.b16 %v904, %v896
  %v1081 = vpack.c.b16 %v905, %v897
  %v1082 = vpack.c.b16 %v906, %v898
  %v1083 = vpack.c.b16 %v915, %v907
  %v1084 = vpack.c.b16 %v916, %v908
  %v1085 = vpack.c.b16 %v917, %v909
  %v1086 = vpack.c.b16 %v918, %v910
  %v1087 = vpack.c.b16 %v919, %v911
  %v1088 = vpack.c.b16 %v920, %v912
  %v1089 = vpack.c.b16 %v921, %v913
  %v1090 = vpack.c.b16 %v922, %v914
  %v1091 = vpack.c.b16 %v931, %v923
  %v1092 = vpack.c.b16 %v932, %v924
  %v1093 = vpack.c.b16 %v933, %v925
  %v1094 = vpack.c.b16 %v934, %v926
  %v1095 = vpack.c.b16 %v935, %v927
  %v1096 = vpack.c.b16 %v936, %v928
  %v1097 = vpack.c.b16 %v937, %v929
  %v1098 = vpack.c.b16 %v938, %v930
  %v1099 = vpack.c.b16 %v947, %v939
  %v1100 = vpack.c.b16 %v948, %v940
  %v1101 = vpack.c.b16 %v949, %v941
  %v1102 = vpack.c.b16 %v950, %v942
  %v1103 = vpack.c.b16 %v951, %v943
  %v1104 = vpack.c.b16 %v952, %v944
  %v1105 = vpack.c.b16 %v953, %v945
  %v1106 = vpack.c.b16 %v954, %v946
  %v1107 = vpack.c.b16 %v963, %v955
  %v1108 = vpack.c.b16 %v964, %v956
  %v1109 = vpack.c.b16 %v965, %v957
  %v1110 = vpack.c.b16 %v966, %v958
  %v1111 = vpack.c.b16 %v967, %v959
  %v1112 = vpack.c.b16 %v968, %v960
  %v1113 = vpack.c.b16 %v969, %v961
  %v1114 = vpack.c.b16 %v970, %v962
  %v1115 = vpack.c.b16 %v979, %v971
  %v1116 = vpack.c.b16 %v980, %v972
  %v1117 = vpack.c.b16 %v981, %v973
  %v1118 = vpack.c.b16 %v982, %v974
  %v1119 = vpack.c.b16 %v983, %v975
  %v1120 = vpack.c.b16 %v984, %v976
  %v1121 = vpack.c.b16 %v985, %v977
  %v1122 = vpack.c.b16 %v986, %v978
  %v1123 = vpack.c.b16 %v995, %v987
  %v1124 = vpack.c.b16 %v996, %v988
  %v1125 = vpack.c.b16 %v997, %v989
  %v1126 = vpack.c.b16 %v998, %v990
  %v1127 = vpack.c.b16 %v999, %v991
  %v1128 = vpack.c.b16 %v1000, %v992
  %v1129 = vpack.c.b16 %v1001, %v993
  %v1130 = vpack.c.b16 %v1002, %v994
  %1259 = vmatpush.bf16.msra.mxu0 %v1059
  %1260 = vmatpush.bf16.msra.mxu0 %v1051
  %1261 = vmatpush.bf16.msra.mxu0 %v1043
  %1262 = vmatpush.bf16.msra.mxu0 %v1035
  %1263 = vmatpush.bf16.msra.mxu0 %v1027
  %1264 = vmatpush.bf16.msra.mxu0 %v1019
  %1265 = vmatpush.bf16.msra.mxu0 %v1011
  %1266 = vmatpush.bf16.msra.mxu0 %v1003
  %1267 = vmatmul.bf16.gmra.mxu0 0
  %v1268 = vpop.f32.mrf.mxu0
  %v1269 = vadd.f32 0.0, %v1268
  %v1270 = vpop.f32.mrf.mxu0
  %1271 = vdwg.mxu0
  %1272 = vmatpush.bf16.msra.mxu0 %v1123
  %1273 = vmatpush.bf16.msra.mxu0 %v1115
  %1274 = vmatpush.bf16.msra.mxu0 %v1107
  %1275 = vmatpush.bf16.msra.mxu0 %v1099
  %1276 = vmatpush.bf16.msra.mxu0 %v1091
  %1277 = vmatpush.bf16.msra.mxu0 %v1083
  %1278 = vmatpush.bf16.msra.mxu0 %v1075
  %1279 = vmatpush.bf16.msra.mxu0 %v1067
  %1280 = vmatmul.bf16.gmra.mxu0 0
  %v1281 = vpop.f32.mrf.mxu0
  %v1282 = vadd.f32 %v1269, %v1281
  %v1283 = vpop.f32.mrf.mxu0
  %1284 = vdwg.mxu0
  %1285 = vmatpush.bf16.msra.mxu0 %v1060
  %1286 = vmatpush.bf16.msra.mxu0 %v1052
  %1287 = vmatpush.bf16.msra.mxu0 %v1044
  %1288 = vmatpush.bf16.msra.mxu0 %v1036
  %1289 = vmatpush.bf16.msra.mxu0 %v1028
  %1290 = vmatpush.bf16.msra.mxu0 %v1020
  %1291 = vmatpush.bf16.msra.mxu0 %v1012
  %1292 = vmatpush.bf16.msra.mxu0 %v1004
  %1293 = vmatmul.bf16.gmra.mxu0 0
  %v1294 = vpop.f32.mrf.mxu0
  %v1295 = vadd.f32 0.0, %v1294
  %v1296 = vpop.f32.mrf.mxu0
  %1297 = vdwg.mxu0
  %1298 = vmatpush.bf16.msra.mxu0 %v1124
  %1299 = vmatpush.bf16.msra.mxu0 %v1116
  %1300 = vmatpush.bf16.msra.mxu0 %v1108
  %1301 = vmatpush.bf16.msra.mxu0 %v1100
  %1302 = vmatpush.bf16.msra.mxu0 %v1092
  %1303 = vmatpush.bf16.msra.mxu0 %v1084
  %1304 = vmatpush.bf16.msra.mxu0 %v1076
  %1305 = vmatpush.bf16.msra.mxu0 %v1068
  %1306 = vmatmul.bf16.gmra.mxu0 0
  %v1307 = vpop.f32.mrf.mxu0
  %v1308 = vadd.f32 %v1295, %v1307
  %v1309 = vpop.f32.mrf.mxu0
  %1310 = vdwg.mxu0
  %1311 = vmatpush.bf16.msra.mxu0 %v1061
  %1312 = vmatpush.bf16.msra.mxu0 %v1053
  %1313 = vmatpush.bf16.msra.mxu0 %v1045
  %1314 = vmatpush.bf16.msra.mxu0 %v1037
  %1315 = vmatpush.bf16.msra.mxu0 %v1029
  %1316 = vmatpush.bf16.msra.mxu0 %v1021
  %1317 = vmatpush.bf16.msra.mxu0 %v1013
  %1318 = vmatpush.bf16.msra.mxu0 %v1005
  %1319 = vmatmul.bf16.gmra.mxu0 0
  %v1320 = vpop.f32.mrf.mxu0
  %v1321 = vadd.f32 0.0, %v1320
  %v1322 = vpop.f32.mrf.mxu0
  %1323 = vdwg.mxu0
  %1324 = vmatpush.bf16.msra.mxu0 %v1125
  %1325 = vmatpush.bf16.msra.mxu0 %v1117
  %1326 = vmatpush.bf16.msra.mxu0 %v1109
  %1327 = vmatpush.bf16.msra.mxu0 %v1101
  %1328 = vmatpush.bf16.msra.mxu0 %v1093
  %1329 = vmatpush.bf16.msra.mxu0 %v1085
  %1330 = vmatpush.bf16.msra.mxu0 %v1077
  %1331 = vmatpush.bf16.msra.mxu0 %v1069
  %1332 = vmatmul.bf16.gmra.mxu0 0
  %v1333 = vpop.f32.mrf.mxu0
  %v1334 = vadd.f32 %v1321, %v1333
  %v1335 = vpop.f32.mrf.mxu0
  %1336 = vdwg.mxu0
  %1337 = vmatpush.bf16.msra.mxu0 %v1062
  %1338 = vmatpush.bf16.msra.mxu0 %v1054
  %1339 = vmatpush.bf16.msra.mxu0 %v1046
  %1340 = vmatpush.bf16.msra.mxu0 %v1038
  %1341 = vmatpush.bf16.msra.mxu0 %v1030
  %1342 = vmatpush.bf16.msra.mxu0 %v1022
  %1343 = vmatpush.bf16.msra.mxu0 %v1014
  %1344 = vmatpush.bf16.msra.mxu0 %v1006
  %1345 = vmatmul.bf16.gmra.mxu0 0
  %v1346 = vpop.f32.mrf.mxu0
  %v1347 = vadd.f32 0.0, %v1346
  %v1348 = vpop.f32.mrf.mxu0
  %1349 = vdwg.mxu0
  %1350 = vmatpush.bf16.msra.mxu0 %v1126
  %1351 = vmatpush.bf16.msra.mxu0 %v1118
  %1352 = vmatpush.bf16.msra.mxu0 %v1110
  %1353 = vmatpush.bf16.msra.mxu0 %v1102
  %1354 = vmatpush.bf16.msra.mxu0 %v1094
  %1355 = vmatpush.bf16.msra.mxu0 %v1086
  %1356 = vmatpush.bf16.msra.mxu0 %v1078
  %1357 = vmatpush.bf16.msra.mxu0 %v1070
  %1358 = vmatmul.bf16.gmra.mxu0 0
  %v1359 = vpop.f32.mrf.mxu0
  %v1360 = vadd.f32 %v1347, %v1359
  %v1361 = vpop.f32.mrf.mxu0
  %1362 = vdwg.mxu0
  %1363 = vmatpush.bf16.msra.mxu0 %v1063
  %1364 = vmatpush.bf16.msra.mxu0 %v1055
  %1365 = vmatpush.bf16.msra.mxu0 %v1047
  %1366 = vmatpush.bf16.msra.mxu0 %v1039
  %1367 = vmatpush.bf16.msra.mxu0 %v1031
  %1368 = vmatpush.bf16.msra.mxu0 %v1023
  %1369 = vmatpush.bf16.msra.mxu0 %v1015
  %1370 = vmatpush.bf16.msra.mxu0 %v1007
  %1371 = vmatmul.bf16.gmra.mxu0 0
  %v1372 = vpop.f32.mrf.mxu0
  %v1373 = vadd.f32 0.0, %v1372
  %v1374 = vpop.f32.mrf.mxu0
  %1375 = vdwg.mxu0
  %1376 = vmatpush.bf16.msra.mxu0 %v1127
  %1377 = vmatpush.bf16.msra.mxu0 %v1119
  %1378 = vmatpush.bf16.msra.mxu0 %v1111
  %1379 = vmatpush.bf16.msra.mxu0 %v1103
  %1380 = vmatpush.bf16.msra.mxu0 %v1095
  %1381 = vmatpush.bf16.msra.mxu0 %v1087
  %1382 = vmatpush.bf16.msra.mxu0 %v1079
  %1383 = vmatpush.bf16.msra.mxu0 %v1071
  %1384 = vmatmul.bf16.gmra.mxu0 0
  %v1385 = vpop.f32.mrf.mxu0
  %v1386 = vadd.f32 %v1373, %v1385
  %v1387 = vpop.f32.mrf.mxu0
  %1388 = vdwg.mxu0
  %1389 = vmatpush.bf16.msra.mxu0 %v1064
  %1390 = vmatpush.bf16.msra.mxu0 %v1056
  %1391 = vmatpush.bf16.msra.mxu0 %v1048
  %1392 = vmatpush.bf16.msra.mxu0 %v1040
  %1393 = vmatpush.bf16.msra.mxu0 %v1032
  %1394 = vmatpush.bf16.msra.mxu0 %v1024
  %1395 = vmatpush.bf16.msra.mxu0 %v1016
  %1396 = vmatpush.bf16.msra.mxu0 %v1008
  %1397 = vmatmul.bf16.gmra.mxu0 0
  %v1398 = vpop.f32.mrf.mxu0
  %v1399 = vadd.f32 0.0, %v1398
  %v1400 = vpop.f32.mrf.mxu0
  %1401 = vdwg.mxu0
  %1402 = vmatpush.bf16.msra.mxu0 %v1128
  %1403 = vmatpush.bf16.msra.mxu0 %v1120
  %1404 = vmatpush.bf16.msra.mxu0 %v1112
  %1405 = vmatpush.bf16.msra.mxu0 %v1104
  %1406 = vmatpush.bf16.msra.mxu0 %v1096
  %1407 = vmatpush.bf16.msra.mxu0 %v1088
  %1408 = vmatpush.bf16.msra.mxu0 %v1080
  %1409 = vmatpush.bf16.msra.mxu0 %v1072
  %1410 = vmatmul.bf16.gmra.mxu0 0
  %v1411 = vpop.f32.mrf.mxu0
  %v1412 = vadd.f32 %v1399, %v1411
  %v1413 = vpop.f32.mrf.mxu0
  %1414 = vdwg.mxu0
  %1415 = vmatpush.bf16.msra.mxu0 %v1065
  %1416 = vmatpush.bf16.msra.mxu0 %v1057
  %1417 = vmatpush.bf16.msra.mxu0 %v1049
  %1418 = vmatpush.bf16.msra.mxu0 %v1041
  %1419 = vmatpush.bf16.msra.mxu0 %v1033
  %1420 = vmatpush.bf16.msra.mxu0 %v1025
  %1421 = vmatpush.bf16.msra.mxu0 %v1017
  %1422 = vmatpush.bf16.msra.mxu0 %v1009
  %1423 = vmatmul.bf16.gmra.mxu0 0
  %v1424 = vpop.f32.mrf.mxu0
  %v1425 = vadd.f32 0.0, %v1424
  %v1426 = vpop.f32.mrf.mxu0
  %1427 = vdwg.mxu0
  %1428 = vmatpush.bf16.msra.mxu0 %v1129
  %1429 = vmatpush.bf16.msra.mxu0 %v1121
  %1430 = vmatpush.bf16.msra.mxu0 %v1113
  %1431 = vmatpush.bf16.msra.mxu0 %v1105
  %1432 = vmatpush.bf16.msra.mxu0 %v1097
  %1433 = vmatpush.bf16.msra.mxu0 %v1089
  %1434 = vmatpush.bf16.msra.mxu0 %v1081
  %1435 = vmatpush.bf16.msra.mxu0 %v1073
  %1436 = vmatmul.bf16.gmra.mxu0 0
  %v1437 = vpop.f32.mrf.mxu0
  %v1438 = vadd.f32 %v1425, %v1437
  %v1439 = vpop.f32.mrf.mxu0
  %1440 = vdwg.mxu0
  %1441 = vmatpush.bf16.msra.mxu0 %v1066
  %1442 = vmatpush.bf16.msra.mxu0 %v1058
  %1443 = vmatpush.bf16.msra.mxu0 %v1050
  %1444 = vmatpush.bf16.msra.mxu0 %v1042
  %1445 = vmatpush.bf16.msra.mxu0 %v1034
  %1446 = vmatpush.bf16.msra.mxu0 %v1026
  %1447 = vmatpush.bf16.msra.mxu0 %v1018
  %1448 = vmatpush.bf16.msra.mxu0 %v1010
  %1449 = vmatmul.bf16.gmra.mxu0 0
  %v1450 = vpop.f32.mrf.mxu0
  %v1451 = vadd.f32 0.0, %v1450
  %v1452 = vpop.f32.mrf.mxu0
  %1453 = vdwg.mxu0
  %1454 = vmatpush.bf16.msra.mxu0 %v1130
  %1455 = vmatpush.bf16.msra.mxu0 %v1122
  %1456 = vmatpush.bf16.msra.mxu0 %v1114
  %1457 = vmatpush.bf16.msra.mxu0 %v1106
  %1458 = vmatpush.bf16.msra.mxu0 %v1098
  %1459 = vmatpush.bf16.msra.mxu0 %v1090
  %1460 = vmatpush.bf16.msra.mxu0 %v1082
  %1461 = vmatpush.bf16.msra.mxu0 %v1074
  %1462 = vmatmul.bf16.gmra.mxu0 0
  %v1463 = vpop.f32.mrf.mxu0
  %v1464 = vadd.f32 %v1451, %v1463
  %v1465 = vpop.f32.mrf.mxu0
  %1466 = vdwg.mxu0
  %s1467 = smul.u32 0, 8
  %s1468 = smul.addr %s1467, 8
  %s1469 = scalar_lea.vmem [#allocation2], %s1468
  %v1470 = vld [vmem:[%s1469] sm:$0xff]
  %v1471 = vld [vmem:[%s1469 + $0x8] sm:$0xff]
  %v1472 = vld [vmem:[%s1469 + $0x10] sm:$0xff]
  %v1473 = vld [vmem:[%s1469 + $0x18] sm:$0xff]
  %v1474 = vld [vmem:[%s1469 + $0x20] sm:$0xff]
  %v1475 = vld [vmem:[%s1469 + $0x28] sm:$0xff]
  %v1476 = vld [vmem:[%s1469 + $0x30] sm:$0xff]
  %v1477 = vld [vmem:[%s1469 + $0x38] sm:$0xff]
  %v1478 = vadd.f32 %v1470, %v1282
  %v1479 = vadd.f32 %v1471, %v1308
  %v1480 = vadd.f32 %v1472, %v1334
  %v1481 = vadd.f32 %v1473, %v1360
  %v1482 = vadd.f32 %v1474, %v1386
  %v1483 = vadd.f32 %v1475, %v1412
  %v1484 = vadd.f32 %v1476, %v1438
  %v1485 = vadd.f32 %v1477, %v1464
  %v1486 = vmul.f32 %v1478, 0.5
  %v1487 = vmul.f32 %v1479, 0.5
  %v1488 = vtanh.pop %v1486
  %v1489 = vtanh.pop %v1487
  %v1490 = vadd.f32 %v1488, 1.0
  %v1491 = vadd.f32 %v1489, 1.0
  %v1492 = vmul.f32 %v1490, 0.5
  %v1493 = vmul.f32 %v1491, 0.5
  %v1494 = vmul.f32 %v1480, 0.5
  %v1495 = vmul.f32 %v1481, 0.5
  %v1496 = vtanh.pop %v1494
  %v1497 = vtanh.pop %v1495
  %v1498 = vadd.f32 %v1496, 1.0
  %v1499 = vadd.f32 %v1497, 1.0
  %v1500 = vmul.f32 %v1498, 0.5
  %v1501 = vmul.f32 %v1499, 0.5
  %v1502 = vtanh.pop %v1482
  %v1503 = vtanh.pop %v1483
  %v1504 = vmul.f32 %v1484, 0.5
  %v1505 = vmul.f32 %v1485, 0.5
  %v1506 = vtanh.pop %v1504
  %v1507 = vtanh.pop %v1505
  %v1508 = vadd.f32 %v1506, 1.0
  %v1509 = vadd.f32 %v1507, 1.0
  %v1510 = vmul.f32 %v1508, 0.5
  %v1511 = vmul.f32 %v1509, 0.5
  %v1512 = vmul.f32 %v1500, 0.0
  %v1513 = vmul.f32 %v1501, 0.0
  %v1514 = vmul.f32 %v1492, %v1502
  %v1515 = vmul.f32 %v1493, %v1503
  %v1516 = vadd.f32 %v1512, %v1514
  %v1517 = vadd.f32 %v1513, %v1515
  %v1518 = vtanh.pop %v1516
  %v1519 = vtanh.pop %v1517
  %v1520 = vmul.f32 %v1510, %v1518
  %v1521 = vmul.f32 %v1511, %v1519
  %v1522 = vpack.c.bf16 %v1520, %v1520
  %v1523 = vpack.c.bf16 %v1521, %v1521
  %1524 = vmatpush.bf16.msra.mxu0 %v1059
  %1525 = vmatpush.bf16.msra.mxu0 %v1051
  %1526 = vmatpush.bf16.msra.mxu0 %v1043
  %1527 = vmatpush.bf16.msra.mxu0 %v1035
  %1528 = vmatpush.bf16.msra.mxu0 %v1027
  %1529 = vmatpush.bf16.msra.mxu0 %v1019
  %1530 = vmatpush.bf16.msra.mxu0 %v1011
  %1531 = vmatpush.bf16.msra.mxu0 %v1003
  %1532 = vmatmul.bf16.gmra.mxu0 %v1522
  %v1533 = vpop.f32.mrf.mxu0
  %v1534 = vadd.f32 0.0, %v1533
  %v1535 = vpop.f32.mrf.mxu0
  %1536 = vdwg.mxu0
  %1537 = vmatpush.bf16.msra.mxu0 %v1123
  %1538 = vmatpush.bf16.msra.mxu0 %v1115
  %1539 = vmatpush.bf16.msra.mxu0 %v1107
  %1540 = vmatpush.bf16.msra.mxu0 %v1099
  %1541 = vmatpush.bf16.msra.mxu0 %v1091
  %1542 = vmatpush.bf16.msra.mxu0 %v1083
  %1543 = vmatpush.bf16.msra.mxu0 %v1075
  %1544 = vmatpush.bf16.msra.mxu0 %v1067
  %1545 = vmatmul.bf16.gmra.mxu0 %v1523
  %v1546 = vpop.f32.mrf.mxu0
  %v1547 = vadd.f32 %v1534, %v1546
  %v1548 = vpop.f32.mrf.mxu0
  %1549 = vdwg.mxu0
  %1550 = vmatpush.bf16.msra.mxu0 %v1060
  %1551 = vmatpush.bf16.msra.mxu0 %v1052
  %1552 = vmatpush.bf16.msra.mxu0 %v1044
  %1553 = vmatpush.bf16.msra.mxu0 %v1036
  %1554 = vmatpush.bf16.msra.mxu0 %v1028
  %1555 = vmatpush.bf16.msra.mxu0 %v1020
  %1556 = vmatpush.bf16.msra.mxu0 %v1012
  %1557 = vmatpush.bf16.msra.mxu0 %v1004
  %1558 = vmatmul.bf16.gmra.mxu0 %v1522
  %v1559 = vpop.f32.mrf.mxu0
  %v1560 = vadd.f32 0.0, %v1559
  %v1561 = vpop.f32.mrf.mxu0
  %1562 = vdwg.mxu0
  %1563 = vmatpush.bf16.msra.mxu0 %v1124
  %1564 = vmatpush.bf16.msra.mxu0 %v1116
  %1565 = vmatpush.bf16.msra.mxu0 %v1108
  %1566 = vmatpush.bf16.msra.mxu0 %v1100
  %1567 = vmatpush.bf16.msra.mxu0 %v1092
  %1568 = vmatpush.bf16.msra.mxu0 %v1084
  %1569 = vmatpush.bf16.msra.mxu0 %v1076
  %1570 = vmatpush.bf16.msra.mxu0 %v1068
  %1571 = vmatmul.bf16.gmra.mxu0 %v1523
  %v1572 = vpop.f32.mrf.mxu0
  %v1573 = vadd.f32 %v1560, %v1572
  %v1574 = vpop.f32.mrf.mxu0
  %1575 = vdwg.mxu0
  %1576 = vmatpush.bf16.msra.mxu0 %v1061
  %1577 = vmatpush.bf16.msra.mxu0 %v1053
  %1578 = vmatpush.bf16.msra.mxu0 %v1045
  %1579 = vmatpush.bf16.msra.mxu0 %v1037
  %1580 = vmatpush.bf16.msra.mxu0 %v1029
  %1581 = vmatpush.bf16.msra.mxu0 %v1021
  %1582 = vmatpush.bf16.msra.mxu0 %v1013
  %1583 = vmatpush.bf16.msra.mxu0 %v1005
  %1584 = vmatmul.bf16.gmra.mxu0 %v1522
  %v1585 = vpop.f32.mrf.mxu0
  %v1586 = vadd.f32 0.0, %v1585
  %v1587 = vpop.f32.mrf.mxu0
  %1588 = vdwg.mxu0
  %1589 = vmatpush.bf16.msra.mxu0 %v1125
  %1590 = vmatpush.bf16.msra.mxu0 %v1117
  %1591 = vmatpush.bf16.msra.mxu0 %v1109
  %1592 = vmatpush.bf16.msra.mxu0 %v1101
  %1593 = vmatpush.bf16.msra.mxu0 %v1093
  %1594 = vmatpush.bf16.msra.mxu0 %v1085
  %1595 = vmatpush.bf16.msra.mxu0 %v1077
  %1596 = vmatpush.bf16.msra.mxu0 %v1069
  %1597 = vmatmul.bf16.gmra.mxu0 %v1523
  %v1598 = vpop.f32.mrf.mxu0
  %v1599 = vadd.f32 %v1586, %v1598
  %v1600 = vpop.f32.mrf.mxu0
  %1601 = vdwg.mxu0
  %1602 = vmatpush.bf16.msra.mxu0 %v1062
  %1603 = vmatpush.bf16.msra.mxu0 %v1054
  %1604 = vmatpush.bf16.msra.mxu0 %v1046
  %1605 = vmatpush.bf16.msra.mxu0 %v1038
  %1606 = vmatpush.bf16.msra.mxu0 %v1030
  %1607 = vmatpush.bf16.msra.mxu0 %v1022
  %1608 = vmatpush.bf16.msra.mxu0 %v1014
  %1609 = vmatpush.bf16.msra.mxu0 %v1006
  %1610 = vmatmul.bf16.gmra.mxu0 %v1522
  %v1611 = vpop.f32.mrf.mxu0
  %v1612 = vadd.f32 0.0, %v1611
  %v1613 = vpop.f32.mrf.mxu0
  %1614 = vdwg.mxu0
  %1615 = vmatpush.bf16.msra.mxu0 %v1126
  %1616 = vmatpush.bf16.msra.mxu0 %v1118
  %1617 = vmatpush.bf16.msra.mxu0 %v1110
  %1618 = vmatpush.bf16.msra.mxu0 %v1102
  %1619 = vmatpush.bf16.msra.mxu0 %v1094
  %1620 = vmatpush.bf16.msra.mxu0 %v1086
  %1621 = vmatpush.bf16.msra.mxu0 %v1078
  %1622 = vmatpush.bf16.msra.mxu0 %v1070
  %1623 = vmatmul.bf16.gmra.mxu0 %v1523
  %v1624 = vpop.f32.mrf.mxu0
  %v1625 = vadd.f32 %v1612, %v1624
  %v1626 = vpop.f32.mrf.mxu0
  %1627 = vdwg.mxu0
  %1628 = vmatpush.bf16.msra.mxu0 %v1063
  %1629 = vmatpush.bf16.msra.mxu0 %v1055
  %1630 = vmatpush.bf16.msra.mxu0 %v1047
  %1631 = vmatpush.bf16.msra.mxu0 %v1039
  %1632 = vmatpush.bf16.msra.mxu0 %v1031
  %1633 = vmatpush.bf16.msra.mxu0 %v1023
  %1634 = vmatpush.bf16.msra.mxu0 %v1015
  %1635 = vmatpush.bf16.msra.mxu0 %v1007
  %1636 = vmatmul.bf16.gmra.mxu0 %v1522
  %v1637 = vpop.f32.mrf.mxu0
  %v1638 = vadd.f32 0.0, %v1637
  %v1639 = vpop.f32.mrf.mxu0
  %1640 = vdwg.mxu0
  %1641 = vmatpush.bf16.msra.mxu0 %v1127
  %1642 = vmatpush.bf16.msra.mxu0 %v1119
  %1643 = vmatpush.bf16.msra.mxu0 %v1111
  %1644 = vmatpush.bf16.msra.mxu0 %v1103
  %1645 = vmatpush.bf16.msra.mxu0 %v1095
  %1646 = vmatpush.bf16.msra.mxu0 %v1087
  %1647 = vmatpush.bf16.msra.mxu0 %v1079
  %1648 = vmatpush.bf16.msra.mxu0 %v1071
  %1649 = vmatmul.bf16.gmra.mxu0 %v1523
  %v1650 = vpop.f32.mrf.mxu0
  %v1651 = vadd.f32 %v1638, %v1650
  %v1652 = vpop.f32.mrf.mxu0
  %1653 = vdwg.mxu0
  %1654 = vmatpush.bf16.msra.mxu0 %v1064
  %1655 = vmatpush.bf16.msra.mxu0 %v1056
  %1656 = vmatpush.bf16.msra.mxu0 %v1048
  %1657 = vmatpush.bf16.msra.mxu0 %v1040
  %1658 = vmatpush.bf16.msra.mxu0 %v1032
  %1659 = vmatpush.bf16.msra.mxu0 %v1024
  %1660 = vmatpush.bf16.msra.mxu0 %v1016
  %1661 = vmatpush.bf16.msra.mxu0 %v1008
  %1662 = vmatmul.bf16.gmra.mxu0 %v1522
  %v1663 = vpop.f32.mrf.mxu0
  %v1664 = vadd.f32 0.0, %v1663
  %v1665 = vpop.f32.mrf.mxu0
  %1666 = vdwg.mxu0
  %1667 = vmatpush.bf16.msra.mxu0 %v1128
  %1668 = vmatpush.bf16.msra.mxu0 %v1120
  %1669 = vmatpush.bf16.msra.mxu0 %v1112
  %1670 = vmatpush.bf16.msra.mxu0 %v1104
  %1671 = vmatpush.bf16.msra.mxu0 %v1096
  %1672 = vmatpush.bf16.msra.mxu0 %v1088
  %1673 = vmatpush.bf16.msra.mxu0 %v1080
  %1674 = vmatpush.bf16.msra.mxu0 %v1072
  %1675 = vmatmul.bf16.gmra.mxu0 %v1523
  %v1676 = vpop.f32.mrf.mxu0
  %v1677 = vadd.f32 %v1664, %v1676
  %v1678 = vpop.f32.mrf.mxu0
  %1679 = vdwg.mxu0
  %1680 = vmatpush.bf16.msra.mxu0 %v1065
  %1681 = vmatpush.bf16.msra.mxu0 %v1057
  %1682 = vmatpush.bf16.msra.mxu0 %v1049
  %1683 = vmatpush.bf16.msra.mxu0 %v1041
  %1684 = vmatpush.bf16.msra.mxu0 %v1033
  %1685 = vmatpush.bf16.msra.mxu0 %v1025
  %1686 = vmatpush.bf16.msra.mxu0 %v1017
  %1687 = vmatpush.bf16.msra.mxu0 %v1009
  %1688 = vmatmul.bf16.gmra.mxu0 %v1522
  %v1689 = vpop.f32.mrf.mxu0
  %v1690 = vadd.f32 0.0, %v1689
  %v1691 = vpop.f32.mrf.mxu0
  %1692 = vdwg.mxu0
  %1693 = vmatpush.bf16.msra.mxu0 %v1129
  %1694 = vmatpush.bf16.msra.mxu0 %v1121
  %1695 = vmatpush.bf16.msra.mxu0 %v1113
  %1696 = vmatpush.bf16.msra.mxu0 %v1105
  %1697 = vmatpush.bf16.msra.mxu0 %v1097
  %1698 = vmatpush.bf16.msra.mxu0 %v1089
  %1699 = vmatpush.bf16.msra.mxu0 %v1081
  %1700 = vmatpush.bf16.msra.mxu0 %v1073
  %1701 = vmatmul.bf16.gmra.mxu0 %v1523
  %v1702 = vpop.f32.mrf.mxu0
  %v1703 = vadd.f32 %v1690, %v1702
  %v1704 = vpop.f32.mrf.mxu0
  %1705 = vdwg.mxu0
  %1706 = vmatpush.bf16.msra.mxu0 %v1066
  %1707 = vmatpush.bf16.msra.mxu0 %v1058
  %1708 = vmatpush.bf16.msra.mxu0 %v1050
  %1709 = vmatpush.bf16.msra.mxu0 %v1042
  %1710 = vmatpush.bf16.msra.mxu0 %v1034
  %1711 = vmatpush.bf16.msra.mxu0 %v1026
  %1712 = vmatpush.bf16.msra.mxu0 %v1018
  %1713 = vmatpush.bf16.msra.mxu0 %v1010
  %1714 = vmatmul.bf16.gmra.mxu0 %v1522
  %v1715 = vpop.f32.mrf.mxu0
  %v1716 = vadd.f32 0.0, %v1715
  %v1717 = vpop.f32.mrf.mxu0
  %1718 = vdwg.mxu0
  %1719 = vmatpush.bf16.msra.mxu0 %v1130
  %1720 = vmatpush.bf16.msra.mxu0 %v1122
  %1721 = vmatpush.bf16.msra.mxu0 %v1114
  %1722 = vmatpush.bf16.msra.mxu0 %v1106
  %1723 = vmatpush.bf16.msra.mxu0 %v1098
  %1724 = vmatpush.bf16.msra.mxu0 %v1090
  %1725 = vmatpush.bf16.msra.mxu0 %v1082
  %1726 = vmatpush.bf16.msra.mxu0 %v1074
  %1727 = vmatmul.bf16.gmra.mxu0 %v1523
  %v1728 = vpop.f32.mrf.mxu0
  %v1729 = vadd.f32 %v1716, %v1728
  %v1730 = vpop.f32.mrf.mxu0
  %1731 = vdwg.mxu0
  %s1732 = smul.u32 1, 8
  %s1733 = smul.addr %s1732, 8
  %s1734 = scalar_lea.vmem [#allocation2], %s1733
  %v1735 = vld [vmem:[%s1734] sm:$0xff]
  %v1736 = vld [vmem:[%s1734 + $0x8] sm:$0xff]
  %v1737 = vld [vmem:[%s1734 + $0x10] sm:$0xff]
  %v1738 = vld [vmem:[%s1734 + $0x18] sm:$0xff]
  %v1739 = vld [vmem:[%s1734 + $0x20] sm:$0xff]
  %v1740 = vld [vmem:[%s1734 + $0x28] sm:$0xff]
  %v1741 = vld [vmem:[%s1734 + $0x30] sm:$0xff]
  %v1742 = vld [vmem:[%s1734 + $0x38] sm:$0xff]
  %v1743 = vadd.f32 %v1735, %v1547
  %v1744 = vadd.f32 %v1736, %v1573
  %v1745 = vadd.f32 %v1737, %v1599
  %v1746 = vadd.f32 %v1738, %v1625
  %v1747 = vadd.f32 %v1739, %v1651
  %v1748 = vadd.f32 %v1740, %v1677
  %v1749 = vadd.f32 %v1741, %v1703
  %v1750 = vadd.f32 %v1742, %v1729
  %v1751 = vmul.f32 %v1743, 0.5
  %v1752 = vmul.f32 %v1744, 0.5
  %v1753 = vtanh.pop %v1751
  %v1754 = vtanh.pop %v1752
  %v1755 = vadd.f32 %v1753, 1.0
  %v1756 = vadd.f32 %v1754, 1.0
  %v1757 = vmul.f32 %v1755, 0.5
  %v1758 = vmul.f32 %v1756, 0.5
  %v1759 = vmul.f32 %v1745, 0.5
  %v1760 = vmul.f32 %v1746, 0.5
  %v1761 = vtanh.pop %v1759
  %v1762 = vtanh.pop %v1760
  %v1763 = vadd.f32 %v1761, 1.0
  %v1764 = vadd.f32 %v1762, 1.0
  %v1765 = vmul.f32 %v1763, 0.5
  %v1766 = vmul.f32 %v1764, 0.5
  %v1767 = vtanh.pop %v1747
  %v1768 = vtanh.pop %v1748
  %v1769 = vmul.f32 %v1749, 0.5
  %v1770 = vmul.f32 %v1750, 0.5
  %v1771 = vtanh.pop %v1769
  %v1772 = vtanh.pop %v1770
  %v1773 = vadd.f32 %v1771, 1.0
  %v1774 = vadd.f32 %v1772, 1.0
  %v1775 = vmul.f32 %v1773, 0.5
  %v1776 = vmul.f32 %v1774, 0.5
  %v1777 = vmul.f32 %v1765, %v1516
  %v1778 = vmul.f32 %v1766, %v1517
  %v1779 = vmul.f32 %v1757, %v1767
  %v1780 = vmul.f32 %v1758, %v1768
  %v1781 = vadd.f32 %v1777, %v1779
  %v1782 = vadd.f32 %v1778, %v1780
  %v1783 = vtanh.pop %v1781
  %v1784 = vtanh.pop %v1782
  %v1785 = vmul.f32 %v1775, %v1783
  %v1786 = vmul.f32 %v1776, %v1784
  %v1787 = vpack.c.bf16 %v1785, %v1785
  %v1788 = vpack.c.bf16 %v1786, %v1786
  %1789 = vmatpush.bf16.msra.mxu0 %v1059
  %1790 = vmatpush.bf16.msra.mxu0 %v1051
  %1791 = vmatpush.bf16.msra.mxu0 %v1043
  %1792 = vmatpush.bf16.msra.mxu0 %v1035
  %1793 = vmatpush.bf16.msra.mxu0 %v1027
  %1794 = vmatpush.bf16.msra.mxu0 %v1019
  %1795 = vmatpush.bf16.msra.mxu0 %v1011
  %1796 = vmatpush.bf16.msra.mxu0 %v1003
  %1797 = vmatmul.bf16.gmra.mxu0 %v1787
  %v1798 = vpop.f32.mrf.mxu0
  %v1799 = vadd.f32 0.0, %v1798
  %v1800 = vpop.f32.mrf.mxu0
  %1801 = vdwg.mxu0
  %1802 = vmatpush.bf16.msra.mxu0 %v1123
  %1803 = vmatpush.bf16.msra.mxu0 %v1115
  %1804 = vmatpush.bf16.msra.mxu0 %v1107
  %1805 = vmatpush.bf16.msra.mxu0 %v1099
  %1806 = vmatpush.bf16.msra.mxu0 %v1091
  %1807 = vmatpush.bf16.msra.mxu0 %v1083
  %1808 = vmatpush.bf16.msra.mxu0 %v1075
  %1809 = vmatpush.bf16.msra.mxu0 %v1067
  %1810 = vmatmul.bf16.gmra.mxu0 %v1788
  %v1811 = vpop.f32.mrf.mxu0
  %v1812 = vadd.f32 %v1799, %v1811
  %v1813 = vpop.f32.mrf.mxu0
  %1814 = vdwg.mxu0
  %1815 = vmatpush.bf16.msra.mxu0 %v1060
  %1816 = vmatpush.bf16.msra.mxu0 %v1052
  %1817 = vmatpush.bf16.msra.mxu0 %v1044
  %1818 = vmatpush.bf16.msra.mxu0 %v1036
  %1819 = vmatpush.bf16.msra.mxu0 %v1028
  %1820 = vmatpush.bf16.msra.mxu0 %v1020
  %1821 = vmatpush.bf16.msra.mxu0 %v1012
  %1822 = vmatpush.bf16.msra.mxu0 %v1004
  %1823 = vmatmul.bf16.gmra.mxu0 %v1787
  %v1824 = vpop.f32.mrf.mxu0
  %v1825 = vadd.f32 0.0, %v1824
  %v1826 = vpop.f32.mrf.mxu0
  %1827 = vdwg.mxu0
  %1828 = vmatpush.bf16.msra.mxu0 %v1124
  %1829 = vmatpush.bf16.msra.mxu0 %v1116
  %1830 = vmatpush.bf16.msra.mxu0 %v1108
  %1831 = vmatpush.bf16.msra.mxu0 %v1100
  %1832 = vmatpush.bf16.msra.mxu0 %v1092
  %1833 = vmatpush.bf16.msra.mxu0 %v1084
  %1834 = vmatpush.bf16.msra.mxu0 %v1076
  %1835 = vmatpush.bf16.msra.mxu0 %v1068
  %1836 = vmatmul.bf16.gmra.mxu0 %v1788
  %v1837 = vpop.f32.mrf.mxu0
  %v1838 = vadd.f32 %v1825, %v1837
  %v1839 = vpop.f32.mrf.mxu0
  %1840 = vdwg.mxu0
  %1841 = vmatpush.bf16.msra.mxu0 %v1061
  %1842 = vmatpush.bf16.msra.mxu0 %v1053
  %1843 = vmatpush.bf16.msra.mxu0 %v1045
  %1844 = vmatpush.bf16.msra.mxu0 %v1037
  %1845 = vmatpush.bf16.msra.mxu0 %v1029
  %1846 = vmatpush.bf16.msra.mxu0 %v1021
  %1847 = vmatpush.bf16.msra.mxu0 %v1013
  %1848 = vmatpush.bf16.msra.mxu0 %v1005
  %1849 = vmatmul.bf16.gmra.mxu0 %v1787
  %v1850 = vpop.f32.mrf.mxu0
  %v1851 = vadd.f32 0.0, %v1850
  %v1852 = vpop.f32.mrf.mxu0
  %1853 = vdwg.mxu0
  %1854 = vmatpush.bf16.msra.mxu0 %v1125
  %1855 = vmatpush.bf16.msra.mxu0 %v1117
  %1856 = vmatpush.bf16.msra.mxu0 %v1109
  %1857 = vmatpush.bf16.msra.mxu0 %v1101
  %1858 = vmatpush.bf16.msra.mxu0 %v1093
  %1859 = vmatpush.bf16.msra.mxu0 %v1085
  %1860 = vmatpush.bf16.msra.mxu0 %v1077
  %1861 = vmatpush.bf16.msra.mxu0 %v1069
  %1862 = vmatmul.bf16.gmra.mxu0 %v1788
  %v1863 = vpop.f32.mrf.mxu0
  %v1864 = vadd.f32 %v1851, %v1863
  %v1865 = vpop.f32.mrf.mxu0
  %1866 = vdwg.mxu0
  %1867 = vmatpush.bf16.msra.mxu0 %v1062
  %1868 = vmatpush.bf16.msra.mxu0 %v1054
  %1869 = vmatpush.bf16.msra.mxu0 %v1046
  %1870 = vmatpush.bf16.msra.mxu0 %v1038
  %1871 = vmatpush.bf16.msra.mxu0 %v1030
  %1872 = vmatpush.bf16.msra.mxu0 %v1022
  %1873 = vmatpush.bf16.msra.mxu0 %v1014
  %1874 = vmatpush.bf16.msra.mxu0 %v1006
  %1875 = vmatmul.bf16.gmra.mxu0 %v1787
  %v1876 = vpop.f32.mrf.mxu0
  %v1877 = vadd.f32 0.0, %v1876
  %v1878 = vpop.f32.mrf.mxu0
  %1879 = vdwg.mxu0
  %1880 = vmatpush.bf16.msra.mxu0 %v1126
  %1881 = vmatpush.bf16.msra.mxu0 %v1118
  %1882 = vmatpush.bf16.msra.mxu0 %v1110
  %1883 = vmatpush.bf16.msra.mxu0 %v1102
  %1884 = vmatpush.bf16.msra.mxu0 %v1094
  %1885 = vmatpush.bf16.msra.mxu0 %v1086
  %1886 = vmatpush.bf16.msra.mxu0 %v1078
  %1887 = vmatpush.bf16.msra.mxu0 %v1070
  %1888 = vmatmul.bf16.gmra.mxu0 %v1788
  %v1889 = vpop.f32.mrf.mxu0
  %v1890 = vadd.f32 %v1877, %v1889
  %v1891 = vpop.f32.mrf.mxu0
  %1892 = vdwg.mxu0
  %1893 = vmatpush.bf16.msra.mxu0 %v1063
  %1894 = vmatpush.bf16.msra.mxu0 %v1055
  %1895 = vmatpush.bf16.msra.mxu0 %v1047
  %1896 = vmatpush.bf16.msra.mxu0 %v1039
  %1897 = vmatpush.bf16.msra.mxu0 %v1031
  %1898 = vmatpush.bf16.msra.mxu0 %v1023
  %1899 = vmatpush.bf16.msra.mxu0 %v1015
  %1900 = vmatpush.bf16.msra.mxu0 %v1007
  %1901 = vmatmul.bf16.gmra.mxu0 %v1787
  %v1902 = vpop.f32.mrf.mxu0
  %v1903 = vadd.f32 0.0, %v1902
  %v1904 = vpop.f32.mrf.mxu0
  %1905 = vdwg.mxu0
  %1906 = vmatpush.bf16.msra.mxu0 %v1127
  %1907 = vmatpush.bf16.msra.mxu0 %v1119
  %1908 = vmatpush.bf16.msra.mxu0 %v1111
  %1909 = vmatpush.bf16.msra.mxu0 %v1103
  %1910 = vmatpush.bf16.msra.mxu0 %v1095
  %1911 = vmatpush.bf16.msra.mxu0 %v1087
  %1912 = vmatpush.bf16.msra.mxu0 %v1079
  %1913 = vmatpush.bf16.msra.mxu0 %v1071
  %1914 = vmatmul.bf16.gmra.mxu0 %v1788
  %v1915 = vpop.f32.mrf.mxu0
  %v1916 = vadd.f32 %v1903, %v1915
  %v1917 = vpop.f32.mrf.mxu0
  %1918 = vdwg.mxu0
  %1919 = vmatpush.bf16.msra.mxu0 %v1064
  %1920 = vmatpush.bf16.msra.mxu0 %v1056
  %1921 = vmatpush.bf16.msra.mxu0 %v1048
  %1922 = vmatpush.bf16.msra.mxu0 %v1040
  %1923 = vmatpush.bf16.msra.mxu0 %v1032
  %1924 = vmatpush.bf16.msra.mxu0 %v1024
  %1925 = vmatpush.bf16.msra.mxu0 %v1016
  %1926 = vmatpush.bf16.msra.mxu0 %v1008
  %1927 = vmatmul.bf16.gmra.mxu0 %v1787
  %v1928 = vpop.f32.mrf.mxu0
  %v1929 = vadd.f32 0.0, %v1928
  %v1930 = vpop.f32.mrf.mxu0
  %1931 = vdwg.mxu0
  %1932 = vmatpush.bf16.msra.mxu0 %v1128
  %1933 = vmatpush.bf16.msra.mxu0 %v1120
  %1934 = vmatpush.bf16.msra.mxu0 %v1112
  %1935 = vmatpush.bf16.msra.mxu0 %v1104
  %1936 = vmatpush.bf16.msra.mxu0 %v1096
  %1937 = vmatpush.bf16.msra.mxu0 %v1088
  %1938 = vmatpush.bf16.msra.mxu0 %v1080
  %1939 = vmatpush.bf16.msra.mxu0 %v1072
  %1940 = vmatmul.bf16.gmra.mxu0 %v1788
  %v1941 = vpop.f32.mrf.mxu0
  %v1942 = vadd.f32 %v1929, %v1941
  %v1943 = vpop.f32.mrf.mxu0
  %1944 = vdwg.mxu0
  %1945 = vmatpush.bf16.msra.mxu0 %v1065
  %1946 = vmatpush.bf16.msra.mxu0 %v1057
  %1947 = vmatpush.bf16.msra.mxu0 %v1049
  %1948 = vmatpush.bf16.msra.mxu0 %v1041
  %1949 = vmatpush.bf16.msra.mxu0 %v1033
  %1950 = vmatpush.bf16.msra.mxu0 %v1025
  %1951 = vmatpush.bf16.msra.mxu0 %v1017
  %1952 = vmatpush.bf16.msra.mxu0 %v1009
  %1953 = vmatmul.bf16.gmra.mxu0 %v1787
  %v1954 = vpop.f32.mrf.mxu0
  %v1955 = vadd.f32 0.0, %v1954
  %v1956 = vpop.f32.mrf.mxu0
  %1957 = vdwg.mxu0
  %1958 = vmatpush.bf16.msra.mxu0 %v1129
  %1959 = vmatpush.bf16.msra.mxu0 %v1121
  %1960 = vmatpush.bf16.msra.mxu0 %v1113
  %1961 = vmatpush.bf16.msra.mxu0 %v1105
  %1962 = vmatpush.bf16.msra.mxu0 %v1097
  %1963 = vmatpush.bf16.msra.mxu0 %v1089
  %1964 = vmatpush.bf16.msra.mxu0 %v1081
  %1965 = vmatpush.bf16.msra.mxu0 %v1073
  %1966 = vmatmul.bf16.gmra.mxu0 %v1788
  %v1967 = vpop.f32.mrf.mxu0
  %v1968 = vadd.f32 %v1955, %v1967
  %v1969 = vpop.f32.mrf.mxu0
  %1970 = vdwg.mxu0
  %1971 = vmatpush.bf16.msra.mxu0 %v1066
  %1972 = vmatpush.bf16.msra.mxu0 %v1058
  %1973 = vmatpush.bf16.msra.mxu0 %v1050
  %1974 = vmatpush.bf16.msra.mxu0 %v1042
  %1975 = vmatpush.bf16.msra.mxu0 %v1034
  %1976 = vmatpush.bf16.msra.mxu0 %v1026
  %1977 = vmatpush.bf16.msra.mxu0 %v1018
  %1978 = vmatpush.bf16.msra.mxu0 %v1010
  %1979 = vmatmul.bf16.gmra.mxu0 %v1787
  %v1980 = vpop.f32.mrf.mxu0
  %v1981 = vadd.f32 0.0, %v1980
  %v1982 = vpop.f32.mrf.mxu0
  %1983 = vdwg.mxu0
  %1984 = vmatpush.bf16.msra.mxu0 %v1130
  %1985 = vmatpush.bf16.msra.mxu0 %v1122
  %1986 = vmatpush.bf16.msra.mxu0 %v1114
  %1987 = vmatpush.bf16.msra.mxu0 %v1106
  %1988 = vmatpush.bf16.msra.mxu0 %v1098
  %1989 = vmatpush.bf16.msra.mxu0 %v1090
  %1990 = vmatpush.bf16.msra.mxu0 %v1082
  %1991 = vmatpush.bf16.msra.mxu0 %v1074
  %1992 = vmatmul.bf16.gmra.mxu0 %v1788
  %v1993 = vpop.f32.mrf.mxu0
  %v1994 = vadd.f32 %v1981, %v1993
  %v1995 = vpop.f32.mrf.mxu0
  %1996 = vdwg.mxu0
  %s1997 = smul.u32 2, 8
  %s1998 = smul.addr %s1997, 8
  %s1999 = scalar_lea.vmem [#allocation2], %s1998
  %v2000 = vld [vmem:[%s1999] sm:$0xff]
  %v2001 = vld [vmem:[%s1999 + $0x8] sm:$0xff]
  %v2002 = vld [vmem:[%s1999 + $0x10] sm:$0xff]
  %v2003 = vld [vmem:[%s1999 + $0x18] sm:$0xff]
  %v2004 = vld [vmem:[%s1999 + $0x20] sm:$0xff]
  %v2005 = vld [vmem:[%s1999 + $0x28] sm:$0xff]
  %v2006 = vld [vmem:[%s1999 + $0x30] sm:$0xff]
  %v2007 = vld [vmem:[%s1999 + $0x38] sm:$0xff]
  %v2008 = vadd.f32 %v2000, %v1812
  %v2009 = vadd.f32 %v2001, %v1838
  %v2010 = vadd.f32 %v2002, %v1864
  %v2011 = vadd.f32 %v2003, %v1890
  %v2012 = vadd.f32 %v2004, %v1916
  %v2013 = vadd.f32 %v2005, %v1942
  %v2014 = vadd.f32 %v2006, %v1968
  %v2015 = vadd.f32 %v2007, %v1994
  %v2016 = vmul.f32 %v2008, 0.5
  %v2017 = vmul.f32 %v2009, 0.5
  %v2018 = vtanh.pop %v2016
  %v2019 = vtanh.pop %v2017
  %v2020 = vadd.f32 %v2018, 1.0
  %v2021 = vadd.f32 %v2019, 1.0
  %v2022 = vmul.f32 %v2020, 0.5
  %v2023 = vmul.f32 %v2021, 0.5
  %v2024 = vmul.f32 %v2010, 0.5
  %v2025 = vmul.f32 %v2011, 0.5
  %v2026 = vtanh.pop %v2024
  %v2027 = vtanh.pop %v2025
  %v2028 = vadd.f32 %v2026, 1.0
  %v2029 = vadd.f32 %v2027, 1.0
  %v2030 = vmul.f32 %v2028, 0.5
  %v2031 = vmul.f32 %v2029, 0.5
  %v2032 = vtanh.pop %v2012
  %v2033 = vtanh.pop %v2013
  %v2034 = vmul.f32 %v2014, 0.5
  %v2035 = vmul.f32 %v2015, 0.5
  %v2036 = vtanh.pop %v2034
  %v2037 = vtanh.pop %v2035
  %v2038 = vadd.f32 %v2036, 1.0
  %v2039 = vadd.f32 %v2037, 1.0
  %v2040 = vmul.f32 %v2038, 0.5
  %v2041 = vmul.f32 %v2039, 0.5
  %v2042 = vmul.f32 %v2030, %v1781
  %v2043 = vmul.f32 %v2031, %v1782
  %v2044 = vmul.f32 %v2022, %v2032
  %v2045 = vmul.f32 %v2023, %v2033
  %v2046 = vadd.f32 %v2042, %v2044
  %v2047 = vadd.f32 %v2043, %v2045
  %v2048 = vtanh.pop %v2046
  %v2049 = vtanh.pop %v2047
  %v2050 = vmul.f32 %v2040, %v2048
  %v2051 = vmul.f32 %v2041, %v2049
  %v2052 = vpack.c.bf16 %v2050, %v2050
  %v2053 = vpack.c.bf16 %v2051, %v2051
  %2054 = vmatpush.bf16.msra.mxu0 %v1059
  %2055 = vmatpush.bf16.msra.mxu0 %v1051
  %2056 = vmatpush.bf16.msra.mxu0 %v1043
  %2057 = vmatpush.bf16.msra.mxu0 %v1035
  %2058 = vmatpush.bf16.msra.mxu0 %v1027
  %2059 = vmatpush.bf16.msra.mxu0 %v1019
  %2060 = vmatpush.bf16.msra.mxu0 %v1011
  %2061 = vmatpush.bf16.msra.mxu0 %v1003
  %2062 = vmatmul.bf16.gmra.mxu0 %v2052
  %v2063 = vpop.f32.mrf.mxu0
  %v2064 = vadd.f32 0.0, %v2063
  %v2065 = vpop.f32.mrf.mxu0
  %2066 = vdwg.mxu0
  %2067 = vmatpush.bf16.msra.mxu0 %v1123
  %2068 = vmatpush.bf16.msra.mxu0 %v1115
  %2069 = vmatpush.bf16.msra.mxu0 %v1107
  %2070 = vmatpush.bf16.msra.mxu0 %v1099
  %2071 = vmatpush.bf16.msra.mxu0 %v1091
  %2072 = vmatpush.bf16.msra.mxu0 %v1083
  %2073 = vmatpush.bf16.msra.mxu0 %v1075
  %2074 = vmatpush.bf16.msra.mxu0 %v1067
  %2075 = vmatmul.bf16.gmra.mxu0 %v2053
  %v2076 = vpop.f32.mrf.mxu0
  %v2077 = vadd.f32 %v2064, %v2076
  %v2078 = vpop.f32.mrf.mxu0
  %2079 = vdwg.mxu0
  %2080 = vmatpush.bf16.msra.mxu0 %v1060
  %2081 = vmatpush.bf16.msra.mxu0 %v1052
  %2082 = vmatpush.bf16.msra.mxu0 %v1044
  %2083 = vmatpush.bf16.msra.mxu0 %v1036
  %2084 = vmatpush.bf16.msra.mxu0 %v1028
  %2085 = vmatpush.bf16.msra.mxu0 %v1020
  %2086 = vmatpush.bf16.msra.mxu0 %v1012
  %2087 = vmatpush.bf16.msra.mxu0 %v1004
  %2088 = vmatmul.bf16.gmra.mxu0 %v2052
  %v2089 = vpop.f32.mrf.mxu0
  %v2090 = vadd.f32 0.0, %v2089
  %v2091 = vpop.f32.mrf.mxu0
  %2092 = vdwg.mxu0
  %2093 = vmatpush.bf16.msra.mxu0 %v1124
  %2094 = vmatpush.bf16.msra.mxu0 %v1116
  %2095 = vmatpush.bf16.msra.mxu0 %v1108
  %2096 = vmatpush.bf16.msra.mxu0 %v1100
  %2097 = vmatpush.bf16.msra.mxu0 %v1092
  %2098 = vmatpush.bf16.msra.mxu0 %v1084
  %2099 = vmatpush.bf16.msra.mxu0 %v1076
  %2100 = vmatpush.bf16.msra.mxu0 %v1068
  %2101 = vmatmul.bf16.gmra.mxu0 %v2053
  %v2102 = vpop.f32.mrf.mxu0
  %v2103 = vadd.f32 %v2090, %v2102
  %v2104 = vpop.f32.mrf.mxu0
  %2105 = vdwg.mxu0
  %2106 = vmatpush.bf16.msra.mxu0 %v1061
  %2107 = vmatpush.bf16.msra.mxu0 %v1053
  %2108 = vmatpush.bf16.msra.mxu0 %v1045
  %2109 = vmatpush.bf16.msra.mxu0 %v1037
  %2110 = vmatpush.bf16.msra.mxu0 %v1029
  %2111 = vmatpush.bf16.msra.mxu0 %v1021
  %2112 = vmatpush.bf16.msra.mxu0 %v1013
  %2113 = vmatpush.bf16.msra.mxu0 %v1005
  %2114 = vmatmul.bf16.gmra.mxu0 %v2052
  %v2115 = vpop.f32.mrf.mxu0
  %v2116 = vadd.f32 0.0, %v2115
  %v2117 = vpop.f32.mrf.mxu0
  %2118 = vdwg.mxu0
  %2119 = vmatpush.bf16.msra.mxu0 %v1125
  %2120 = vmatpush.bf16.msra.mxu0 %v1117
  %2121 = vmatpush.bf16.msra.mxu0 %v1109
  %2122 = vmatpush.bf16.msra.mxu0 %v1101
  %2123 = vmatpush.bf16.msra.mxu0 %v1093
  %2124 = vmatpush.bf16.msra.mxu0 %v1085
  %2125 = vmatpush.bf16.msra.mxu0 %v1077
  %2126 = vmatpush.bf16.msra.mxu0 %v1069
  %2127 = vmatmul.bf16.gmra.mxu0 %v2053
  %v2128 = vpop.f32.mrf.mxu0
  %v2129 = vadd.f32 %v2116, %v2128
  %v2130 = vpop.f32.mrf.mxu0
  %2131 = vdwg.mxu0
  %2132 = vmatpush.bf16.msra.mxu0 %v1062
  %2133 = vmatpush.bf16.msra.mxu0 %v1054
  %2134 = vmatpush.bf16.msra.mxu0 %v1046
  %2135 = vmatpush.bf16.msra.mxu0 %v1038
  %2136 = vmatpush.bf16.msra.mxu0 %v1030
  %2137 = vmatpush.bf16.msra.mxu0 %v1022
  %2138 = vmatpush.bf16.msra.mxu0 %v1014
  %2139 = vmatpush.bf16.msra.mxu0 %v1006
  %2140 = vmatmul.bf16.gmra.mxu0 %v2052
  %v2141 = vpop.f32.mrf.mxu0
  %v2142 = vadd.f32 0.0, %v2141
  %v2143 = vpop.f32.mrf.mxu0
  %2144 = vdwg.mxu0
  %2145 = vmatpush.bf16.msra.mxu0 %v1126
  %2146 = vmatpush.bf16.msra.mxu0 %v1118
  %2147 = vmatpush.bf16.msra.mxu0 %v1110
  %2148 = vmatpush.bf16.msra.mxu0 %v1102
  %2149 = vmatpush.bf16.msra.mxu0 %v1094
  %2150 = vmatpush.bf16.msra.mxu0 %v1086
  %2151 = vmatpush.bf16.msra.mxu0 %v1078
  %2152 = vmatpush.bf16.msra.mxu0 %v1070
  %2153 = vmatmul.bf16.gmra.mxu0 %v2053
  %v2154 = vpop.f32.mrf.mxu0
  %v2155 = vadd.f32 %v2142, %v2154
  %v2156 = vpop.f32.mrf.mxu0
  %2157 = vdwg.mxu0
  %2158 = vmatpush.bf16.msra.mxu0 %v1063
  %2159 = vmatpush.bf16.msra.mxu0 %v1055
  %2160 = vmatpush.bf16.msra.mxu0 %v1047
  %2161 = vmatpush.bf16.msra.mxu0 %v1039
  %2162 = vmatpush.bf16.msra.mxu0 %v1031
  %2163 = vmatpush.bf16.msra.mxu0 %v1023
  %2164 = vmatpush.bf16.msra.mxu0 %v1015
  %2165 = vmatpush.bf16.msra.mxu0 %v1007
  %2166 = vmatmul.bf16.gmra.mxu0 %v2052
  %v2167 = vpop.f32.mrf.mxu0
  %v2168 = vadd.f32 0.0, %v2167
  %v2169 = vpop.f32.mrf.mxu0
  %2170 = vdwg.mxu0
  %2171 = vmatpush.bf16.msra.mxu0 %v1127
  %2172 = vmatpush.bf16.msra.mxu0 %v1119
  %2173 = vmatpush.bf16.msra.mxu0 %v1111
  %2174 = vmatpush.bf16.msra.mxu0 %v1103
  %2175 = vmatpush.bf16.msra.mxu0 %v1095
  %2176 = vmatpush.bf16.msra.mxu0 %v1087
  %2177 = vmatpush.bf16.msra.mxu0 %v1079
  %2178 = vmatpush.bf16.msra.mxu0 %v1071
  %2179 = vmatmul.bf16.gmra.mxu0 %v2053
  %v2180 = vpop.f32.mrf.mxu0
  %v2181 = vadd.f32 %v2168, %v2180
  %v2182 = vpop.f32.mrf.mxu0
  %2183 = vdwg.mxu0
  %2184 = vmatpush.bf16.msra.mxu0 %v1064
  %2185 = vmatpush.bf16.msra.mxu0 %v1056
  %2186 = vmatpush.bf16.msra.mxu0 %v1048
  %2187 = vmatpush.bf16.msra.mxu0 %v1040
  %2188 = vmatpush.bf16.msra.mxu0 %v1032
  %2189 = vmatpush.bf16.msra.mxu0 %v1024
  %2190 = vmatpush.bf16.msra.mxu0 %v1016
  %2191 = vmatpush.bf16.msra.mxu0 %v1008
  %2192 = vmatmul.bf16.gmra.mxu0 %v2052
  %v2193 = vpop.f32.mrf.mxu0
  %v2194 = vadd.f32 0.0, %v2193
  %v2195 = vpop.f32.mrf.mxu0
  %2196 = vdwg.mxu0
  %2197 = vmatpush.bf16.msra.mxu0 %v1128
  %2198 = vmatpush.bf16.msra.mxu0 %v1120
  %2199 = vmatpush.bf16.msra.mxu0 %v1112
  %2200 = vmatpush.bf16.msra.mxu0 %v1104
  %2201 = vmatpush.bf16.msra.mxu0 %v1096
  %2202 = vmatpush.bf16.msra.mxu0 %v1088
  %2203 = vmatpush.bf16.msra.mxu0 %v1080
  %2204 = vmatpush.bf16.msra.mxu0 %v1072
  %2205 = vmatmul.bf16.gmra.mxu0 %v2053
  %v2206 = vpop.f32.mrf.mxu0
  %v2207 = vadd.f32 %v2194, %v2206
  %v2208 = vpop.f32.mrf.mxu0
  %2209 = vdwg.mxu0
  %2210 = vmatpush.bf16.msra.mxu0 %v1065
  %2211 = vmatpush.bf16.msra.mxu0 %v1057
  %2212 = vmatpush.bf16.msra.mxu0 %v1049
  %2213 = vmatpush.bf16.msra.mxu0 %v1041
  %2214 = vmatpush.bf16.msra.mxu0 %v1033
  %2215 = vmatpush.bf16.msra.mxu0 %v1025
  %2216 = vmatpush.bf16.msra.mxu0 %v1017
  %2217 = vmatpush.bf16.msra.mxu0 %v1009
  %2218 = vmatmul.bf16.gmra.mxu0 %v2052
  %v2219 = vpop.f32.mrf.mxu0
  %v2220 = vadd.f32 0.0, %v2219
  %v2221 = vpop.f32.mrf.mxu0
  %2222 = vdwg.mxu0
  %2223 = vmatpush.bf16.msra.mxu0 %v1129
  %2224 = vmatpush.bf16.msra.mxu0 %v1121
  %2225 = vmatpush.bf16.msra.mxu0 %v1113
  %2226 = vmatpush.bf16.msra.mxu0 %v1105
  %2227 = vmatpush.bf16.msra.mxu0 %v1097
  %2228 = vmatpush.bf16.msra.mxu0 %v1089
  %2229 = vmatpush.bf16.msra.mxu0 %v1081
  %2230 = vmatpush.bf16.msra.mxu0 %v1073
  %2231 = vmatmul.bf16.gmra.mxu0 %v2053
  %v2232 = vpop.f32.mrf.mxu0
  %v2233 = vadd.f32 %v2220, %v2232
  %v2234 = vpop.f32.mrf.mxu0
  %2235 = vdwg.mxu0
  %2236 = vmatpush.bf16.msra.mxu0 %v1066
  %2237 = vmatpush.bf16.msra.mxu0 %v1058
  %2238 = vmatpush.bf16.msra.mxu0 %v1050
  %2239 = vmatpush.bf16.msra.mxu0 %v1042
  %2240 = vmatpush.bf16.msra.mxu0 %v1034
  %2241 = vmatpush.bf16.msra.mxu0 %v1026
  %2242 = vmatpush.bf16.msra.mxu0 %v1018
  %2243 = vmatpush.bf16.msra.mxu0 %v1010
  %2244 = vmatmul.bf16.gmra.mxu0 %v2052
  %v2245 = vpop.f32.mrf.mxu0
  %v2246 = vadd.f32 0.0, %v2245
  %v2247 = vpop.f32.mrf.mxu0
  %2248 = vdwg.mxu0
  %2249 = vmatpush.bf16.msra.mxu0 %v1130
  %2250 = vmatpush.bf16.msra.mxu0 %v1122
  %2251 = vmatpush.bf16.msra.mxu0 %v1114
  %2252 = vmatpush.bf16.msra.mxu0 %v1106
  %2253 = vmatpush.bf16.msra.mxu0 %v1098
  %2254 = vmatpush.bf16.msra.mxu0 %v1090
  %2255 = vmatpush.bf16.msra.mxu0 %v1082
  %2256 = vmatpush.bf16.msra.mxu0 %v1074
  %2257 = vmatmul.bf16.gmra.mxu0 %v2053
  %v2258 = vpop.f32.mrf.mxu0
  %v2259 = vadd.f32 %v2246, %v2258
  %v2260 = vpop.f32.mrf.mxu0
  %2261 = vdwg.mxu0
  %s2262 = smul.u32 3, 8
  %s2263 = smul.addr %s2262, 8
  %s2264 = scalar_lea.vmem [#allocation2], %s2263
  %v2265 = vld [vmem:[%s2264] sm:$0xff]
  %v2266 = vld [vmem:[%s2264 + $0x8] sm:$0xff]
  %v2267 = vld [vmem:[%s2264 + $0x10] sm:$0xff]
  %v2268 = vld [vmem:[%s2264 + $0x18] sm:$0xff]
  %v2269 = vld [vmem:[%s2264 + $0x20] sm:$0xff]
  %v2270 = vld [vmem:[%s2264 + $0x28] sm:$0xff]
  %v2271 = vld [vmem:[%s2264 + $0x30] sm:$0xff]
  %v2272 = vld [vmem:[%s2264 + $0x38] sm:$0xff]
  %v2273 = vadd.f32 %v2265, %v2077
  %v2274 = vadd.f32 %v2266, %v2103
  %v2275 = vadd.f32 %v2267, %v2129
  %v2276 = vadd.f32 %v2268, %v2155
  %v2277 = vadd.f32 %v2269, %v2181
  %v2278 = vadd.f32 %v2270, %v2207
  %v2279 = vadd.f32 %v2271, %v2233
  %v2280 = vadd.f32 %v2272, %v2259
  %v2281 = vmul.f32 %v2273, 0.5
  %v2282 = vmul.f32 %v2274, 0.5
  %v2283 = vtanh.pop %v2281
  %v2284 = vtanh.pop %v2282
  %v2285 = vadd.f32 %v2283, 1.0
  %v2286 = vadd.f32 %v2284, 1.0
  %v2287 = vmul.f32 %v2285, 0.5
  %v2288 = vmul.f32 %v2286, 0.5
  %v2289 = vmul.f32 %v2275, 0.5
  %v2290 = vmul.f32 %v2276, 0.5
  %v2291 = vtanh.pop %v2289
  %v2292 = vtanh.pop %v2290
  %v2293 = vadd.f32 %v2291, 1.0
  %v2294 = vadd.f32 %v2292, 1.0
  %v2295 = vmul.f32 %v2293, 0.5
  %v2296 = vmul.f32 %v2294, 0.5
  %v2297 = vtanh.pop %v2277
  %v2298 = vtanh.pop %v2278
  %v2299 = vmul.f32 %v2279, 0.5
  %v2300 = vmul.f32 %v2280, 0.5
  %v2301 = vtanh.pop %v2299
  %v2302 = vtanh.pop %v2300
  %v2303 = vadd.f32 %v2301, 1.0
  %v2304 = vadd.f32 %v2302, 1.0
  %v2305 = vmul.f32 %v2303, 0.5
  %v2306 = vmul.f32 %v2304, 0.5
  %v2307 = vmul.f32 %v2295, %v2046
  %v2308 = vmul.f32 %v2296, %v2047
  %v2309 = vmul.f32 %v2287, %v2297
  %v2310 = vmul.f32 %v2288, %v2298
  %v2311 = vadd.f32 %v2307, %v2309
  %v2312 = vadd.f32 %v2308, %v2310
  %v2313 = vtanh.pop %v2311
  %v2314 = vtanh.pop %v2312
  %v2315 = vmul.f32 %v2305, %v2313
  %v2316 = vmul.f32 %v2306, %v2314
  %v2317 = vpack.c.bf16 %v2315, %v2315
  %v2318 = vpack.c.bf16 %v2316, %v2316
  %2319 = vmatpush.bf16.msra.mxu0 %v1059
  %2320 = vmatpush.bf16.msra.mxu0 %v1051
  %2321 = vmatpush.bf16.msra.mxu0 %v1043
  %2322 = vmatpush.bf16.msra.mxu0 %v1035
  %2323 = vmatpush.bf16.msra.mxu0 %v1027
  %2324 = vmatpush.bf16.msra.mxu0 %v1019
  %2325 = vmatpush.bf16.msra.mxu0 %v1011
  %2326 = vmatpush.bf16.msra.mxu0 %v1003
  %2327 = vmatmul.bf16.gmra.mxu0 %v2317
  %v2328 = vpop.f32.mrf.mxu0
  %v2329 = vadd.f32 0.0, %v2328
  %v2330 = vpop.f32.mrf.mxu0
  %2331 = vdwg.mxu0
  %2332 = vmatpush.bf16.msra.mxu0 %v1123
  %2333 = vmatpush.bf16.msra.mxu0 %v1115
  %2334 = vmatpush.bf16.msra.mxu0 %v1107
  %2335 = vmatpush.bf16.msra.mxu0 %v1099
  %2336 = vmatpush.bf16.msra.mxu0 %v1091
  %2337 = vmatpush.bf16.msra.mxu0 %v1083
  %2338 = vmatpush.bf16.msra.mxu0 %v1075
  %2339 = vmatpush.bf16.msra.mxu0 %v1067
  %2340 = vmatmul.bf16.gmra.mxu0 %v2318
  %v2341 = vpop.f32.mrf.mxu0
  %v2342 = vadd.f32 %v2329, %v2341
  %v2343 = vpop.f32.mrf.mxu0
  %2344 = vdwg.mxu0
  %2345 = vmatpush.bf16.msra.mxu0 %v1060
  %2346 = vmatpush.bf16.msra.mxu0 %v1052
  %2347 = vmatpush.bf16.msra.mxu0 %v1044
  %2348 = vmatpush.bf16.msra.mxu0 %v1036
  %2349 = vmatpush.bf16.msra.mxu0 %v1028
  %2350 = vmatpush.bf16.msra.mxu0 %v1020
  %2351 = vmatpush.bf16.msra.mxu0 %v1012
  %2352 = vmatpush.bf16.msra.mxu0 %v1004
  %2353 = vmatmul.bf16.gmra.mxu0 %v2317
  %v2354 = vpop.f32.mrf.mxu0
  %v2355 = vadd.f32 0.0, %v2354
  %v2356 = vpop.f32.mrf.mxu0
  %2357 = vdwg.mxu0
  %2358 = vmatpush.bf16.msra.mxu0 %v1124
  %2359 = vmatpush.bf16.msra.mxu0 %v1116
  %2360 = vmatpush.bf16.msra.mxu0 %v1108
  %2361 = vmatpush.bf16.msra.mxu0 %v1100
  %2362 = vmatpush.bf16.msra.mxu0 %v1092
  %2363 = vmatpush.bf16.msra.mxu0 %v1084
  %2364 = vmatpush.bf16.msra.mxu0 %v1076
  %2365 = vmatpush.bf16.msra.mxu0 %v1068
  %2366 = vmatmul.bf16.gmra.mxu0 %v2318
  %v2367 = vpop.f32.mrf.mxu0
  %v2368 = vadd.f32 %v2355, %v2367
  %v2369 = vpop.f32.mrf.mxu0
  %2370 = vdwg.mxu0
  %2371 = vmatpush.bf16.msra.mxu0 %v1061
  %2372 = vmatpush.bf16.msra.mxu0 %v1053
  %2373 = vmatpush.bf16.msra.mxu0 %v1045
  %2374 = vmatpush.bf16.msra.mxu0 %v1037
  %2375 = vmatpush.bf16.msra.mxu0 %v1029
  %2376 = vmatpush.bf16.msra.mxu0 %v1021
  %2377 = vmatpush.bf16.msra.mxu0 %v1013
  %2378 = vmatpush.bf16.msra.mxu0 %v1005
  %2379 = vmatmul.bf16.gmra.mxu0 %v2317
  %v2380 = vpop.f32.mrf.mxu0
  %v2381 = vadd.f32 0.0, %v2380
  %v2382 = vpop.f32.mrf.mxu0
  %2383 = vdwg.mxu0
  %2384 = vmatpush.bf16.msra.mxu0 %v1125
  %2385 = vmatpush.bf16.msra.mxu0 %v1117
  %2386 = vmatpush.bf16.msra.mxu0 %v1109
  %2387 = vmatpush.bf16.msra.mxu0 %v1101
  %2388 = vmatpush.bf16.msra.mxu0 %v1093
  %2389 = vmatpush.bf16.msra.mxu0 %v1085
  %2390 = vmatpush.bf16.msra.mxu0 %v1077
  %2391 = vmatpush.bf16.msra.mxu0 %v1069
  %2392 = vmatmul.bf16.gmra.mxu0 %v2318
  %v2393 = vpop.f32.mrf.mxu0
  %v2394 = vadd.f32 %v2381, %v2393
  %v2395 = vpop.f32.mrf.mxu0
  %2396 = vdwg.mxu0
  %2397 = vmatpush.bf16.msra.mxu0 %v1062
  %2398 = vmatpush.bf16.msra.mxu0 %v1054
  %2399 = vmatpush.bf16.msra.mxu0 %v1046
  %2400 = vmatpush.bf16.msra.mxu0 %v1038
  %2401 = vmatpush.bf16.msra.mxu0 %v1030
  %2402 = vmatpush.bf16.msra.mxu0 %v1022
  %2403 = vmatpush.bf16.msra.mxu0 %v1014
  %2404 = vmatpush.bf16.msra.mxu0 %v1006
  %2405 = vmatmul.bf16.gmra.mxu0 %v2317
  %v2406 = vpop.f32.mrf.mxu0
  %v2407 = vadd.f32 0.0, %v2406
  %v2408 = vpop.f32.mrf.mxu0
  %2409 = vdwg.mxu0
  %2410 = vmatpush.bf16.msra.mxu0 %v1126
  %2411 = vmatpush.bf16.msra.mxu0 %v1118
  %2412 = vmatpush.bf16.msra.mxu0 %v1110
  %2413 = vmatpush.bf16.msra.mxu0 %v1102
  %2414 = vmatpush.bf16.msra.mxu0 %v1094
  %2415 = vmatpush.bf16.msra.mxu0 %v1086
  %2416 = vmatpush.bf16.msra.mxu0 %v1078
  %2417 = vmatpush.bf16.msra.mxu0 %v1070
  %2418 = vmatmul.bf16.gmra.mxu0 %v2318
  %v2419 = vpop.f32.mrf.mxu0
  %v2420 = vadd.f32 %v2407, %v2419
  %v2421 = vpop.f32.mrf.mxu0
  %2422 = vdwg.mxu0
  %2423 = vmatpush.bf16.msra.mxu0 %v1063
  %2424 = vmatpush.bf16.msra.mxu0 %v1055
  %2425 = vmatpush.bf16.msra.mxu0 %v1047
  %2426 = vmatpush.bf16.msra.mxu0 %v1039
  %2427 = vmatpush.bf16.msra.mxu0 %v1031
  %2428 = vmatpush.bf16.msra.mxu0 %v1023
  %2429 = vmatpush.bf16.msra.mxu0 %v1015
  %2430 = vmatpush.bf16.msra.mxu0 %v1007
  %2431 = vmatmul.bf16.gmra.mxu0 %v2317
  %v2432 = vpop.f32.mrf.mxu0
  %v2433 = vadd.f32 0.0, %v2432
  %v2434 = vpop.f32.mrf.mxu0
  %2435 = vdwg.mxu0
  %2436 = vmatpush.bf16.msra.mxu0 %v1127
  %2437 = vmatpush.bf16.msra.mxu0 %v1119
  %2438 = vmatpush.bf16.msra.mxu0 %v1111
  %2439 = vmatpush.bf16.msra.mxu0 %v1103
  %2440 = vmatpush.bf16.msra.mxu0 %v1095
  %2441 = vmatpush.bf16.msra.mxu0 %v1087
  %2442 = vmatpush.bf16.msra.mxu0 %v1079
  %2443 = vmatpush.bf16.msra.mxu0 %v1071
  %2444 = vmatmul.bf16.gmra.mxu0 %v2318
  %v2445 = vpop.f32.mrf.mxu0
  %v2446 = vadd.f32 %v2433, %v2445
  %v2447 = vpop.f32.mrf.mxu0
  %2448 = vdwg.mxu0
  %2449 = vmatpush.bf16.msra.mxu0 %v1064
  %2450 = vmatpush.bf16.msra.mxu0 %v1056
  %2451 = vmatpush.bf16.msra.mxu0 %v1048
  %2452 = vmatpush.bf16.msra.mxu0 %v1040
  %2453 = vmatpush.bf16.msra.mxu0 %v1032
  %2454 = vmatpush.bf16.msra.mxu0 %v1024
  %2455 = vmatpush.bf16.msra.mxu0 %v1016
  %2456 = vmatpush.bf16.msra.mxu0 %v1008
  %2457 = vmatmul.bf16.gmra.mxu0 %v2317
  %v2458 = vpop.f32.mrf.mxu0
  %v2459 = vadd.f32 0.0, %v2458
  %v2460 = vpop.f32.mrf.mxu0
  %2461 = vdwg.mxu0
  %2462 = vmatpush.bf16.msra.mxu0 %v1128
  %2463 = vmatpush.bf16.msra.mxu0 %v1120
  %2464 = vmatpush.bf16.msra.mxu0 %v1112
  %2465 = vmatpush.bf16.msra.mxu0 %v1104
  %2466 = vmatpush.bf16.msra.mxu0 %v1096
  %2467 = vmatpush.bf16.msra.mxu0 %v1088
  %2468 = vmatpush.bf16.msra.mxu0 %v1080
  %2469 = vmatpush.bf16.msra.mxu0 %v1072
  %2470 = vmatmul.bf16.gmra.mxu0 %v2318
  %v2471 = vpop.f32.mrf.mxu0
  %v2472 = vadd.f32 %v2459, %v2471
  %v2473 = vpop.f32.mrf.mxu0
  %2474 = vdwg.mxu0
  %2475 = vmatpush.bf16.msra.mxu0 %v1065
  %2476 = vmatpush.bf16.msra.mxu0 %v1057
  %2477 = vmatpush.bf16.msra.mxu0 %v1049
  %2478 = vmatpush.bf16.msra.mxu0 %v1041
  %2479 = vmatpush.bf16.msra.mxu0 %v1033
  %2480 = vmatpush.bf16.msra.mxu0 %v1025
  %2481 = vmatpush.bf16.msra.mxu0 %v1017
  %2482 = vmatpush.bf16.msra.mxu0 %v1009
  %2483 = vmatmul.bf16.gmra.mxu0 %v2317
  %v2484 = vpop.f32.mrf.mxu0
  %v2485 = vadd.f32 0.0, %v2484
  %v2486 = vpop.f32.mrf.mxu0
  %2487 = vdwg.mxu0
  %2488 = vmatpush.bf16.msra.mxu0 %v1129
  %2489 = vmatpush.bf16.msra.mxu0 %v1121
  %2490 = vmatpush.bf16.msra.mxu0 %v1113
  %2491 = vmatpush.bf16.msra.mxu0 %v1105
  %2492 = vmatpush.bf16.msra.mxu0 %v1097
  %2493 = vmatpush.bf16.msra.mxu0 %v1089
  %2494 = vmatpush.bf16.msra.mxu0 %v1081
  %2495 = vmatpush.bf16.msra.mxu0 %v1073
  %2496 = vmatmul.bf16.gmra.mxu0 %v2318
  %v2497 = vpop.f32.mrf.mxu0
  %v2498 = vadd.f32 %v2485, %v2497
  %v2499 = vpop.f32.mrf.mxu0
  %2500 = vdwg.mxu0
  %2501 = vmatpush.bf16.msra.mxu0 %v1066
  %2502 = vmatpush.bf16.msra.mxu0 %v1058
  %2503 = vmatpush.bf16.msra.mxu0 %v1050
  %2504 = vmatpush.bf16.msra.mxu0 %v1042
  %2505 = vmatpush.bf16.msra.mxu0 %v1034
  %2506 = vmatpush.bf16.msra.mxu0 %v1026
  %2507 = vmatpush.bf16.msra.mxu0 %v1018
  %2508 = vmatpush.bf16.msra.mxu0 %v1010
  %2509 = vmatmul.bf16.gmra.mxu0 %v2317
  %v2510 = vpop.f32.mrf.mxu0
  %v2511 = vadd.f32 0.0, %v2510
  %v2512 = vpop.f32.mrf.mxu0
  %2513 = vdwg.mxu0
  %2514 = vmatpush.bf16.msra.mxu0 %v1130
  %2515 = vmatpush.bf16.msra.mxu0 %v1122
  %2516 = vmatpush.bf16.msra.mxu0 %v1114
  %2517 = vmatpush.bf16.msra.mxu0 %v1106
  %2518 = vmatpush.bf16.msra.mxu0 %v1098
  %2519 = vmatpush.bf16.msra.mxu0 %v1090
  %2520 = vmatpush.bf16.msra.mxu0 %v1082
  %2521 = vmatpush.bf16.msra.mxu0 %v1074
  %2522 = vmatmul.bf16.gmra.mxu0 %v2318
  %v2523 = vpop.f32.mrf.mxu0
  %v2524 = vadd.f32 %v2511, %v2523
  %v2525 = vpop.f32.mrf.mxu0
  %2526 = vdwg.mxu0
  %s2527 = smul.u32 4, 8
  %s2528 = smul.addr %s2527, 8
  %s2529 = scalar_lea.vmem [#allocation2], %s2528
  %v2530 = vld [vmem:[%s2529] sm:$0xff]
  %v2531 = vld [vmem:[%s2529 + $0x8] sm:$0xff]
  %v2532 = vld [vmem:[%s2529 + $0x10] sm:$0xff]
  %v2533 = vld [vmem:[%s2529 + $0x18] sm:$0xff]
  %v2534 = vld [vmem:[%s2529 + $0x20] sm:$0xff]
  %v2535 = vld [vmem:[%s2529 + $0x28] sm:$0xff]
  %v2536 = vld [vmem:[%s2529 + $0x30] sm:$0xff]
  %v2537 = vld [vmem:[%s2529 + $0x38] sm:$0xff]
  %v2538 = vadd.f32 %v2530, %v2342
  %v2539 = vadd.f32 %v2531, %v2368
  %v2540 = vadd.f32 %v2532, %v2394
  %v2541 = vadd.f32 %v2533, %v2420
  %v2542 = vadd.f32 %v2534, %v2446
  %v2543 = vadd.f32 %v2535, %v2472
  %v2544 = vadd.f32 %v2536, %v2498
  %v2545 = vadd.f32 %v2537, %v2524
  %v2546 = vmul.f32 %v2538, 0.5
  %v2547 = vmul.f32 %v2539, 0.5
  %v2548 = vtanh.pop %v2546
  %v2549 = vtanh.pop %v2547
  %v2550 = vadd.f32 %v2548, 1.0
  %v2551 = vadd.f32 %v2549, 1.0
  %v2552 = vmul.f32 %v2550, 0.5
  %v2553 = vmul.f32 %v2551, 0.5
  %v2554 = vmul.f32 %v2540, 0.5
  %v2555 = vmul.f32 %v2541, 0.5
  %v2556 = vtanh.pop %v2554
  %v2557 = vtanh.pop %v2555
  %v2558 = vadd.f32 %v2556, 1.0
  %v2559 = vadd.f32 %v2557, 1.0
  %v2560 = vmul.f32 %v2558, 0.5
  %v2561 = vmul.f32 %v2559, 0.5
  %v2562 = vtanh.pop %v2542
  %v2563 = vtanh.pop %v2543
  %v2564 = vmul.f32 %v2544, 0.5
  %v2565 = vmul.f32 %v2545, 0.5
  %v2566 = vtanh.pop %v2564
  %v2567 = vtanh.pop %v2565
  %v2568 = vadd.f32 %v2566, 1.0
  %v2569 = vadd.f32 %v2567, 1.0
  %v2570 = vmul.f32 %v2568, 0.5
  %v2571 = vmul.f32 %v2569, 0.5
  %v2572 = vmul.f32 %v2560, %v2311
  %v2573 = vmul.f32 %v2561, %v2312
  %v2574 = vmul.f32 %v2552, %v2562
  %v2575 = vmul.f32 %v2553, %v2563
  %v2576 = vadd.f32 %v2572, %v2574
  %v2577 = vadd.f32 %v2573, %v2575
  %v2578 = vtanh.pop %v2576
  %v2579 = vtanh.pop %v2577
  %v2580 = vmul.f32 %v2570, %v2578
  %v2581 = vmul.f32 %v2571, %v2579
  %v2582 = vpack.c.bf16 %v2580, %v2580
  %v2583 = vpack.c.bf16 %v2581, %v2581
  %2584 = vmatpush.bf16.msra.mxu0 %v1059
  %2585 = vmatpush.bf16.msra.mxu0 %v1051
  %2586 = vmatpush.bf16.msra.mxu0 %v1043
  %2587 = vmatpush.bf16.msra.mxu0 %v1035
  %2588 = vmatpush.bf16.msra.mxu0 %v1027
  %2589 = vmatpush.bf16.msra.mxu0 %v1019
  %2590 = vmatpush.bf16.msra.mxu0 %v1011
  %2591 = vmatpush.bf16.msra.mxu0 %v1003
  %2592 = vmatmul.bf16.gmra.mxu0 %v2582
  %v2593 = vpop.f32.mrf.mxu0
  %v2594 = vadd.f32 0.0, %v2593
  %v2595 = vpop.f32.mrf.mxu0
  %2596 = vdwg.mxu0
  %2597 = vmatpush.bf16.msra.mxu0 %v1123
  %2598 = vmatpush.bf16.msra.mxu0 %v1115
  %2599 = vmatpush.bf16.msra.mxu0 %v1107
  %2600 = vmatpush.bf16.msra.mxu0 %v1099
  %2601 = vmatpush.bf16.msra.mxu0 %v1091
  %2602 = vmatpush.bf16.msra.mxu0 %v1083
  %2603 = vmatpush.bf16.msra.mxu0 %v1075
  %2604 = vmatpush.bf16.msra.mxu0 %v1067
  %2605 = vmatmul.bf16.gmra.mxu0 %v2583
  %v2606 = vpop.f32.mrf.mxu0
  %v2607 = vadd.f32 %v2594, %v2606
  %v2608 = vpop.f32.mrf.mxu0
  %2609 = vdwg.mxu0
  %2610 = vmatpush.bf16.msra.mxu0 %v1060
  %2611 = vmatpush.bf16.msra.mxu0 %v1052
  %2612 = vmatpush.bf16.msra.mxu0 %v1044
  %2613 = vmatpush.bf16.msra.mxu0 %v1036
  %2614 = vmatpush.bf16.msra.mxu0 %v1028
  %2615 = vmatpush.bf16.msra.mxu0 %v1020
  %2616 = vmatpush.bf16.msra.mxu0 %v1012
  %2617 = vmatpush.bf16.msra.mxu0 %v1004
  %2618 = vmatmul.bf16.gmra.mxu0 %v2582
  %v2619 = vpop.f32.mrf.mxu0
  %v2620 = vadd.f32 0.0, %v2619
  %v2621 = vpop.f32.mrf.mxu0
  %2622 = vdwg.mxu0
  %2623 = vmatpush.bf16.msra.mxu0 %v1124
  %2624 = vmatpush.bf16.msra.mxu0 %v1116
  %2625 = vmatpush.bf16.msra.mxu0 %v1108
  %2626 = vmatpush.bf16.msra.mxu0 %v1100
  %2627 = vmatpush.bf16.msra.mxu0 %v1092
  %2628 = vmatpush.bf16.msra.mxu0 %v1084
  %2629 = vmatpush.bf16.msra.mxu0 %v1076
  %2630 = vmatpush.bf16.msra.mxu0 %v1068
  %2631 = vmatmul.bf16.gmra.mxu0 %v2583
  %v2632 = vpop.f32.mrf.mxu0
  %v2633 = vadd.f32 %v2620, %v2632
  %v2634 = vpop.f32.mrf.mxu0
  %2635 = vdwg.mxu0
  %2636 = vmatpush.bf16.msra.mxu0 %v1061
  %2637 = vmatpush.bf16.msra.mxu0 %v1053
  %2638 = vmatpush.bf16.msra.mxu0 %v1045
  %2639 = vmatpush.bf16.msra.mxu0 %v1037
  %2640 = vmatpush.bf16.msra.mxu0 %v1029
  %2641 = vmatpush.bf16.msra.mxu0 %v1021
  %2642 = vmatpush.bf16.msra.mxu0 %v1013
  %2643 = vmatpush.bf16.msra.mxu0 %v1005
  %2644 = vmatmul.bf16.gmra.mxu0 %v2582
  %v2645 = vpop.f32.mrf.mxu0
  %v2646 = vadd.f32 0.0, %v2645
  %v2647 = vpop.f32.mrf.mxu0
  %2648 = vdwg.mxu0
  %2649 = vmatpush.bf16.msra.mxu0 %v1125
  %2650 = vmatpush.bf16.msra.mxu0 %v1117
  %2651 = vmatpush.bf16.msra.mxu0 %v1109
  %2652 = vmatpush.bf16.msra.mxu0 %v1101
  %2653 = vmatpush.bf16.msra.mxu0 %v1093
  %2654 = vmatpush.bf16.msra.mxu0 %v1085
  %2655 = vmatpush.bf16.msra.mxu0 %v1077
  %2656 = vmatpush.bf16.msra.mxu0 %v1069
  %2657 = vmatmul.bf16.gmra.mxu0 %v2583
  %v2658 = vpop.f32.mrf.mxu0
  %v2659 = vadd.f32 %v2646, %v2658
  %v2660 = vpop.f32.mrf.mxu0
  %2661 = vdwg.mxu0
  %2662 = vmatpush.bf16.msra.mxu0 %v1062
  %2663 = vmatpush.bf16.msra.mxu0 %v1054
  %2664 = vmatpush.bf16.msra.mxu0 %v1046
  %2665 = vmatpush.bf16.msra.mxu0 %v1038
  %2666 = vmatpush.bf16.msra.mxu0 %v1030
  %2667 = vmatpush.bf16.msra.mxu0 %v1022
  %2668 = vmatpush.bf16.msra.mxu0 %v1014
  %2669 = vmatpush.bf16.msra.mxu0 %v1006
  %2670 = vmatmul.bf16.gmra.mxu0 %v2582
  %v2671 = vpop.f32.mrf.mxu0
  %v2672 = vadd.f32 0.0, %v2671
  %v2673 = vpop.f32.mrf.mxu0
  %2674 = vdwg.mxu0
  %2675 = vmatpush.bf16.msra.mxu0 %v1126
  %2676 = vmatpush.bf16.msra.mxu0 %v1118
  %2677 = vmatpush.bf16.msra.mxu0 %v1110
  %2678 = vmatpush.bf16.msra.mxu0 %v1102
  %2679 = vmatpush.bf16.msra.mxu0 %v1094
  %2680 = vmatpush.bf16.msra.mxu0 %v1086
  %2681 = vmatpush.bf16.msra.mxu0 %v1078
  %2682 = vmatpush.bf16.msra.mxu0 %v1070
  %2683 = vmatmul.bf16.gmra.mxu0 %v2583
  %v2684 = vpop.f32.mrf.mxu0
  %v2685 = vadd.f32 %v2672, %v2684
  %v2686 = vpop.f32.mrf.mxu0
  %2687 = vdwg.mxu0
  %2688 = vmatpush.bf16.msra.mxu0 %v1063
  %2689 = vmatpush.bf16.msra.mxu0 %v1055
  %2690 = vmatpush.bf16.msra.mxu0 %v1047
  %2691 = vmatpush.bf16.msra.mxu0 %v1039
  %2692 = vmatpush.bf16.msra.mxu0 %v1031
  %2693 = vmatpush.bf16.msra.mxu0 %v1023
  %2694 = vmatpush.bf16.msra.mxu0 %v1015
  %2695 = vmatpush.bf16.msra.mxu0 %v1007
  %2696 = vmatmul.bf16.gmra.mxu0 %v2582
  %v2697 = vpop.f32.mrf.mxu0
  %v2698 = vadd.f32 0.0, %v2697
  %v2699 = vpop.f32.mrf.mxu0
  %2700 = vdwg.mxu0
  %2701 = vmatpush.bf16.msra.mxu0 %v1127
  %2702 = vmatpush.bf16.msra.mxu0 %v1119
  %2703 = vmatpush.bf16.msra.mxu0 %v1111
  %2704 = vmatpush.bf16.msra.mxu0 %v1103
  %2705 = vmatpush.bf16.msra.mxu0 %v1095
  %2706 = vmatpush.bf16.msra.mxu0 %v1087
  %2707 = vmatpush.bf16.msra.mxu0 %v1079
  %2708 = vmatpush.bf16.msra.mxu0 %v1071
  %2709 = vmatmul.bf16.gmra.mxu0 %v2583
  %v2710 = vpop.f32.mrf.mxu0
  %v2711 = vadd.f32 %v2698, %v2710
  %v2712 = vpop.f32.mrf.mxu0
  %2713 = vdwg.mxu0
  %2714 = vmatpush.bf16.msra.mxu0 %v1064
  %2715 = vmatpush.bf16.msra.mxu0 %v1056
  %2716 = vmatpush.bf16.msra.mxu0 %v1048
  %2717 = vmatpush.bf16.msra.mxu0 %v1040
  %2718 = vmatpush.bf16.msra.mxu0 %v1032
  %2719 = vmatpush.bf16.msra.mxu0 %v1024
  %2720 = vmatpush.bf16.msra.mxu0 %v1016
  %2721 = vmatpush.bf16.msra.mxu0 %v1008
  %2722 = vmatmul.bf16.gmra.mxu0 %v2582
  %v2723 = vpop.f32.mrf.mxu0
  %v2724 = vadd.f32 0.0, %v2723
  %v2725 = vpop.f32.mrf.mxu0
  %2726 = vdwg.mxu0
  %2727 = vmatpush.bf16.msra.mxu0 %v1128
  %2728 = vmatpush.bf16.msra.mxu0 %v1120
  %2729 = vmatpush.bf16.msra.mxu0 %v1112
  %2730 = vmatpush.bf16.msra.mxu0 %v1104
  %2731 = vmatpush.bf16.msra.mxu0 %v1096
  %2732 = vmatpush.bf16.msra.mxu0 %v1088
  %2733 = vmatpush.bf16.msra.mxu0 %v1080
  %2734 = vmatpush.bf16.msra.mxu0 %v1072
  %2735 = vmatmul.bf16.gmra.mxu0 %v2583
  %v2736 = vpop.f32.mrf.mxu0
  %v2737 = vadd.f32 %v2724, %v2736
  %v2738 = vpop.f32.mrf.mxu0
  %2739 = vdwg.mxu0
  %2740 = vmatpush.bf16.msra.mxu0 %v1065
  %2741 = vmatpush.bf16.msra.mxu0 %v1057
  %2742 = vmatpush.bf16.msra.mxu0 %v1049
  %2743 = vmatpush.bf16.msra.mxu0 %v1041
  %2744 = vmatpush.bf16.msra.mxu0 %v1033
  %2745 = vmatpush.bf16.msra.mxu0 %v1025
  %2746 = vmatpush.bf16.msra.mxu0 %v1017
  %2747 = vmatpush.bf16.msra.mxu0 %v1009
  %2748 = vmatmul.bf16.gmra.mxu0 %v2582
  %v2749 = vpop.f32.mrf.mxu0
  %v2750 = vadd.f32 0.0, %v2749
  %v2751 = vpop.f32.mrf.mxu0
  %2752 = vdwg.mxu0
  %2753 = vmatpush.bf16.msra.mxu0 %v1129
  %2754 = vmatpush.bf16.msra.mxu0 %v1121
  %2755 = vmatpush.bf16.msra.mxu0 %v1113
  %2756 = vmatpush.bf16.msra.mxu0 %v1105
  %2757 = vmatpush.bf16.msra.mxu0 %v1097
  %2758 = vmatpush.bf16.msra.mxu0 %v1089
  %2759 = vmatpush.bf16.msra.mxu0 %v1081
  %2760 = vmatpush.bf16.msra.mxu0 %v1073
  %2761 = vmatmul.bf16.gmra.mxu0 %v2583
  %v2762 = vpop.f32.mrf.mxu0
  %v2763 = vadd.f32 %v2750, %v2762
  %v2764 = vpop.f32.mrf.mxu0
  %2765 = vdwg.mxu0
  %2766 = vmatpush.bf16.msra.mxu0 %v1066
  %2767 = vmatpush.bf16.msra.mxu0 %v1058
  %2768 = vmatpush.bf16.msra.mxu0 %v1050
  %2769 = vmatpush.bf16.msra.mxu0 %v1042
  %2770 = vmatpush.bf16.msra.mxu0 %v1034
  %2771 = vmatpush.bf16.msra.mxu0 %v1026
  %2772 = vmatpush.bf16.msra.mxu0 %v1018
  %2773 = vmatpush.bf16.msra.mxu0 %v1010
  %2774 = vmatmul.bf16.gmra.mxu0 %v2582
  %v2775 = vpop.f32.mrf.mxu0
  %v2776 = vadd.f32 0.0, %v2775
  %v2777 = vpop.f32.mrf.mxu0
  %2778 = vdwg.mxu0
  %2779 = vmatpush.bf16.msra.mxu0 %v1130
  %2780 = vmatpush.bf16.msra.mxu0 %v1122
  %2781 = vmatpush.bf16.msra.mxu0 %v1114
  %2782 = vmatpush.bf16.msra.mxu0 %v1106
  %2783 = vmatpush.bf16.msra.mxu0 %v1098
  %2784 = vmatpush.bf16.msra.mxu0 %v1090
  %2785 = vmatpush.bf16.msra.mxu0 %v1082
  %2786 = vmatpush.bf16.msra.mxu0 %v1074
  %2787 = vmatmul.bf16.gmra.mxu0 %v2583
  %v2788 = vpop.f32.mrf.mxu0
  %v2789 = vadd.f32 %v2776, %v2788
  %v2790 = vpop.f32.mrf.mxu0
  %2791 = vdwg.mxu0
  %s2792 = smul.u32 5, 8
  %s2793 = smul.addr %s2792, 8
  %s2794 = scalar_lea.vmem [#allocation2], %s2793
  %v2795 = vld [vmem:[%s2794] sm:$0xff]
  %v2796 = vld [vmem:[%s2794 + $0x8] sm:$0xff]
  %v2797 = vld [vmem:[%s2794 + $0x10] sm:$0xff]
  %v2798 = vld [vmem:[%s2794 + $0x18] sm:$0xff]
  %v2799 = vld [vmem:[%s2794 + $0x20] sm:$0xff]
  %v2800 = vld [vmem:[%s2794 + $0x28] sm:$0xff]
  %v2801 = vld [vmem:[%s2794 + $0x30] sm:$0xff]
  %v2802 = vld [vmem:[%s2794 + $0x38] sm:$0xff]
  %v2803 = vadd.f32 %v2795, %v2607
  %v2804 = vadd.f32 %v2796, %v2633
  %v2805 = vadd.f32 %v2797, %v2659
  %v2806 = vadd.f32 %v2798, %v2685
  %v2807 = vadd.f32 %v2799, %v2711
  %v2808 = vadd.f32 %v2800, %v2737
  %v2809 = vadd.f32 %v2801, %v2763
  %v2810 = vadd.f32 %v2802, %v2789
  %v2811 = vmul.f32 %v2803, 0.5
  %v2812 = vmul.f32 %v2804, 0.5
  %v2813 = vtanh.pop %v2811
  %v2814 = vtanh.pop %v2812
  %v2815 = vadd.f32 %v2813, 1.0
  %v2816 = vadd.f32 %v2814, 1.0
  %v2817 = vmul.f32 %v2815, 0.5
  %v2818 = vmul.f32 %v2816, 0.5
  %v2819 = vmul.f32 %v2805, 0.5
  %v2820 = vmul.f32 %v2806, 0.5
  %v2821 = vtanh.pop %v2819
  %v2822 = vtanh.pop %v2820
  %v2823 = vadd.f32 %v2821, 1.0
  %v2824 = vadd.f32 %v2822, 1.0
  %v2825 = vmul.f32 %v2823, 0.5
  %v2826 = vmul.f32 %v2824, 0.5
  %v2827 = vtanh.pop %v2807
  %v2828 = vtanh.pop %v2808
  %v2829 = vmul.f32 %v2809, 0.5
  %v2830 = vmul.f32 %v2810, 0.5
  %v2831 = vtanh.pop %v2829
  %v2832 = vtanh.pop %v2830
  %v2833 = vadd.f32 %v2831, 1.0
  %v2834 = vadd.f32 %v2832, 1.0
  %v2835 = vmul.f32 %v2833, 0.5
  %v2836 = vmul.f32 %v2834, 0.5
  %v2837 = vmul.f32 %v2825, %v2576
  %v2838 = vmul.f32 %v2826, %v2577
  %v2839 = vmul.f32 %v2817, %v2827
  %v2840 = vmul.f32 %v2818, %v2828
  %v2841 = vadd.f32 %v2837, %v2839
  %v2842 = vadd.f32 %v2838, %v2840
  %v2843 = vtanh.pop %v2841
  %v2844 = vtanh.pop %v2842
  %v2845 = vmul.f32 %v2835, %v2843
  %v2846 = vmul.f32 %v2836, %v2844
  %v2847 = vpack.c.bf16 %v2845, %v2845
  %v2848 = vpack.c.bf16 %v2846, %v2846
  %2849 = vmatpush.bf16.msra.mxu0 %v1059
  %2850 = vmatpush.bf16.msra.mxu0 %v1051
  %2851 = vmatpush.bf16.msra.mxu0 %v1043
  %2852 = vmatpush.bf16.msra.mxu0 %v1035
  %2853 = vmatpush.bf16.msra.mxu0 %v1027
  %2854 = vmatpush.bf16.msra.mxu0 %v1019
  %2855 = vmatpush.bf16.msra.mxu0 %v1011
  %2856 = vmatpush.bf16.msra.mxu0 %v1003
  %2857 = vmatmul.bf16.gmra.mxu0 %v2847
  %v2858 = vpop.f32.mrf.mxu0
  %v2859 = vadd.f32 0.0, %v2858
  %v2860 = vpop.f32.mrf.mxu0
  %2861 = vdwg.mxu0
  %2862 = vmatpush.bf16.msra.mxu0 %v1123
  %2863 = vmatpush.bf16.msra.mxu0 %v1115
  %2864 = vmatpush.bf16.msra.mxu0 %v1107
  %2865 = vmatpush.bf16.msra.mxu0 %v1099
  %2866 = vmatpush.bf16.msra.mxu0 %v1091
  %2867 = vmatpush.bf16.msra.mxu0 %v1083
  %2868 = vmatpush.bf16.msra.mxu0 %v1075
  %2869 = vmatpush.bf16.msra.mxu0 %v1067
  %2870 = vmatmul.bf16.gmra.mxu0 %v2848
  %v2871 = vpop.f32.mrf.mxu0
  %v2872 = vadd.f32 %v2859, %v2871
  %v2873 = vpop.f32.mrf.mxu0
  %2874 = vdwg.mxu0
  %2875 = vmatpush.bf16.msra.mxu0 %v1060
  %2876 = vmatpush.bf16.msra.mxu0 %v1052
  %2877 = vmatpush.bf16.msra.mxu0 %v1044
  %2878 = vmatpush.bf16.msra.mxu0 %v1036
  %2879 = vmatpush.bf16.msra.mxu0 %v1028
  %2880 = vmatpush.bf16.msra.mxu0 %v1020
  %2881 = vmatpush.bf16.msra.mxu0 %v1012
  %2882 = vmatpush.bf16.msra.mxu0 %v1004
  %2883 = vmatmul.bf16.gmra.mxu0 %v2847
  %v2884 = vpop.f32.mrf.mxu0
  %v2885 = vadd.f32 0.0, %v2884
  %v2886 = vpop.f32.mrf.mxu0
  %2887 = vdwg.mxu0
  %2888 = vmatpush.bf16.msra.mxu0 %v1124
  %2889 = vmatpush.bf16.msra.mxu0 %v1116
  %2890 = vmatpush.bf16.msra.mxu0 %v1108
  %2891 = vmatpush.bf16.msra.mxu0 %v1100
  %2892 = vmatpush.bf16.msra.mxu0 %v1092
  %2893 = vmatpush.bf16.msra.mxu0 %v1084
  %2894 = vmatpush.bf16.msra.mxu0 %v1076
  %2895 = vmatpush.bf16.msra.mxu0 %v1068
  %2896 = vmatmul.bf16.gmra.mxu0 %v2848
  %v2897 = vpop.f32.mrf.mxu0
  %v2898 = vadd.f32 %v2885, %v2897
  %v2899 = vpop.f32.mrf.mxu0
  %2900 = vdwg.mxu0
  %2901 = vmatpush.bf16.msra.mxu0 %v1061
  %2902 = vmatpush.bf16.msra.mxu0 %v1053
  %2903 = vmatpush.bf16.msra.mxu0 %v1045
  %2904 = vmatpush.bf16.msra.mxu0 %v1037
  %2905 = vmatpush.bf16.msra.mxu0 %v1029
  %2906 = vmatpush.bf16.msra.mxu0 %v1021
  %2907 = vmatpush.bf16.msra.mxu0 %v1013
  %2908 = vmatpush.bf16.msra.mxu0 %v1005
  %2909 = vmatmul.bf16.gmra.mxu0 %v2847
  %v2910 = vpop.f32.mrf.mxu0
  %v2911 = vadd.f32 0.0, %v2910
  %v2912 = vpop.f32.mrf.mxu0
  %2913 = vdwg.mxu0
  %2914 = vmatpush.bf16.msra.mxu0 %v1125
  %2915 = vmatpush.bf16.msra.mxu0 %v1117
  %2916 = vmatpush.bf16.msra.mxu0 %v1109
  %2917 = vmatpush.bf16.msra.mxu0 %v1101
  %2918 = vmatpush.bf16.msra.mxu0 %v1093
  %2919 = vmatpush.bf16.msra.mxu0 %v1085
  %2920 = vmatpush.bf16.msra.mxu0 %v1077
  %2921 = vmatpush.bf16.msra.mxu0 %v1069
  %2922 = vmatmul.bf16.gmra.mxu0 %v2848
  %v2923 = vpop.f32.mrf.mxu0
  %v2924 = vadd.f32 %v2911, %v2923
  %v2925 = vpop.f32.mrf.mxu0
  %2926 = vdwg.mxu0
  %2927 = vmatpush.bf16.msra.mxu0 %v1062
  %2928 = vmatpush.bf16.msra.mxu0 %v1054
  %2929 = vmatpush.bf16.msra.mxu0 %v1046
  %2930 = vmatpush.bf16.msra.mxu0 %v1038
  %2931 = vmatpush.bf16.msra.mxu0 %v1030
  %2932 = vmatpush.bf16.msra.mxu0 %v1022
  %2933 = vmatpush.bf16.msra.mxu0 %v1014
  %2934 = vmatpush.bf16.msra.mxu0 %v1006
  %2935 = vmatmul.bf16.gmra.mxu0 %v2847
  %v2936 = vpop.f32.mrf.mxu0
  %v2937 = vadd.f32 0.0, %v2936
  %v2938 = vpop.f32.mrf.mxu0
  %2939 = vdwg.mxu0
  %2940 = vmatpush.bf16.msra.mxu0 %v1126
  %2941 = vmatpush.bf16.msra.mxu0 %v1118
  %2942 = vmatpush.bf16.msra.mxu0 %v1110
  %2943 = vmatpush.bf16.msra.mxu0 %v1102
  %2944 = vmatpush.bf16.msra.mxu0 %v1094
  %2945 = vmatpush.bf16.msra.mxu0 %v1086
  %2946 = vmatpush.bf16.msra.mxu0 %v1078
  %2947 = vmatpush.bf16.msra.mxu0 %v1070
  %2948 = vmatmul.bf16.gmra.mxu0 %v2848
  %v2949 = vpop.f32.mrf.mxu0
  %v2950 = vadd.f32 %v2937, %v2949
  %v2951 = vpop.f32.mrf.mxu0
  %2952 = vdwg.mxu0
  %2953 = vmatpush.bf16.msra.mxu0 %v1063
  %2954 = vmatpush.bf16.msra.mxu0 %v1055
  %2955 = vmatpush.bf16.msra.mxu0 %v1047
  %2956 = vmatpush.bf16.msra.mxu0 %v1039
  %2957 = vmatpush.bf16.msra.mxu0 %v1031
  %2958 = vmatpush.bf16.msra.mxu0 %v1023
  %2959 = vmatpush.bf16.msra.mxu0 %v1015
  %2960 = vmatpush.bf16.msra.mxu0 %v1007
  %2961 = vmatmul.bf16.gmra.mxu0 %v2847
  %v2962 = vpop.f32.mrf.mxu0
  %v2963 = vadd.f32 0.0, %v2962
  %v2964 = vpop.f32.mrf.mxu0
  %2965 = vdwg.mxu0
  %2966 = vmatpush.bf16.msra.mxu0 %v1127
  %2967 = vmatpush.bf16.msra.mxu0 %v1119
  %2968 = vmatpush.bf16.msra.mxu0 %v1111
  %2969 = vmatpush.bf16.msra.mxu0 %v1103
  %2970 = vmatpush.bf16.msra.mxu0 %v1095
  %2971 = vmatpush.bf16.msra.mxu0 %v1087
  %2972 = vmatpush.bf16.msra.mxu0 %v1079
  %2973 = vmatpush.bf16.msra.mxu0 %v1071
  %2974 = vmatmul.bf16.gmra.mxu0 %v2848
  %v2975 = vpop.f32.mrf.mxu0
  %v2976 = vadd.f32 %v2963, %v2975
  %v2977 = vpop.f32.mrf.mxu0
  %2978 = vdwg.mxu0
  %2979 = vmatpush.bf16.msra.mxu0 %v1064
  %2980 = vmatpush.bf16.msra.mxu0 %v1056
  %2981 = vmatpush.bf16.msra.mxu0 %v1048
  %2982 = vmatpush.bf16.msra.mxu0 %v1040
  %2983 = vmatpush.bf16.msra.mxu0 %v1032
  %2984 = vmatpush.bf16.msra.mxu0 %v1024
  %2985 = vmatpush.bf16.msra.mxu0 %v1016
  %2986 = vmatpush.bf16.msra.mxu0 %v1008
  %2987 = vmatmul.bf16.gmra.mxu0 %v2847
  %v2988 = vpop.f32.mrf.mxu0
  %v2989 = vadd.f32 0.0, %v2988
  %v2990 = vpop.f32.mrf.mxu0
  %2991 = vdwg.mxu0
  %2992 = vmatpush.bf16.msra.mxu0 %v1128
  %2993 = vmatpush.bf16.msra.mxu0 %v1120
  %2994 = vmatpush.bf16.msra.mxu0 %v1112
  %2995 = vmatpush.bf16.msra.mxu0 %v1104
  %2996 = vmatpush.bf16.msra.mxu0 %v1096
  %2997 = vmatpush.bf16.msra.mxu0 %v1088
  %2998 = vmatpush.bf16.msra.mxu0 %v1080
  %2999 = vmatpush.bf16.msra.mxu0 %v1072
  %3000 = vmatmul.bf16.gmra.mxu0 %v2848
  %v3001 = vpop.f32.mrf.mxu0
  %v3002 = vadd.f32 %v2989, %v3001
  %v3003 = vpop.f32.mrf.mxu0
  %3004 = vdwg.mxu0
  %3005 = vmatpush.bf16.msra.mxu0 %v1065
  %3006 = vmatpush.bf16.msra.mxu0 %v1057
  %3007 = vmatpush.bf16.msra.mxu0 %v1049
  %3008 = vmatpush.bf16.msra.mxu0 %v1041
  %3009 = vmatpush.bf16.msra.mxu0 %v1033
  %3010 = vmatpush.bf16.msra.mxu0 %v1025
  %3011 = vmatpush.bf16.msra.mxu0 %v1017
  %3012 = vmatpush.bf16.msra.mxu0 %v1009
  %3013 = vmatmul.bf16.gmra.mxu0 %v2847
  %v3014 = vpop.f32.mrf.mxu0
  %v3015 = vadd.f32 0.0, %v3014
  %v3016 = vpop.f32.mrf.mxu0
  %3017 = vdwg.mxu0
  %3018 = vmatpush.bf16.msra.mxu0 %v1129
  %3019 = vmatpush.bf16.msra.mxu0 %v1121
  %3020 = vmatpush.bf16.msra.mxu0 %v1113
  %3021 = vmatpush.bf16.msra.mxu0 %v1105
  %3022 = vmatpush.bf16.msra.mxu0 %v1097
  %3023 = vmatpush.bf16.msra.mxu0 %v1089
  %3024 = vmatpush.bf16.msra.mxu0 %v1081
  %3025 = vmatpush.bf16.msra.mxu0 %v1073
  %3026 = vmatmul.bf16.gmra.mxu0 %v2848
  %v3027 = vpop.f32.mrf.mxu0
  %v3028 = vadd.f32 %v3015, %v3027
  %v3029 = vpop.f32.mrf.mxu0
  %3030 = vdwg.mxu0
  %3031 = vmatpush.bf16.msra.mxu0 %v1066
  %3032 = vmatpush.bf16.msra.mxu0 %v1058
  %3033 = vmatpush.bf16.msra.mxu0 %v1050
  %3034 = vmatpush.bf16.msra.mxu0 %v1042
  %3035 = vmatpush.bf16.msra.mxu0 %v1034
  %3036 = vmatpush.bf16.msra.mxu0 %v1026
  %3037 = vmatpush.bf16.msra.mxu0 %v1018
  %3038 = vmatpush.bf16.msra.mxu0 %v1010
  %3039 = vmatmul.bf16.gmra.mxu0 %v2847
  %v3040 = vpop.f32.mrf.mxu0
  %v3041 = vadd.f32 0.0, %v3040
  %v3042 = vpop.f32.mrf.mxu0
  %3043 = vdwg.mxu0
  %3044 = vmatpush.bf16.msra.mxu0 %v1130
  %3045 = vmatpush.bf16.msra.mxu0 %v1122
  %3046 = vmatpush.bf16.msra.mxu0 %v1114
  %3047 = vmatpush.bf16.msra.mxu0 %v1106
  %3048 = vmatpush.bf16.msra.mxu0 %v1098
  %3049 = vmatpush.bf16.msra.mxu0 %v1090
  %3050 = vmatpush.bf16.msra.mxu0 %v1082
  %3051 = vmatpush.bf16.msra.mxu0 %v1074
  %3052 = vmatmul.bf16.gmra.mxu0 %v2848
  %v3053 = vpop.f32.mrf.mxu0
  %v3054 = vadd.f32 %v3041, %v3053
  %v3055 = vpop.f32.mrf.mxu0
  %3056 = vdwg.mxu0
  %s3057 = smul.u32 6, 8
  %s3058 = smul.addr %s3057, 8
  %s3059 = scalar_lea.vmem [#allocation2], %s3058
  %v3060 = vld [vmem:[%s3059] sm:$0xff]
  %v3061 = vld [vmem:[%s3059 + $0x8] sm:$0xff]
  %v3062 = vld [vmem:[%s3059 + $0x10] sm:$0xff]
  %v3063 = vld [vmem:[%s3059 + $0x18] sm:$0xff]
  %v3064 = vld [vmem:[%s3059 + $0x20] sm:$0xff]
  %v3065 = vld [vmem:[%s3059 + $0x28] sm:$0xff]
  %v3066 = vld [vmem:[%s3059 + $0x30] sm:$0xff]
  %v3067 = vld [vmem:[%s3059 + $0x38] sm:$0xff]
  %v3068 = vadd.f32 %v3060, %v2872
  %v3069 = vadd.f32 %v3061, %v2898
  %v3070 = vadd.f32 %v3062, %v2924
  %v3071 = vadd.f32 %v3063, %v2950
  %v3072 = vadd.f32 %v3064, %v2976
  %v3073 = vadd.f32 %v3065, %v3002
  %v3074 = vadd.f32 %v3066, %v3028
  %v3075 = vadd.f32 %v3067, %v3054
  %v3076 = vmul.f32 %v3068, 0.5
  %v3077 = vmul.f32 %v3069, 0.5
  %v3078 = vtanh.pop %v3076
  %v3079 = vtanh.pop %v3077
  %v3080 = vadd.f32 %v3078, 1.0
  %v3081 = vadd.f32 %v3079, 1.0
  %v3082 = vmul.f32 %v3080, 0.5
  %v3083 = vmul.f32 %v3081, 0.5
  %v3084 = vmul.f32 %v3070, 0.5
  %v3085 = vmul.f32 %v3071, 0.5
  %v3086 = vtanh.pop %v3084
  %v3087 = vtanh.pop %v3085
  %v3088 = vadd.f32 %v3086, 1.0
  %v3089 = vadd.f32 %v3087, 1.0
  %v3090 = vmul.f32 %v3088, 0.5
  %v3091 = vmul.f32 %v3089, 0.5
  %v3092 = vtanh.pop %v3072
  %v3093 = vtanh.pop %v3073
  %v3094 = vmul.f32 %v3074, 0.5
  %v3095 = vmul.f32 %v3075, 0.5
  %v3096 = vtanh.pop %v3094
  %v3097 = vtanh.pop %v3095
  %v3098 = vadd.f32 %v3096, 1.0
  %v3099 = vadd.f32 %v3097, 1.0
  %v3100 = vmul.f32 %v3098, 0.5
  %v3101 = vmul.f32 %v3099, 0.5
  %v3102 = vmul.f32 %v3090, %v2841
  %v3103 = vmul.f32 %v3091, %v2842
  %v3104 = vmul.f32 %v3082, %v3092
  %v3105 = vmul.f32 %v3083, %v3093
  %v3106 = vadd.f32 %v3102, %v3104
  %v3107 = vadd.f32 %v3103, %v3105
  %v3108 = vtanh.pop %v3106
  %v3109 = vtanh.pop %v3107
  %v3110 = vmul.f32 %v3100, %v3108
  %v3111 = vmul.f32 %v3101, %v3109
  %v3112 = vpack.c.bf16 %v3110, %v3110
  %v3113 = vpack.c.bf16 %v3111, %v3111
  %3114 = vmatpush.bf16.msra.mxu0 %v1059
  %3115 = vmatpush.bf16.msra.mxu0 %v1051
  %3116 = vmatpush.bf16.msra.mxu0 %v1043
  %3117 = vmatpush.bf16.msra.mxu0 %v1035
  %3118 = vmatpush.bf16.msra.mxu0 %v1027
  %3119 = vmatpush.bf16.msra.mxu0 %v1019
  %3120 = vmatpush.bf16.msra.mxu0 %v1011
  %3121 = vmatpush.bf16.msra.mxu0 %v1003
  %3122 = vmatmul.bf16.gmra.mxu0 %v3112
  %v3123 = vpop.f32.mrf.mxu0
  %v3124 = vadd.f32 0.0, %v3123
  %v3125 = vpop.f32.mrf.mxu0
  %3126 = vdwg.mxu0
  %3127 = vmatpush.bf16.msra.mxu0 %v1123
  %3128 = vmatpush.bf16.msra.mxu0 %v1115
  %3129 = vmatpush.bf16.msra.mxu0 %v1107
  %3130 = vmatpush.bf16.msra.mxu0 %v1099
  %3131 = vmatpush.bf16.msra.mxu0 %v1091
  %3132 = vmatpush.bf16.msra.mxu0 %v1083
  %3133 = vmatpush.bf16.msra.mxu0 %v1075
  %3134 = vmatpush.bf16.msra.mxu0 %v1067
  %3135 = vmatmul.bf16.gmra.mxu0 %v3113
  %v3136 = vpop.f32.mrf.mxu0
  %v3137 = vadd.f32 %v3124, %v3136
  %v3138 = vpop.f32.mrf.mxu0
  %3139 = vdwg.mxu0
  %3140 = vmatpush.bf16.msra.mxu0 %v1060
  %3141 = vmatpush.bf16.msra.mxu0 %v1052
  %3142 = vmatpush.bf16.msra.mxu0 %v1044
  %3143 = vmatpush.bf16.msra.mxu0 %v1036
  %3144 = vmatpush.bf16.msra.mxu0 %v1028
  %3145 = vmatpush.bf16.msra.mxu0 %v1020
  %3146 = vmatpush.bf16.msra.mxu0 %v1012
  %3147 = vmatpush.bf16.msra.mxu0 %v1004
  %3148 = vmatmul.bf16.gmra.mxu0 %v3112
  %v3149 = vpop.f32.mrf.mxu0
  %v3150 = vadd.f32 0.0, %v3149
  %v3151 = vpop.f32.mrf.mxu0
  %3152 = vdwg.mxu0
  %3153 = vmatpush.bf16.msra.mxu0 %v1124
  %3154 = vmatpush.bf16.msra.mxu0 %v1116
  %3155 = vmatpush.bf16.msra.mxu0 %v1108
  %3156 = vmatpush.bf16.msra.mxu0 %v1100
  %3157 = vmatpush.bf16.msra.mxu0 %v1092
  %3158 = vmatpush.bf16.msra.mxu0 %v1084
  %3159 = vmatpush.bf16.msra.mxu0 %v1076
  %3160 = vmatpush.bf16.msra.mxu0 %v1068
  %3161 = vmatmul.bf16.gmra.mxu0 %v3113
  %v3162 = vpop.f32.mrf.mxu0
  %v3163 = vadd.f32 %v3150, %v3162
  %v3164 = vpop.f32.mrf.mxu0
  %3165 = vdwg.mxu0
  %3166 = vmatpush.bf16.msra.mxu0 %v1061
  %3167 = vmatpush.bf16.msra.mxu0 %v1053
  %3168 = vmatpush.bf16.msra.mxu0 %v1045
  %3169 = vmatpush.bf16.msra.mxu0 %v1037
  %3170 = vmatpush.bf16.msra.mxu0 %v1029
  %3171 = vmatpush.bf16.msra.mxu0 %v1021
  %3172 = vmatpush.bf16.msra.mxu0 %v1013
  %3173 = vmatpush.bf16.msra.mxu0 %v1005
  %3174 = vmatmul.bf16.gmra.mxu0 %v3112
  %v3175 = vpop.f32.mrf.mxu0
  %v3176 = vadd.f32 0.0, %v3175
  %v3177 = vpop.f32.mrf.mxu0
  %3178 = vdwg.mxu0
  %3179 = vmatpush.bf16.msra.mxu0 %v1125
  %3180 = vmatpush.bf16.msra.mxu0 %v1117
  %3181 = vmatpush.bf16.msra.mxu0 %v1109
  %3182 = vmatpush.bf16.msra.mxu0 %v1101
  %3183 = vmatpush.bf16.msra.mxu0 %v1093
  %3184 = vmatpush.bf16.msra.mxu0 %v1085
  %3185 = vmatpush.bf16.msra.mxu0 %v1077
  %3186 = vmatpush.bf16.msra.mxu0 %v1069
  %3187 = vmatmul.bf16.gmra.mxu0 %v3113
  %v3188 = vpop.f32.mrf.mxu0
  %v3189 = vadd.f32 %v3176, %v3188
  %v3190 = vpop.f32.mrf.mxu0
  %3191 = vdwg.mxu0
  %3192 = vmatpush.bf16.msra.mxu0 %v1062
  %3193 = vmatpush.bf16.msra.mxu0 %v1054
  %3194 = vmatpush.bf16.msra.mxu0 %v1046
  %3195 = vmatpush.bf16.msra.mxu0 %v1038
  %3196 = vmatpush.bf16.msra.mxu0 %v1030
  %3197 = vmatpush.bf16.msra.mxu0 %v1022
  %3198 = vmatpush.bf16.msra.mxu0 %v1014
  %3199 = vmatpush.bf16.msra.mxu0 %v1006
  %3200 = vmatmul.bf16.gmra.mxu0 %v3112
  %v3201 = vpop.f32.mrf.mxu0
  %v3202 = vadd.f32 0.0, %v3201
  %v3203 = vpop.f32.mrf.mxu0
  %3204 = vdwg.mxu0
  %3205 = vmatpush.bf16.msra.mxu0 %v1126
  %3206 = vmatpush.bf16.msra.mxu0 %v1118
  %3207 = vmatpush.bf16.msra.mxu0 %v1110
  %3208 = vmatpush.bf16.msra.mxu0 %v1102
  %3209 = vmatpush.bf16.msra.mxu0 %v1094
  %3210 = vmatpush.bf16.msra.mxu0 %v1086
  %3211 = vmatpush.bf16.msra.mxu0 %v1078
  %3212 = vmatpush.bf16.msra.mxu0 %v1070
  %3213 = vmatmul.bf16.gmra.mxu0 %v3113
  %v3214 = vpop.f32.mrf.mxu0
  %v3215 = vadd.f32 %v3202, %v3214
  %v3216 = vpop.f32.mrf.mxu0
  %3217 = vdwg.mxu0
  %3218 = vmatpush.bf16.msra.mxu0 %v1063
  %3219 = vmatpush.bf16.msra.mxu0 %v1055
  %3220 = vmatpush.bf16.msra.mxu0 %v1047
  %3221 = vmatpush.bf16.msra.mxu0 %v1039
  %3222 = vmatpush.bf16.msra.mxu0 %v1031
  %3223 = vmatpush.bf16.msra.mxu0 %v1023
  %3224 = vmatpush.bf16.msra.mxu0 %v1015
  %3225 = vmatpush.bf16.msra.mxu0 %v1007
  %3226 = vmatmul.bf16.gmra.mxu0 %v3112
  %v3227 = vpop.f32.mrf.mxu0
  %v3228 = vadd.f32 0.0, %v3227
  %v3229 = vpop.f32.mrf.mxu0
  %3230 = vdwg.mxu0
  %3231 = vmatpush.bf16.msra.mxu0 %v1127
  %3232 = vmatpush.bf16.msra.mxu0 %v1119
  %3233 = vmatpush.bf16.msra.mxu0 %v1111
  %3234 = vmatpush.bf16.msra.mxu0 %v1103
  %3235 = vmatpush.bf16.msra.mxu0 %v1095
  %3236 = vmatpush.bf16.msra.mxu0 %v1087
  %3237 = vmatpush.bf16.msra.mxu0 %v1079
  %3238 = vmatpush.bf16.msra.mxu0 %v1071
  %3239 = vmatmul.bf16.gmra.mxu0 %v3113
  %v3240 = vpop.f32.mrf.mxu0
  %v3241 = vadd.f32 %v3228, %v3240
  %v3242 = vpop.f32.mrf.mxu0
  %3243 = vdwg.mxu0
  %3244 = vmatpush.bf16.msra.mxu0 %v1064
  %3245 = vmatpush.bf16.msra.mxu0 %v1056
  %3246 = vmatpush.bf16.msra.mxu0 %v1048
  %3247 = vmatpush.bf16.msra.mxu0 %v1040
  %3248 = vmatpush.bf16.msra.mxu0 %v1032
  %3249 = vmatpush.bf16.msra.mxu0 %v1024
  %3250 = vmatpush.bf16.msra.mxu0 %v1016
  %3251 = vmatpush.bf16.msra.mxu0 %v1008
  %3252 = vmatmul.bf16.gmra.mxu0 %v3112
  %v3253 = vpop.f32.mrf.mxu0
  %v3254 = vadd.f32 0.0, %v3253
  %v3255 = vpop.f32.mrf.mxu0
  %3256 = vdwg.mxu0
  %3257 = vmatpush.bf16.msra.mxu0 %v1128
  %3258 = vmatpush.bf16.msra.mxu0 %v1120
  %3259 = vmatpush.bf16.msra.mxu0 %v1112
  %3260 = vmatpush.bf16.msra.mxu0 %v1104
  %3261 = vmatpush.bf16.msra.mxu0 %v1096
  %3262 = vmatpush.bf16.msra.mxu0 %v1088
  %3263 = vmatpush.bf16.msra.mxu0 %v1080
  %3264 = vmatpush.bf16.msra.mxu0 %v1072
  %3265 = vmatmul.bf16.gmra.mxu0 %v3113
  %v3266 = vpop.f32.mrf.mxu0
  %v3267 = vadd.f32 %v3254, %v3266
  %v3268 = vpop.f32.mrf.mxu0
  %3269 = vdwg.mxu0
  %3270 = vmatpush.bf16.msra.mxu0 %v1065
  %3271 = vmatpush.bf16.msra.mxu0 %v1057
  %3272 = vmatpush.bf16.msra.mxu0 %v1049
  %3273 = vmatpush.bf16.msra.mxu0 %v1041
  %3274 = vmatpush.bf16.msra.mxu0 %v1033
  %3275 = vmatpush.bf16.msra.mxu0 %v1025
  %3276 = vmatpush.bf16.msra.mxu0 %v1017
  %3277 = vmatpush.bf16.msra.mxu0 %v1009
  %3278 = vmatmul.bf16.gmra.mxu0 %v3112
  %v3279 = vpop.f32.mrf.mxu0
  %v3280 = vadd.f32 0.0, %v3279
  %v3281 = vpop.f32.mrf.mxu0
  %3282 = vdwg.mxu0
  %3283 = vmatpush.bf16.msra.mxu0 %v1129
  %3284 = vmatpush.bf16.msra.mxu0 %v1121
  %3285 = vmatpush.bf16.msra.mxu0 %v1113
  %3286 = vmatpush.bf16.msra.mxu0 %v1105
  %3287 = vmatpush.bf16.msra.mxu0 %v1097
  %3288 = vmatpush.bf16.msra.mxu0 %v1089
  %3289 = vmatpush.bf16.msra.mxu0 %v1081
  %3290 = vmatpush.bf16.msra.mxu0 %v1073
  %3291 = vmatmul.bf16.gmra.mxu0 %v3113
  %v3292 = vpop.f32.mrf.mxu0
  %v3293 = vadd.f32 %v3280, %v3292
  %v3294 = vpop.f32.mrf.mxu0
  %3295 = vdwg.mxu0
  %3296 = vmatpush.bf16.msra.mxu0 %v1066
  %3297 = vmatpush.bf16.msra.mxu0 %v1058
  %3298 = vmatpush.bf16.msra.mxu0 %v1050
  %3299 = vmatpush.bf16.msra.mxu0 %v1042
  %3300 = vmatpush.bf16.msra.mxu0 %v1034
  %3301 = vmatpush.bf16.msra.mxu0 %v1026
  %3302 = vmatpush.bf16.msra.mxu0 %v1018
  %3303 = vmatpush.bf16.msra.mxu0 %v1010
  %3304 = vmatmul.bf16.gmra.mxu0 %v3112
  %v3305 = vpop.f32.mrf.mxu0
  %v3306 = vadd.f32 0.0, %v3305
  %v3307 = vpop.f32.mrf.mxu0
  %3308 = vdwg.mxu0
  %3309 = vmatpush.bf16.msra.mxu0 %v1130
  %3310 = vmatpush.bf16.msra.mxu0 %v1122
  %3311 = vmatpush.bf16.msra.mxu0 %v1114
  %3312 = vmatpush.bf16.msra.mxu0 %v1106
  %3313 = vmatpush.bf16.msra.mxu0 %v1098
  %3314 = vmatpush.bf16.msra.mxu0 %v1090
  %3315 = vmatpush.bf16.msra.mxu0 %v1082
  %3316 = vmatpush.bf16.msra.mxu0 %v1074
  %3317 = vmatmul.bf16.gmra.mxu0 %v3113
  %v3318 = vpop.f32.mrf.mxu0
  %v3319 = vadd.f32 %v3306, %v3318
  %v3320 = vpop.f32.mrf.mxu0
  %3321 = vdwg.mxu0
  %s3322 = smul.u32 7, 8
  %s3323 = smul.addr %s3322, 8
  %s3324 = scalar_lea.vmem [#allocation2], %s3323
  %v3325 = vld [vmem:[%s3324] sm:$0xff]
  %v3326 = vld [vmem:[%s3324 + $0x8] sm:$0xff]
  %v3327 = vld [vmem:[%s3324 + $0x10] sm:$0xff]
  %v3328 = vld [vmem:[%s3324 + $0x18] sm:$0xff]
  %v3329 = vld [vmem:[%s3324 + $0x20] sm:$0xff]
  %v3330 = vld [vmem:[%s3324 + $0x28] sm:$0xff]
  %v3331 = vld [vmem:[%s3324 + $0x30] sm:$0xff]
  %v3332 = vld [vmem:[%s3324 + $0x38] sm:$0xff]
  %v3333 = vadd.f32 %v3325, %v3137
  %v3334 = vadd.f32 %v3326, %v3163
  %v3335 = vadd.f32 %v3327, %v3189
  %v3336 = vadd.f32 %v3328, %v3215
  %v3337 = vadd.f32 %v3329, %v3241
  %v3338 = vadd.f32 %v3330, %v3267
  %v3339 = vadd.f32 %v3331, %v3293
  %v3340 = vadd.f32 %v3332, %v3319
  %v3341 = vmul.f32 %v3333, 0.5
  %v3342 = vmul.f32 %v3334, 0.5
  %v3343 = vtanh.pop %v3341
  %v3344 = vtanh.pop %v3342
  %v3345 = vadd.f32 %v3343, 1.0
  %v3346 = vadd.f32 %v3344, 1.0
  %v3347 = vmul.f32 %v3345, 0.5
  %v3348 = vmul.f32 %v3346, 0.5
  %v3349 = vmul.f32 %v3335, 0.5
  %v3350 = vmul.f32 %v3336, 0.5
  %v3351 = vtanh.pop %v3349
  %v3352 = vtanh.pop %v3350
  %v3353 = vadd.f32 %v3351, 1.0
  %v3354 = vadd.f32 %v3352, 1.0
  %v3355 = vmul.f32 %v3353, 0.5
  %v3356 = vmul.f32 %v3354, 0.5
  %v3357 = vtanh.pop %v3337
  %v3358 = vtanh.pop %v3338
  %v3359 = vmul.f32 %v3339, 0.5
  %v3360 = vmul.f32 %v3340, 0.5
  %v3361 = vtanh.pop %v3359
  %v3362 = vtanh.pop %v3360
  %v3363 = vadd.f32 %v3361, 1.0
  %v3364 = vadd.f32 %v3362, 1.0
  %v3365 = vmul.f32 %v3363, 0.5
  %v3366 = vmul.f32 %v3364, 0.5
  %v3367 = vmul.f32 %v3355, %v3106
  %v3368 = vmul.f32 %v3356, %v3107
  %v3369 = vmul.f32 %v3347, %v3357
  %v3370 = vmul.f32 %v3348, %v3358
  %v3371 = vadd.f32 %v3367, %v3369
  %v3372 = vadd.f32 %v3368, %v3370
  %v3373 = vtanh.pop %v3371
  %v3374 = vtanh.pop %v3372
  %v3375 = vmul.f32 %v3365, %v3373
  %v3376 = vmul.f32 %v3366, %v3374
  %v3377 = vld [vmem:[%s4] sm:$0xff]
  %v3378 = vld [vmem:[%s4 + $0x8] sm:$0xff]
  %v3379 = vld [vmem:[%s4 + $0x10] sm:$0xff]
  %v3380 = vld [vmem:[%s4 + $0x18] sm:$0xff]
  %v3381 = vld [vmem:[%s4 + $0x20] sm:$0xff]
  %v3382 = vld [vmem:[%s4 + $0x28] sm:$0xff]
  %v3383 = vld [vmem:[%s4 + $0x30] sm:$0xff]
  %v3384 = vld [vmem:[%s4 + $0x38] sm:$0xff]
  %v3385 = vld [vmem:[%s4 + $0x40] sm:$0xff]
  %v3386 = vld [vmem:[%s4 + $0x48] sm:$0xff]
  %v3387 = vld [vmem:[%s4 + $0x50] sm:$0xff]
  %v3388 = vld [vmem:[%s4 + $0x58] sm:$0xff]
  %v3389 = vld [vmem:[%s4 + $0x60] sm:$0xff]
  %v3390 = vld [vmem:[%s4 + $0x68] sm:$0xff]
  %v3391 = vld [vmem:[%s4 + $0x70] sm:$0xff]
  %v3392 = vld [vmem:[%s4 + $0x78] sm:$0xff]
  %v3393 = vld [vmem:[%s4 + $0x80] sm:$0xff]
  %v3394 = vld [vmem:[%s4 + $0x88] sm:$0xff]
  %v3395 = vld [vmem:[%s4 + $0x90] sm:$0xff]
  %v3396 = vld [vmem:[%s4 + $0x98] sm:$0xff]
  %v3397 = vld [vmem:[%s4 + $0xa0] sm:$0xff]
  %v3398 = vld [vmem:[%s4 + $0xa8] sm:$0xff]
  %v3399 = vld [vmem:[%s4 + $0xb0] sm:$0xff]
  %v3400 = vld [vmem:[%s4 + $0xb8] sm:$0xff]
  %v3401 = vld [vmem:[%s4 + $0xc0] sm:$0xff]
  %v3402 = vld [vmem:[%s4 + $0xc8] sm:$0xff]
  %v3403 = vld [vmem:[%s4 + $0xd0] sm:$0xff]
  %v3404 = vld [vmem:[%s4 + $0xd8] sm:$0xff]
  %v3405 = vld [vmem:[%s4 + $0xe0] sm:$0xff]
  %v3406 = vld [vmem:[%s4 + $0xe8] sm:$0xff]
  %v3407 = vld [vmem:[%s4 + $0xf0] sm:$0xff]
  %v3408 = vld [vmem:[%s4 + $0xf8] sm:$0xff]
  %v3409 = vld [vmem:[%s5] sm:$0x1]
  %v3411 = vperm.slane %v3409, 0
  %3413 = vmatpush.msra.mxu0 %v3392
  %3414 = vmatpush.msra.mxu0 %v3391
  %3415 = vmatpush.msra.mxu0 %v3390
  %3416 = vmatpush.msra.mxu0 %v3389
  %3417 = vmatpush.msra.mxu0 %v3388
  %3418 = vmatpush.msra.mxu0 %v3387
  %3419 = vmatpush.msra.mxu0 %v3386
  %3420 = vmatpush.msra.mxu0 %v3385
  %3421 = vmatpush.msra.mxu0 %v3384
  %3422 = vmatpush.msra.mxu0 %v3383
  %3423 = vmatpush.msra.mxu0 %v3382
  %3424 = vmatpush.msra.mxu0 %v3381
  %3425 = vmatpush.msra.mxu0 %v3380
  %3426 = vmatpush.msra.mxu0 %v3379
  %3427 = vmatpush.msra.mxu0 %v3378
  %3428 = vmatpush.msra.mxu0 %v3377
  %3429 = vmatmul.f32.gmra.mxu0 %v3375
  %v3430 = vpop.f32.mrf.mxu0
  %v3431 = vadd.f32 %v3411, %v3430
  %3432 = vdwg.mxu0
  %3433 = vmatpush.msra.mxu0 %v3408
  %3434 = vmatpush.msra.mxu0 %v3407
  %3435 = vmatpush.msra.mxu0 %v3406
  %3436 = vmatpush.msra.mxu0 %v3405
  %3437 = vmatpush.msra.mxu0 %v3404
  %3438 = vmatpush.msra.mxu0 %v3403
  %3439 = vmatpush.msra.mxu0 %v3402
  %3440 = vmatpush.msra.mxu0 %v3401
  %3441 = vmatpush.msra.mxu0 %v3400
  %3442 = vmatpush.msra.mxu0 %v3399
  %3443 = vmatpush.msra.mxu0 %v3398
  %3444 = vmatpush.msra.mxu0 %v3397
  %3445 = vmatpush.msra.mxu0 %v3396
  %3446 = vmatpush.msra.mxu0 %v3395
  %3447 = vmatpush.msra.mxu0 %v3394
  %3448 = vmatpush.msra.mxu0 %v3393
  %3449 = vmatmul.f32.gmra.mxu0 %v3376
  %v3450 = vpop.f32.mrf.mxu0
  %v3451 = vadd.f32 %v3431, %v3450
  %3452 = vdwg.mxu0
  %vm3453 = vcmask 23552
  %v3454 = vsel %vm3453, %v3451, -inf
  %3455 = vmax.xlane.f32.xlu0 %v3454
  %v3456 = vpop.xlane.xlu0 %3455
  %v3457 = vsub.f32 %v3451, %v3456
  %v3458 = vmul.f32 %v3457, 1.442695
  %v3459 = vpow.pop %v3458
  %v3460 = vsel %vm3453, %v3459, 0.0
  %3461 = vadd.xlane.f32.xlu0 %v3460
  %v3462 = vpop.xlane.xlu0 %3461
  %v3463 = vrcp.pop %v3462
  %v3464 = vmul.f32 %v3462, %v3463
  %v3465 = vsub.f32 1.0, %v3464
  %v3466 = vmul.f32 %v3463, %v3465
  %v3467 = vadd.f32 %v3463, %v3466
  %vm3468 = vweird.f32 %v3462
  %vm3469 = vweird.f32 %v3463
  %vm3470 = vmor %vm3468, %vm3469
  %v3471 = vsel %vm3470, %v3463, %v3467
  %v3472 = vand.u32 2147483647, %v3462
  %vm3473 = vcmp.eq.f32.partialorder %v3472, 8.507059e+37
  %v3474 = vand.u32 %v3462, 2147483648
  %v3475 = vor.u32 1.1754944e-38, %v3474
  %v3476 = vsel %vm3473, %v3475, %v3471
  %v3477 = vmul.f32 %v3459, %v3476
  %3478 = vst.msk [vmem:[%s6] sm:$0xff] %vm3453, %v3477
  // Predicated region
  $region26: #{w2v_t2v_lstm_forward.1} parent=0 // pred_check
    _
  $region27: #{w2v_t2v_lstm_forward.1} parent=0 // pred_check_branch
    %3480 = sbr.rel (0) target = $region29
  $region28: #{w2v_t2v_lstm_forward.1} parent=0 // pred_region
    _
  $region29: #{w2v_t2v_lstm_forward.1} parent=0 // pred_fallthru
    _
  // Predicated region
  $region30: #{w2v_t2v_lstm_forward.1} parent=0 // pred_check
    _
  $region31: #{w2v_t2v_lstm_forward.1} parent=0 // pred_check_branch
    %3482 = sbr.rel (0) target = $region33
  $region32: #{w2v_t2v_lstm_forward.1} parent=0 // pred_region
    _
  $region33: #{w2v_t2v_lstm_forward.1} parent=0 // pred_fallthru
    _

</llo_original>
